<compile_context>
chip_gen: v6e
topology: v6e:2x2x1
jax: 0.10.0
libtpu: 0.0.40
codegen_flags: <defaults>
</compile_context>

<pallas_src>
import math

import jax
import jax.numpy as jnp
from jax.experimental import pallas as pl
from jax.experimental.pallas import tpu as pltpu

# ----------------------- hyper-parameters -----------------------
NUM_NODE_FEATURES = 12      # dataset.num_node_features
EMB = 32                    # model_embedding_size (= TransformerConv out_channels)
HEADS = 2                   # model_attention_heads
EDGE_DIM = 6                # model_edge_dim
N_LAYERS = 2                # model_layers
N_BLOCKS = 1 + N_LAYERS     # conv1 + the n_layers inner blocks
HC = EMB * HEADS            # 64
PROJ = 4 * HC               # 256 fused output lanes: [q | k | v | skip], head-major chunks
D_IN_PAD = 32               # true contraction width (>= max(12, EMB)); no 128-lane padding
F_PAD = 128                 # final output lane width (lane-dense store)
LEAKY_SLOPE = 0.01
BN_EPS = 1e-5
NEG_BIG = -1e30
INV_SQRT_C = 1.0 / math.sqrt(EMB)


# ----------------------- fused Pallas kernel -----------------------
def _make_fused_kernel(n, g, g_pad, seg, equal_segments):
    """Builds the fused forward kernel for static sizes (n nodes, g graphs)."""

    def kernel(x_ref, mask_ref, mbias_ref, edense_ref, member_ref,
               w_all_ref, b_all_ref, we_ref, wbeta_agg_ref, wbeta_skip_ref,
               wt_ref, bt_ref, bn_a_ref, bn_b_ref, out_ref):
        mask = mask_ref[...]                                  # [N, N] 1/0 adjacency
        mbias = mbias_ref[...]                                # [N, N] 0 / -1e30 additive bias
        ed = [edense_ref[d] for d in range(EDGE_DIM)]         # 6 x [N, N] dense edge planes
        h = x_ref[...]                                        # [N, D_IN_PAD] f32
        gmp_acc = jnp.zeros((g, EMB), jnp.float32)
        gap_acc = jnp.zeros((g, EMB), jnp.float32)

        for l in range(N_BLOCKS):                             # static unroll (3 blocks)
            # --- fused q|k|v|skip projection, both heads: one [N,32]x[32,256] matmul ---
            allp = jnp.dot(h.astype(jnp.bfloat16), w_all_ref[l],
                           preferred_element_type=jnp.float32) + b_all_ref[l]   # [N, 256]

            blogit = jnp.zeros((n, 1), jnp.float32)
            aggs, xrs = [], []
            for hh in range(HEADS):                           # static unroll (2 heads)
                c0 = hh * EMB
                q = allp[:, c0:c0 + EMB]                      # 1/sqrt(C) folded into weights
                k = allp[:, HC + c0:HC + c0 + EMB]
                v = allp[:, 2 * HC + c0:2 * HC + c0 + EMB]
                x_r = allp[:, 3 * HC + c0:3 * HC + c0 + EMB]
                we_h = we_ref[l, hh]                          # [EDGE_DIM, EMB] bf16
                qb = q.astype(jnp.bfloat16)

                # score_ij = q_i.k_j + q_i.(We ea_ij); edge term kept in EDGE_DIM space
                s = jnp.einsum('ie,je->ij', qb, k.astype(jnp.bfloat16),
                               preferred_element_type=jnp.float32)           # [N, N]
                qe = jnp.einsum('ie,de->id', qb, we_h,
                                preferred_element_type=jnp.float32)          # [N, ED]
                for d in range(EDGE_DIM):
                    s = s + ed[d] * qe[:, d:d + 1]

                logits = s + mbias                            # additive mask (no cmp/select)
                m = jnp.max(logits, axis=-1, keepdims=True)
                p = jnp.exp(logits - m) * mask
                denom = jnp.sum(p, axis=-1, keepdims=True)
                denom = jnp.where(denom > 0.0, denom, 1.0)    # zero-in-degree rows -> 0
                alpha = p * pl.reciprocal(denom, approx=False)               # [N, N]

                # out_i = sum_j alpha_ij (v_j + We ea_ij)
                aggh = jnp.einsum('ij,je->ie', alpha.astype(jnp.bfloat16),
                                  v.astype(jnp.bfloat16),
                                  preferred_element_type=jnp.float32)        # [N, EMB]
                wd = jnp.concatenate(
                    [jnp.sum(alpha * ed[d], axis=-1, keepdims=True)
                     for d in range(EDGE_DIM)], axis=-1)                     # [N, ED]
                aggh = aggh + jnp.einsum('id,de->ie', wd.astype(jnp.bfloat16), we_h,
                                         preferred_element_type=jnp.float32)

                # beta gate logit (lin_beta split into (w1+w3), (w2-w3)), summed over heads
                blogit = (blogit +
                          jnp.sum(aggh * wbeta_agg_ref[l, hh], axis=-1, keepdims=True) +
                          jnp.sum(x_r * wbeta_skip_ref[l, hh], axis=-1, keepdims=True))
                aggs.append(aggh)
                xrs.append(x_r)

            beta = jax.nn.sigmoid(blogit)                     # [N, 1], shared across heads

            # transf Linear (summed per head) + LeakyReLU + folded eval-mode BatchNorm1d
            t = bt_ref[l]                                     # [1, EMB]
            for hh in range(HEADS):
                gated = beta * xrs[hh] + (1.0 - beta) * aggs[hh]
                t = t + jnp.dot(gated.astype(jnp.bfloat16), wt_ref[l, hh],
                                preferred_element_type=jnp.float32)
            t = jnp.maximum(t, LEAKY_SLOPE * t)               # LeakyReLU
            t = t * bn_a_ref[l] + bn_b_ref[l]                 # BN folded: t*A + B
            h = t                                             # [N, EMB]

            if l >= 1:   # cat([gmp, gap]) pooled after each of the N_LAYERS inner blocks
                if equal_segments:
                    tg = t.reshape(g, seg, EMB)               # seg==8 matches sublane tile
                    gmp = jnp.max(tg, axis=1)
                    gap = jnp.sum(tg, axis=1) * (1.0 / seg)
                else:
                    # TODO(synk): broadcast max is O(G*N*EMB); only for small irregular batches
                    memb = member_ref[...]                    # [G, N], rows scaled by 1/|graph|
                    gap = jnp.dot(memb, t, preferred_element_type=jnp.float32)
                    gmp = jnp.max(jnp.where(memb[:, :, None] > 0.0,
                                            t[None, :, :], NEG_BIG), axis=1)
                gmp_acc = gmp_acc + gmp
                gap_acc = gap_acc + gap

        # lane/sublane-padded, single full store: [gmp | gap | 0 ...] per graph row
        rep = jnp.concatenate(
            [gmp_acc, gap_acc, jnp.zeros((g, F_PAD - 2 * EMB), jnp.float32)], axis=-1)
        if g_pad > g:
            rep = jnp.concatenate(
                [rep, jnp.zeros((g_pad - g, F_PAD), jnp.float32)], axis=0)
        out_ref[...] = rep

    return kernel


def _vmem():
    return pl.BlockSpec(memory_space=pltpu.MemorySpace.VMEM)


# ----------------------- forward wrapper -----------------------
def pkgnn_v2_forward(x, edge_index, edge_attr, batch, num_graphs, params,
                     segment_nodes=None):
    """segment_nodes: STATIC int -> graphs are contiguous equal-size node segments
    (fast reshape pooling). None -> general member-mask pooling (jit/tracer safe)."""
    n = x.shape[0]
    g = int(num_graphs)
    g_pad = ((g + 7) // 8) * 8

    src, dst = edge_index[0], edge_index[1]
    # dense adjacency mask, additive mask bias and per-dimension dense edge planes
    # (target-major). TODO(synk): keep edense f32 on v5e; bf16 planes save DMA on v6e/v7x.
    mask = jnp.zeros((n, n), jnp.float32).at[dst, src].set(1.0)
    mask_bias = (mask - 1.0) * 1e30                                 # 0 or -1e30
    edense = jnp.zeros((n, n, EDGE_DIM), jnp.float32).at[dst, src].set(edge_attr)
    edense = jnp.transpose(edense, (2, 0, 1))                       # [EDGE_DIM, N, N]

    # mean-pool normalization folded into the member matrix (inv_cnt operand dropped)
    member = jax.nn.one_hot(batch, g, dtype=jnp.float32).T          # [G, N]
    member_norm = member / jnp.maximum(member.sum(axis=1, keepdims=True), 1.0)

    x_pad = jnp.pad(x, ((0, 0), (0, D_IN_PAD - x.shape[1])))        # pad 12 -> 32 features

    if segment_nodes is not None:
        seg = int(segment_nodes)
        assert n == g * seg, "segment_nodes must tile the node set exactly"
        equal_segments = True
    else:
        seg, equal_segments = 0, False

    kernel = _make_fused_kernel(n, g, g_pad, seg, equal_segments)
    args = (x_pad, mask, mask_bias, edense, member_norm,
            params['w_all'], params['b_all'], params['we'],
            params['wbeta_agg'], params['wbeta_skip'],
            params['wt'], params['bt'], params['bn_a'], params['bn_b'])
    out = pl.pallas_call(
        kernel,
        out_shape=jax.ShapeDtypeStruct((g_pad, F_PAD), jnp.float32),
        in_specs=[_vmem() for _ in args],
        out_specs=_vmem(),
        compiler_params=pltpu.CompilerParams(vmem_limit_bytes=32 * 1024 * 1024),
    )(*args)
    return out[:g, :2 * EMB]


# ----------------------- parameters (deterministic, torch-style init) -----------------------
def _linear(key, fan_in, fan_out, bias=True):
    kw, kb = jax.random.split(key)
    bound = 1.0 / math.sqrt(fan_in)
    w = jax.random.uniform(kw, (fan_out, fan_in), jnp.float32, -bound, bound)  # torch [out,in]
    b = jax.random.uniform(kb, (fan_out,), jnp.float32, -bound, bound) if bias else None
    return w, b


def _block_params_torch(key, in_dim):
    keys = jax.random.split(key, 9)
    wq, bq = _linear(keys[0], in_dim, HC)
    wk, bk = _linear(keys[1], in_dim, HC)
    wv, bv = _linear(keys[2], in_dim, HC)
    we, _ = _linear(keys[3], EDGE_DIM, HC, bias=False)       # lin_edge (no bias in PyG)
    wskip, bskip = _linear(keys[4], in_dim, HC)
    wbeta, _ = _linear(keys[5], 3 * HC, 1, bias=False)       # lin_beta (no bias in PyG)
    wt, bt = _linear(keys[6], HC, EMB)
    bn_w = jax.random.uniform(keys[7], (EMB,), jnp.float32, 0.5, 1.5)
    bn_b = jax.random.uniform(keys[8], (EMB,), jnp.float32, -0.1, 0.1)
    bn_m = jnp.zeros((EMB,), jnp.float32)                    # BatchNorm1d running_mean init
    bn_v = jnp.ones((EMB,), jnp.float32)                     # BatchNorm1d running_var init
    return dict(wq=wq, bq=bq, wk=wk, bk=bk, wv=wv, bv=bv, we=we,
                wskip=wskip, bskip=bskip, wbeta=wbeta, wt=wt, bt=bt,
                bn_w=bn_w, bn_b=bn_b, bn_m=bn_m, bn_v=bn_v)


def _proj_t(w, scale=1.0):
    """torch [HC, in] -> [D_IN_PAD, HC] (transposed, zero-padded input rows, opt. scaled)."""
    wt_ = (w * scale).T
    return jnp.pad(wt_, ((0, D_IN_PAD - wt_.shape[0]), (0, 0)))


def _pack_params(blocks):
    """Fuse q/k/v/skip into one [D_IN_PAD, 256] weight per block, fold 1/sqrt(C) into q,
    fold eval-mode BN into scale/bias, split edge/transf/beta weights per head."""
    mm = jnp.bfloat16
    w_all, b_all, we, wba, wbs, wt, bt, bn_a, bn_b = ([] for _ in range(9))
    for b in blocks:
        w_all.append(jnp.concatenate(
            [_proj_t(b['wq'], INV_SQRT_C), _proj_t(b['wk']),
             _proj_t(b['wv']), _proj_t(b['wskip'])], axis=1))            # [D_IN_PAD, 256]
        b_all.append(jnp.concatenate(
            [b['bq'] * INV_SQRT_C, b['bk'], b['bv'], b['bskip']]).reshape(1, PROJ))
        we.append(jnp.stack(
            [b['we'][hh * EMB:(hh + 1) * EMB, :].T for hh in range(HEADS)]))  # [H, ED, EMB]
        wbeta = b['wbeta'][0]
        # lin_beta(cat([agg, x_r, agg - x_r])) == agg @ (w1+w3) + x_r @ (w2-w3)
        wba.append((wbeta[:HC] + wbeta[2 * HC:]).reshape(HEADS, 1, EMB))
        wbs.append((wbeta[HC:2 * HC] - wbeta[2 * HC:]).reshape(HEADS, 1, EMB))
        wt.append(jnp.stack(
            [b['wt'][:, hh * EMB:(hh + 1) * EMB].T for hh in range(HEADS)]))  # [H, EMB, EMB]
        bt.append(b['bt'].reshape(1, EMB))
        A = b['bn_w'] * jax.lax.rsqrt(b['bn_v'] + BN_EPS)
        bn_a.append(A.reshape(1, EMB))
        bn_b.append((b['bn_b'] - b['bn_m'] * A).reshape(1, EMB))
    return dict(
        w_all=jnp.stack(w_all).astype(mm), b_all=jnp.stack(b_all),
        we=jnp.stack(we).astype(mm),
        wbeta_agg=jnp.stack(wba), wbeta_skip=jnp.stack(wbs),
        wt=jnp.stack(wt).astype(mm), bt=jnp.stack(bt),
        bn_a=jnp.stack(bn_a), bn_b=jnp.stack(bn_b))


def init_params(key):
    keys = jax.random.split(key, N_BLOCKS)
    blocks = [_block_params_torch(keys[0], NUM_NODE_FEATURES)]
    blocks += [_block_params_torch(keys[1 + i], EMB) for i in range(N_LAYERS)]
    return _pack_params(blocks)


# ----------------------- main -----------------------
if __name__ == "__main__":
    key = jax.random.PRNGKey(0)
    k_params, k_x, k_e = jax.random.split(key, 3)

    num_graphs = 2
    nodes_per_graph = 8
    n_nodes = num_graphs * nodes_per_graph                      # 16 nodes total

    # deterministic small graph: each node receives edges from (v+1)%8 and (v+3)%8
    srcs, dsts = [], []
    for gph in range(num_graphs):
        off = gph * nodes_per_graph
        for vtx in range(nodes_per_graph):
            for d in (1, 3):
                srcs.append(off + (vtx + d) % nodes_per_graph)
                dsts.append(off + vtx)
    edge_index = jnp.array([srcs, dsts], dtype=jnp.int32)       # [2, 32]

    x = jax.random.normal(k_x, (n_nodes, NUM_NODE_FEATURES), jnp.float32)
    edge_attr = jax.random.normal(k_e, (edge_index.shape[1], EDGE_DIM), jnp.float32)
    batch = jnp.repeat(jnp.arange(num_graphs, dtype=jnp.int32), nodes_per_graph)

    params = init_params(k_params)

    out = pkgnn_v2_forward(x, edge_index, edge_attr, batch, num_graphs, params,
                           segment_nodes=nodes_per_graph)
    out = jax.block_until_ready(out)
    assert out.shape == (num_graphs, 2 * EMB) and bool(jnp.all(jnp.isfinite(out)))
    print("KERNEL_OK")
</pallas_src>

<mosaic_0001>
module attributes {stable_mosaic.version = 11 : i64} {
  func.func @kernel(%arg0: memref<16x32xf32, #tpu.memory_space<vmem>>, %arg1: memref<16x16xf32, #tpu.memory_space<vmem>>, %arg2: memref<16x16xf32, #tpu.memory_space<vmem>>, %arg3: memref<6x16x16xf32, #tpu.memory_space<vmem>>, %arg4: memref<2x16xf32, #tpu.memory_space<vmem>>, %arg5: memref<3x32x256xbf16, #tpu.memory_space<vmem>>, %arg6: memref<3x1x256xf32, #tpu.memory_space<vmem>>, %arg7: memref<3x2x6x32xbf16, #tpu.memory_space<vmem>>, %arg8: memref<3x2x1x32xf32, #tpu.memory_space<vmem>>, %arg9: memref<3x2x1x32xf32, #tpu.memory_space<vmem>>, %arg10: memref<3x2x32x32xbf16, #tpu.memory_space<vmem>>, %arg11: memref<3x1x32xf32, #tpu.memory_space<vmem>>, %arg12: memref<3x1x32xf32, #tpu.memory_space<vmem>>, %arg13: memref<3x1x32xf32, #tpu.memory_space<vmem>>, %arg14: memref<8x128xf32, #tpu.memory_space<vmem>>) attributes {dimension_semantics = [], scalar_prefetch = 0 : i64, scratch_operands = 0 : i64, tpu.core_type = #tpu.core_type<tc>} {
    %c0 = arith.constant 0 : index
    %c0_0 = arith.constant 0 : index
    %0 = vector.load %arg1[%c0, %c0_0] : memref<16x16xf32, #tpu.memory_space<vmem>>, vector<16x16xf32>
    %c0_1 = arith.constant 0 : index
    %c0_2 = arith.constant 0 : index
    %1 = vector.load %arg2[%c0_1, %c0_2] : memref<16x16xf32, #tpu.memory_space<vmem>>, vector<16x16xf32>
    %c0_3 = arith.constant 0 : index
    %c0_4 = arith.constant 0 : index
    %c0_5 = arith.constant 0 : index
    %2 = vector.load %arg3[%c0_3, %c0_4, %c0_5] : memref<6x16x16xf32, #tpu.memory_space<vmem>>, vector<1x16x16xf32>
    %3 = vector.shape_cast %2 : vector<1x16x16xf32> to vector<16x16xf32>
    %c1 = arith.constant 1 : index
    %c0_6 = arith.constant 0 : index
    %c0_7 = arith.constant 0 : index
    %4 = vector.load %arg3[%c1, %c0_6, %c0_7] : memref<6x16x16xf32, #tpu.memory_space<vmem>>, vector<1x16x16xf32>
    %5 = vector.shape_cast %4 : vector<1x16x16xf32> to vector<16x16xf32>
    %c2 = arith.constant 2 : index
    %c0_8 = arith.constant 0 : index
    %c0_9 = arith.constant 0 : index
    %6 = vector.load %arg3[%c2, %c0_8, %c0_9] : memref<6x16x16xf32, #tpu.memory_space<vmem>>, vector<1x16x16xf32>
    %7 = vector.shape_cast %6 : vector<1x16x16xf32> to vector<16x16xf32>
    %c3 = arith.constant 3 : index
    %c0_10 = arith.constant 0 : index
    %c0_11 = arith.constant 0 : index
    %8 = vector.load %arg3[%c3, %c0_10, %c0_11] : memref<6x16x16xf32, #tpu.memory_space<vmem>>, vector<1x16x16xf32>
    %9 = vector.shape_cast %8 : vector<1x16x16xf32> to vector<16x16xf32>
    %c4 = arith.constant 4 : index
    %c0_12 = arith.constant 0 : index
    %c0_13 = arith.constant 0 : index
    %10 = vector.load %arg3[%c4, %c0_12, %c0_13] : memref<6x16x16xf32, #tpu.memory_space<vmem>>, vector<1x16x16xf32>
    %11 = vector.shape_cast %10 : vector<1x16x16xf32> to vector<16x16xf32>
    %c5 = arith.constant 5 : index
    %c0_14 = arith.constant 0 : index
    %c0_15 = arith.constant 0 : index
    %12 = vector.load %arg3[%c5, %c0_14, %c0_15] : memref<6x16x16xf32, #tpu.memory_space<vmem>>, vector<1x16x16xf32>
    %13 = vector.shape_cast %12 : vector<1x16x16xf32> to vector<16x16xf32>
    %c0_16 = arith.constant 0 : index
    %c0_17 = arith.constant 0 : index
    %14 = vector.load %arg0[%c0_16, %c0_17] : memref<16x32xf32, #tpu.memory_space<vmem>>, vector<16x32xf32>
    %cst = arith.constant 0.000000e+00 : f32
    %15 = vector.broadcast %cst : f32 to vector<2x32xf32>
    %cst_18 = arith.constant 0.000000e+00 : f32
    %16 = vector.broadcast %cst_18 : f32 to vector<2x32xf32>
    %17 = arith.truncf %14 : vector<16x32xf32> to vector<16x32xbf16>
    %c0_19 = arith.constant 0 : index
    %c0_20 = arith.constant 0 : index
    %c0_21 = arith.constant 0 : index
    %18 = vector.load %arg5[%c0_19, %c0_20, %c0_21] : memref<3x32x256xbf16, #tpu.memory_space<vmem>>, vector<1x32x256xbf16>
    %19 = vector.shape_cast %18 : vector<1x32x256xbf16> to vector<32x256xbf16>
    %cst_22 = arith.constant dense<0.000000e+00> : vector<16x256xf32>
    %20 = tpu.matmul %17, %19, %cst_22 {dimension_numbers = #tpu.dot_dimension_numbers<[1], [0], [0], [1], [0, 0, 1, 1], [], []>} : vector<16x32xbf16>, vector<32x256xbf16>, vector<16x256xf32> -> vector<16x256xf32>
    %c0_23 = arith.constant 0 : index
    %c0_24 = arith.constant 0 : index
    %c0_25 = arith.constant 0 : index
    %21 = vector.load %arg6[%c0_23, %c0_24, %c0_25] : memref<3x1x256xf32, #tpu.memory_space<vmem>>, vector<1x1x256xf32>
    %22 = vector.shape_cast %21 : vector<1x1x256xf32> to vector<1x256xf32>
    %23 = vector.broadcast %22 : vector<1x256xf32> to vector<16x256xf32>
    %24 = arith.addf %20, %23 : vector<16x256xf32>
    %cst_26 = arith.constant 0.000000e+00 : f32
    %25 = vector.broadcast %cst_26 : f32 to vector<16x1xf32>
    %26 = vector.extract_strided_slice %24 {offsets = [0, 0], sizes = [16, 32], strides = [1, 1]} : vector<16x256xf32> to vector<16x32xf32>
    %27 = vector.extract_strided_slice %24 {offsets = [0, 64], sizes = [16, 32], strides = [1, 1]} : vector<16x256xf32> to vector<16x32xf32>
    %28 = vector.extract_strided_slice %24 {offsets = [0, 128], sizes = [16, 32], strides = [1, 1]} : vector<16x256xf32> to vector<16x32xf32>
    %29 = vector.extract_strided_slice %24 {offsets = [0, 192], sizes = [16, 32], strides = [1, 1]} : vector<16x256xf32> to vector<16x32xf32>
    %c0_27 = arith.constant 0 : index
    %c0_28 = arith.constant 0 : index
    %c0_29 = arith.constant 0 : index
    %c0_30 = arith.constant 0 : index
    %30 = vector.load %arg7[%c0_27, %c0_28, %c0_29, %c0_30] : memref<3x2x6x32xbf16, #tpu.memory_space<vmem>>, vector<1x1x6x32xbf16>
    %31 = vector.shape_cast %30 : vector<1x1x6x32xbf16> to vector<6x32xbf16>
    %32 = arith.truncf %26 : vector<16x32xf32> to vector<16x32xbf16>
    %33 = arith.truncf %27 : vector<16x32xf32> to vector<16x32xbf16>
    "tpu.trace_start"() <{level = 10 : i32, message = "ie,je->ij"}> : () -> ()
    %cst_31 = arith.constant dense<0.000000e+00> : vector<16x16xf32>
    %34 = tpu.matmul %32, %33, %cst_31 {dimension_numbers = #tpu.dot_dimension_numbers<[1], [1], [0], [0], [0, 0, 1, 0], [], []>} : vector<16x32xbf16>, vector<16x32xbf16>, vector<16x16xf32> -> vector<16x16xf32>
    "tpu.trace_stop"() : () -> ()
    "tpu.trace_start"() <{level = 10 : i32, message = "ie,de->id"}> : () -> ()
    %cst_32 = arith.constant dense<0.000000e+00> : vector<16x6xf32>
    %35 = tpu.matmul %32, %31, %cst_32 {dimension_numbers = #tpu.dot_dimension_numbers<[1], [1], [0], [0], [0, 0, 1, 0], [], []>} : vector<16x32xbf16>, vector<6x32xbf16>, vector<16x6xf32> -> vector<16x6xf32>
    "tpu.trace_stop"() : () -> ()
    %36 = vector.extract_strided_slice %35 {offsets = [0, 0], sizes = [16, 1], strides = [1, 1]} : vector<16x6xf32> to vector<16x1xf32>
    %37 = vector.broadcast %36 : vector<16x1xf32> to vector<16x16xf32>
    %38 = arith.mulf %3, %37 : vector<16x16xf32>
    %39 = arith.addf %34, %38 : vector<16x16xf32>
    %40 = vector.extract_strided_slice %35 {offsets = [0, 1], sizes = [16, 1], strides = [1, 1]} : vector<16x6xf32> to vector<16x1xf32>
    %41 = vector.broadcast %40 : vector<16x1xf32> to vector<16x16xf32>
    %42 = arith.mulf %5, %41 : vector<16x16xf32>
    %43 = arith.addf %39, %42 : vector<16x16xf32>
    %44 = vector.extract_strided_slice %35 {offsets = [0, 2], sizes = [16, 1], strides = [1, 1]} : vector<16x6xf32> to vector<16x1xf32>
    %45 = vector.broadcast %44 : vector<16x1xf32> to vector<16x16xf32>
    %46 = arith.mulf %7, %45 : vector<16x16xf32>
    %47 = arith.addf %43, %46 : vector<16x16xf32>
    %48 = vector.extract_strided_slice %35 {offsets = [0, 3], sizes = [16, 1], strides = [1, 1]} : vector<16x6xf32> to vector<16x1xf32>
    %49 = vector.broadcast %48 : vector<16x1xf32> to vector<16x16xf32>
    %50 = arith.mulf %9, %49 : vector<16x16xf32>
    %51 = arith.addf %47, %50 : vector<16x16xf32>
    %52 = vector.extract_strided_slice %35 {offsets = [0, 4], sizes = [16, 1], strides = [1, 1]} : vector<16x6xf32> to vector<16x1xf32>
    %53 = vector.broadcast %52 : vector<16x1xf32> to vector<16x16xf32>
    %54 = arith.mulf %11, %53 : vector<16x16xf32>
    %55 = arith.addf %51, %54 : vector<16x16xf32>
    %56 = vector.extract_strided_slice %35 {offsets = [0, 5], sizes = [16, 1], strides = [1, 1]} : vector<16x6xf32> to vector<16x1xf32>
    %57 = vector.broadcast %56 : vector<16x1xf32> to vector<16x16xf32>
    %58 = arith.mulf %13, %57 : vector<16x16xf32>
    %59 = arith.addf %55, %58 : vector<16x16xf32>
    %60 = arith.addf %59, %1 : vector<16x16xf32>
    %cst_33 = arith.constant dense<0xFF800000> : vector<16xf32>
    %61 = vector.multi_reduction <maximumf>, %60, %cst_33 [1] : vector<16x16xf32> to vector<16xf32>
    %62 = vector.shape_cast %61 : vector<16xf32> to vector<16x1xf32>
    %63 = vector.broadcast %62 : vector<16x1xf32> to vector<16x16xf32>
    %64 = arith.subf %60, %63 : vector<16x16xf32>
    %65 = math.exp %64 : vector<16x16xf32>
    %66 = arith.mulf %65, %0 : vector<16x16xf32>
    %cst_34 = arith.constant dense<0.000000e+00> : vector<16xf32>
    %67 = vector.multi_reduction <add>, %66, %cst_34 [1] : vector<16x16xf32> to vector<16xf32>
    %68 = vector.shape_cast %67 : vector<16xf32> to vector<16x1xf32>
    %cst_35 = arith.constant 0.000000e+00 : f32
    %69 = vector.broadcast %cst_35 : f32 to vector<16x1xf32>
    %70 = arith.cmpf ogt, %68, %69 : vector<16x1xf32>
    %cst_36 = arith.constant 1.000000e+00 : f32
    %71 = vector.broadcast %cst_36 : f32 to vector<16x1xf32>
    %72 = arith.select %70, %68, %71 : vector<16x1xi1>, vector<16x1xf32>
    %73 = tpu.reciprocal %72 : vector<16x1xf32> -> vector<16x1xf32>
    %74 = vector.broadcast %73 : vector<16x1xf32> to vector<16x16xf32>
    %75 = arith.mulf %66, %74 : vector<16x16xf32>
    %76 = arith.truncf %75 : vector<16x16xf32> to vector<16x16xbf16>
    %77 = arith.truncf %28 : vector<16x32xf32> to vector<16x32xbf16>
    "tpu.trace_start"() <{level = 10 : i32, message = "ij,je->ie"}> : () -> ()
    %cst_37 = arith.constant dense<0.000000e+00> : vector<16x32xf32>
    %78 = tpu.matmul %76, %77, %cst_37 {dimension_numbers = #tpu.dot_dimension_numbers<[1], [0], [0], [1], [0, 0, 1, 1], [], []>} : vector<16x16xbf16>, vector<16x32xbf16>, vector<16x32xf32> -> vector<16x32xf32>
    "tpu.trace_stop"() : () -> ()
    %79 = arith.mulf %75, %3 : vector<16x16xf32>
    %cst_38 = arith.constant dense<0.000000e+00> : vector<16xf32>
    %80 = vector.multi_reduction <add>, %79, %cst_38 [1] : vector<16x16xf32> to vector<16xf32>
    %81 = vector.shape_cast %80 : vector<16xf32> to vector<16x1xf32>
    %82 = arith.mulf %75, %5 : vector<16x16xf32>
    %cst_39 = arith.constant dense<0.000000e+00> : vector<16xf32>
    %83 = vector.multi_reduction <add>, %82, %cst_39 [1] : vector<16x16xf32> to vector<16xf32>
    %84 = vector.shape_cast %83 : vector<16xf32> to vector<16x1xf32>
    %85 = arith.mulf %75, %7 : vector<16x16xf32>
    %cst_40 = arith.constant dense<0.000000e+00> : vector<16xf32>
    %86 = vector.multi_reduction <add>, %85, %cst_40 [1] : vector<16x16xf32> to vector<16xf32>
    %87 = vector.shape_cast %86 : vector<16xf32> to vector<16x1xf32>
    %88 = arith.mulf %75, %9 : vector<16x16xf32>
    %cst_41 = arith.constant dense<0.000000e+00> : vector<16xf32>
    %89 = vector.multi_reduction <add>, %88, %cst_41 [1] : vector<16x16xf32> to vector<16xf32>
    %90 = vector.shape_cast %89 : vector<16xf32> to vector<16x1xf32>
    %91 = arith.mulf %75, %11 : vector<16x16xf32>
    %cst_42 = arith.constant dense<0.000000e+00> : vector<16xf32>
    %92 = vector.multi_reduction <add>, %91, %cst_42 [1] : vector<16x16xf32> to vector<16xf32>
    %93 = vector.shape_cast %92 : vector<16xf32> to vector<16x1xf32>
    %94 = arith.mulf %75, %13 : vector<16x16xf32>
    %cst_43 = arith.constant dense<0.000000e+00> : vector<16xf32>
    %95 = vector.multi_reduction <add>, %94, %cst_43 [1] : vector<16x16xf32> to vector<16xf32>
    %96 = vector.shape_cast %95 : vector<16xf32> to vector<16x1xf32>
    %97 = tpu.concatenate %81, %84, %87, %90, %93, %96 in 1 : vector<16x1xf32>, vector<16x1xf32>, vector<16x1xf32>, vector<16x1xf32>, vector<16x1xf32>, vector<16x1xf32> -> vector<16x6xf32>
    %98 = arith.truncf %97 : vector<16x6xf32> to vector<16x6xbf16>
    "tpu.trace_start"() <{level = 10 : i32, message = "id,de->ie"}> : () -> ()
    %cst_44 = arith.constant dense<0.000000e+00> : vector<16x32xf32>
    %99 = tpu.matmul %98, %31, %cst_44 {dimension_numbers = #tpu.dot_dimension_numbers<[1], [0], [0], [1], [0, 0, 1, 1], [], []>} : vector<16x6xbf16>, vector<6x32xbf16>, vector<16x32xf32> -> vector<16x32xf32>
    "tpu.trace_stop"() : () -> ()
    %100 = arith.addf %78, %99 : vector<16x32xf32>
    %c0_45 = arith.constant 0 : index
    %c0_46 = arith.constant 0 : index
    %c0_47 = arith.constant 0 : index
    %c0_48 = arith.constant 0 : index
    %101 = vector.load %arg8[%c0_45, %c0_46, %c0_47, %c0_48] : memref<3x2x1x32xf32, #tpu.memory_space<vmem>>, vector<1x1x1x32xf32>
    %102 = vector.shape_cast %101 : vector<1x1x1x32xf32> to vector<1x32xf32>
    %103 = vector.broadcast %102 : vector<1x32xf32> to vector<16x32xf32>
    %104 = arith.mulf %100, %103 : vector<16x32xf32>
    %cst_49 = arith.constant dense<0.000000e+00> : vector<16xf32>
    %105 = vector.multi_reduction <add>, %104, %cst_49 [1] : vector<16x32xf32> to vector<16xf32>
    %106 = vector.shape_cast %105 : vector<16xf32> to vector<16x1xf32>
    %107 = arith.addf %25, %106 : vector<16x1xf32>
    %c0_50 = arith.constant 0 : index
    %c0_51 = arith.constant 0 : index
    %c0_52 = arith.constant 0 : index
    %c0_53 = arith.constant 0 : index
    %108 = vector.load %arg9[%c0_50, %c0_51, %c0_52, %c0_53] : memref<3x2x1x32xf32, #tpu.memory_space<vmem>>, vector<1x1x1x32xf32>
    %109 = vector.shape_cast %108 : vector<1x1x1x32xf32> to vector<1x32xf32>
    %110 = vector.broadcast %109 : vector<1x32xf32> to vector<16x32xf32>
    %111 = arith.mulf %29, %110 : vector<16x32xf32>
    %cst_54 = arith.constant dense<0.000000e+00> : vector<16xf32>
    %112 = vector.multi_reduction <add>, %111, %cst_54 [1] : vector<16x32xf32> to vector<16xf32>
    %113 = vector.shape_cast %112 : vector<16xf32> to vector<16x1xf32>
    %114 = arith.addf %107, %113 : vector<16x1xf32>
    %115 = vector.extract_strided_slice %24 {offsets = [0, 32], sizes = [16, 32], strides = [1, 1]} : vector<16x256xf32> to vector<16x32xf32>
    %116 = vector.extract_strided_slice %24 {offsets = [0, 96], sizes = [16, 32], strides = [1, 1]} : vector<16x256xf32> to vector<16x32xf32>
    %117 = vector.extract_strided_slice %24 {offsets = [0, 160], sizes = [16, 32], strides = [1, 1]} : vector<16x256xf32> to vector<16x32xf32>
    %118 = vector.extract_strided_slice %24 {offsets = [0, 224], sizes = [16, 32], strides = [1, 1]} : vector<16x256xf32> to vector<16x32xf32>
    %c0_55 = arith.constant 0 : index
    %c1_56 = arith.constant 1 : index
    %c0_57 = arith.constant 0 : index
    %c0_58 = arith.constant 0 : index
    %119 = vector.load %arg7[%c0_55, %c1_56, %c0_57, %c0_58] : memref<3x2x6x32xbf16, #tpu.memory_space<vmem>>, vector<1x1x6x32xbf16>
    %120 = vector.shape_cast %119 : vector<1x1x6x32xbf16> to vector<6x32xbf16>
    %121 = arith.truncf %115 : vector<16x32xf32> to vector<16x32xbf16>
    %122 = arith.truncf %116 : vector<16x32xf32> to vector<16x32xbf16>
    "tpu.trace_start"() <{level = 10 : i32, message = "ie,je->ij"}> : () -> ()
    %cst_59 = arith.constant dense<0.000000e+00> : vector<16x16xf32>
    %123 = tpu.matmul %121, %122, %cst_59 {dimension_numbers = #tpu.dot_dimension_numbers<[1], [1], [0], [0], [0, 0, 1, 0], [], []>} : vector<16x32xbf16>, vector<16x32xbf16>, vector<16x16xf32> -> vector<16x16xf32>
    "tpu.trace_stop"() : () -> ()
    "tpu.trace_start"() <{level = 10 : i32, message = "ie,de->id"}> : () -> ()
    %cst_60 = arith.constant dense<0.000000e+00> : vector<16x6xf32>
    %124 = tpu.matmul %121, %120, %cst_60 {dimension_numbers = #tpu.dot_dimension_numbers<[1], [1], [0], [0], [0, 0, 1, 0], [], []>} : vector<16x32xbf16>, vector<6x32xbf16>, vector<16x6xf32> -> vector<16x6xf32>
    "tpu.trace_stop"() : () -> ()
    %125 = vector.extract_strided_slice %124 {offsets = [0, 0], sizes = [16, 1], strides = [1, 1]} : vector<16x6xf32> to vector<16x1xf32>
    %126 = vector.broadcast %125 : vector<16x1xf32> to vector<16x16xf32>
    %127 = arith.mulf %3, %126 : vector<16x16xf32>
    %128 = arith.addf %123, %127 : vector<16x16xf32>
    %129 = vector.extract_strided_slice %124 {offsets = [0, 1], sizes = [16, 1], strides = [1, 1]} : vector<16x6xf32> to vector<16x1xf32>
    %130 = vector.broadcast %129 : vector<16x1xf32> to vector<16x16xf32>
    %131 = arith.mulf %5, %130 : vector<16x16xf32>
    %132 = arith.addf %128, %131 : vector<16x16xf32>
    %133 = vector.extract_strided_slice %124 {offsets = [0, 2], sizes = [16, 1], strides = [1, 1]} : vector<16x6xf32> to vector<16x1xf32>
    %134 = vector.broadcast %133 : vector<16x1xf32> to vector<16x16xf32>
    %135 = arith.mulf %7, %134 : vector<16x16xf32>
    %136 = arith.addf %132, %135 : vector<16x16xf32>
    %137 = vector.extract_strided_slice %124 {offsets = [0, 3], sizes = [16, 1], strides = [1, 1]} : vector<16x6xf32> to vector<16x1xf32>
    %138 = vector.broadcast %137 : vector<16x1xf32> to vector<16x16xf32>
    %139 = arith.mulf %9, %138 : vector<16x16xf32>
    %140 = arith.addf %136, %139 : vector<16x16xf32>
    %141 = vector.extract_strided_slice %124 {offsets = [0, 4], sizes = [16, 1], strides = [1, 1]} : vector<16x6xf32> to vector<16x1xf32>
    %142 = vector.broadcast %141 : vector<16x1xf32> to vector<16x16xf32>
    %143 = arith.mulf %11, %142 : vector<16x16xf32>
    %144 = arith.addf %140, %143 : vector<16x16xf32>
    %145 = vector.extract_strided_slice %124 {offsets = [0, 5], sizes = [16, 1], strides = [1, 1]} : vector<16x6xf32> to vector<16x1xf32>
    %146 = vector.broadcast %145 : vector<16x1xf32> to vector<16x16xf32>
    %147 = arith.mulf %13, %146 : vector<16x16xf32>
    %148 = arith.addf %144, %147 : vector<16x16xf32>
    %149 = arith.addf %148, %1 : vector<16x16xf32>
    %cst_61 = arith.constant dense<0xFF800000> : vector<16xf32>
    %150 = vector.multi_reduction <maximumf>, %149, %cst_61 [1] : vector<16x16xf32> to vector<16xf32>
    %151 = vector.shape_cast %150 : vector<16xf32> to vector<16x1xf32>
    %152 = vector.broadcast %151 : vector<16x1xf32> to vector<16x16xf32>
    %153 = arith.subf %149, %152 : vector<16x16xf32>
    %154 = math.exp %153 : vector<16x16xf32>
    %155 = arith.mulf %154, %0 : vector<16x16xf32>
    %cst_62 = arith.constant dense<0.000000e+00> : vector<16xf32>
    %156 = vector.multi_reduction <add>, %155, %cst_62 [1] : vector<16x16xf32> to vector<16xf32>
    %157 = vector.shape_cast %156 : vector<16xf32> to vector<16x1xf32>
    %cst_63 = arith.constant 0.000000e+00 : f32
    %158 = vector.broadcast %cst_63 : f32 to vector<16x1xf32>
    %159 = arith.cmpf ogt, %157, %158 : vector<16x1xf32>
    %cst_64 = arith.constant 1.000000e+00 : f32
    %160 = vector.broadcast %cst_64 : f32 to vector<16x1xf32>
    %161 = arith.select %159, %157, %160 : vector<16x1xi1>, vector<16x1xf32>
    %162 = tpu.reciprocal %161 : vector<16x1xf32> -> vector<16x1xf32>
    %163 = vector.broadcast %162 : vector<16x1xf32> to vector<16x16xf32>
    %164 = arith.mulf %155, %163 : vector<16x16xf32>
    %165 = arith.truncf %164 : vector<16x16xf32> to vector<16x16xbf16>
    %166 = arith.truncf %117 : vector<16x32xf32> to vector<16x32xbf16>
    "tpu.trace_start"() <{level = 10 : i32, message = "ij,je->ie"}> : () -> ()
    %cst_65 = arith.constant dense<0.000000e+00> : vector<16x32xf32>
    %167 = tpu.matmul %165, %166, %cst_65 {dimension_numbers = #tpu.dot_dimension_numbers<[1], [0], [0], [1], [0, 0, 1, 1], [], []>} : vector<16x16xbf16>, vector<16x32xbf16>, vector<16x32xf32> -> vector<16x32xf32>
    "tpu.trace_stop"() : () -> ()
    %168 = arith.mulf %164, %3 : vector<16x16xf32>
    %cst_66 = arith.constant dense<0.000000e+00> : vector<16xf32>
    %169 = vector.multi_reduction <add>, %168, %cst_66 [1] : vector<16x16xf32> to vector<16xf32>
    %170 = vector.shape_cast %169 : vector<16xf32> to vector<16x1xf32>
    %171 = arith.mulf %164, %5 : vector<16x16xf32>
    %cst_67 = arith.constant dense<0.000000e+00> : vector<16xf32>
    %172 = vector.multi_reduction <add>, %171, %cst_67 [1] : vector<16x16xf32> to vector<16xf32>
    %173 = vector.shape_cast %172 : vector<16xf32> to vector<16x1xf32>
    %174 = arith.mulf %164, %7 : vector<16x16xf32>
    %cst_68 = arith.constant dense<0.000000e+00> : vector<16xf32>
    %175 = vector.multi_reduction <add>, %174, %cst_68 [1] : vector<16x16xf32> to vector<16xf32>
    %176 = vector.shape_cast %175 : vector<16xf32> to vector<16x1xf32>
    %177 = arith.mulf %164, %9 : vector<16x16xf32>
    %cst_69 = arith.constant dense<0.000000e+00> : vector<16xf32>
    %178 = vector.multi_reduction <add>, %177, %cst_69 [1] : vector<16x16xf32> to vector<16xf32>
    %179 = vector.shape_cast %178 : vector<16xf32> to vector<16x1xf32>
    %180 = arith.mulf %164, %11 : vector<16x16xf32>
    %cst_70 = arith.constant dense<0.000000e+00> : vector<16xf32>
    %181 = vector.multi_reduction <add>, %180, %cst_70 [1] : vector<16x16xf32> to vector<16xf32>
    %182 = vector.shape_cast %181 : vector<16xf32> to vector<16x1xf32>
    %183 = arith.mulf %164, %13 : vector<16x16xf32>
    %cst_71 = arith.constant dense<0.000000e+00> : vector<16xf32>
    %184 = vector.multi_reduction <add>, %183, %cst_71 [1] : vector<16x16xf32> to vector<16xf32>
    %185 = vector.shape_cast %184 : vector<16xf32> to vector<16x1xf32>
    %186 = tpu.concatenate %170, %173, %176, %179, %182, %185 in 1 : vector<16x1xf32>, vector<16x1xf32>, vector<16x1xf32>, vector<16x1xf32>, vector<16x1xf32>, vector<16x1xf32> -> vector<16x6xf32>
    %187 = arith.truncf %186 : vector<16x6xf32> to vector<16x6xbf16>
    "tpu.trace_start"() <{level = 10 : i32, message = "id,de->ie"}> : () -> ()
    %cst_72 = arith.constant dense<0.000000e+00> : vector<16x32xf32>
    %188 = tpu.matmul %187, %120, %cst_72 {dimension_numbers = #tpu.dot_dimension_numbers<[1], [0], [0], [1], [0, 0, 1, 1], [], []>} : vector<16x6xbf16>, vector<6x32xbf16>, vector<16x32xf32> -> vector<16x32xf32>
    "tpu.trace_stop"() : () -> ()
    %189 = arith.addf %167, %188 : vector<16x32xf32>
    %c0_73 = arith.constant 0 : index
    %c1_74 = arith.constant 1 : index
    %c0_75 = arith.constant 0 : index
    %c0_76 = arith.constant 0 : index
    %190 = vector.load %arg8[%c0_73, %c1_74, %c0_75, %c0_76] : memref<3x2x1x32xf32, #tpu.memory_space<vmem>>, vector<1x1x1x32xf32>
    %191 = vector.shape_cast %190 : vector<1x1x1x32xf32> to vector<1x32xf32>
    %192 = vector.broadcast %191 : vector<1x32xf32> to vector<16x32xf32>
    %193 = arith.mulf %189, %192 : vector<16x32xf32>
    %cst_77 = arith.constant dense<0.000000e+00> : vector<16xf32>
    %194 = vector.multi_reduction <add>, %193, %cst_77 [1] : vector<16x32xf32> to vector<16xf32>
    %195 = vector.shape_cast %194 : vector<16xf32> to vector<16x1xf32>
    %196 = arith.addf %114, %195 : vector<16x1xf32>
    %c0_78 = arith.constant 0 : index
    %c1_79 = arith.constant 1 : index
    %c0_80 = arith.constant 0 : index
    %c0_81 = arith.constant 0 : index
    %197 = vector.load %arg9[%c0_78, %c1_79, %c0_80, %c0_81] : memref<3x2x1x32xf32, #tpu.memory_space<vmem>>, vector<1x1x1x32xf32>
    %198 = vector.shape_cast %197 : vector<1x1x1x32xf32> to vector<1x32xf32>
    %199 = vector.broadcast %198 : vector<1x32xf32> to vector<16x32xf32>
    %200 = arith.mulf %118, %199 : vector<16x32xf32>
    %cst_82 = arith.constant dense<0.000000e+00> : vector<16xf32>
    %201 = vector.multi_reduction <add>, %200, %cst_82 [1] : vector<16x32xf32> to vector<16xf32>
    %202 = vector.shape_cast %201 : vector<16xf32> to vector<16x1xf32>
    %203 = arith.addf %196, %202 : vector<16x1xf32>
    %204 = arith.negf %203 : vector<16x1xf32>
    %205 = math.exp %204 : vector<16x1xf32>
    %cst_83 = arith.constant 1.000000e+00 : f32
    %206 = vector.broadcast %cst_83 : f32 to vector<16x1xf32>
    %207 = arith.addf %206, %205 : vector<16x1xf32>
    %208 = arith.divf %206, %207 : vector<16x1xf32>
    %c0_84 = arith.constant 0 : index
    %c0_85 = arith.constant 0 : index
    %c0_86 = arith.constant 0 : index
    %209 = vector.load %arg11[%c0_84, %c0_85, %c0_86] : memref<3x1x32xf32, #tpu.memory_space<vmem>>, vector<1x1x32xf32>
    %210 = vector.shape_cast %209 : vector<1x1x32xf32> to vector<1x32xf32>
    %211 = vector.broadcast %208 : vector<16x1xf32> to vector<16x32xf32>
    %212 = arith.mulf %211, %29 : vector<16x32xf32>
    %cst_87 = arith.constant 1.000000e+00 : f32
    %213 = vector.broadcast %cst_87 : f32 to vector<16x1xf32>
    %214 = arith.subf %213, %208 : vector<16x1xf32>
    %215 = vector.broadcast %214 : vector<16x1xf32> to vector<16x32xf32>
    %216 = arith.mulf %215, %100 : vector<16x32xf32>
    %217 = arith.addf %212, %216 : vector<16x32xf32>
    %218 = arith.truncf %217 : vector<16x32xf32> to vector<16x32xbf16>
    %c0_88 = arith.constant 0 : index
    %c0_89 = arith.constant 0 : index
    %c0_90 = arith.constant 0 : index
    %c0_91 = arith.constant 0 : index
    %219 = vector.load %arg10[%c0_88, %c0_89, %c0_90, %c0_91] : memref<3x2x32x32xbf16, #tpu.memory_space<vmem>>, vector<1x1x32x32xbf16>
    %220 = vector.shape_cast %219 : vector<1x1x32x32xbf16> to vector<32x32xbf16>
    %cst_92 = arith.constant dense<0.000000e+00> : vector<16x32xf32>
    %221 = tpu.matmul %218, %220, %cst_92 {dimension_numbers = #tpu.dot_dimension_numbers<[1], [0], [0], [1], [0, 0, 1, 1], [], []>} : vector<16x32xbf16>, vector<32x32xbf16>, vector<16x32xf32> -> vector<16x32xf32>
    %222 = vector.broadcast %210 : vector<1x32xf32> to vector<16x32xf32>
    %223 = arith.addf %222, %221 : vector<16x32xf32>
    %224 = vector.broadcast %208 : vector<16x1xf32> to vector<16x32xf32>
    %225 = arith.mulf %224, %118 : vector<16x32xf32>
    %cst_93 = arith.constant 1.000000e+00 : f32
    %226 = vector.broadcast %cst_93 : f32 to vector<16x1xf32>
    %227 = arith.subf %226, %208 : vector<16x1xf32>
    %228 = vector.broadcast %227 : vector<16x1xf32> to vector<16x32xf32>
    %229 = arith.mulf %228, %189 : vector<16x32xf32>
    %230 = arith.addf %225, %229 : vector<16x32xf32>
    %231 = arith.truncf %230 : vector<16x32xf32> to vector<16x32xbf16>
    %c0_94 = arith.constant 0 : index
    %c1_95 = arith.constant 1 : index
    %c0_96 = arith.constant 0 : index
    %c0_97 = arith.constant 0 : index
    %232 = vector.load %arg10[%c0_94, %c1_95, %c0_96, %c0_97] : memref<3x2x32x32xbf16, #tpu.memory_space<vmem>>, vector<1x1x32x32xbf16>
    %233 = vector.shape_cast %232 : vector<1x1x32x32xbf16> to vector<32x32xbf16>
    %cst_98 = arith.constant dense<0.000000e+00> : vector<16x32xf32>
    %234 = tpu.matmul %231, %233, %cst_98 {dimension_numbers = #tpu.dot_dimension_numbers<[1], [0], [0], [1], [0, 0, 1, 1], [], []>} : vector<16x32xbf16>, vector<32x32xbf16>, vector<16x32xf32> -> vector<16x32xf32>
    %235 = arith.addf %223, %234 : vector<16x32xf32>
    %cst_99 = arith.constant 0.00999999977 : f32
    %236 = vector.broadcast %cst_99 : f32 to vector<16x32xf32>
    %237 = arith.mulf %236, %235 : vector<16x32xf32>
    %238 = arith.maximumf %235, %237 : vector<16x32xf32>
    %c0_100 = arith.constant 0 : index
    %c0_101 = arith.constant 0 : index
    %c0_102 = arith.constant 0 : index
    %239 = vector.load %arg12[%c0_100, %c0_101, %c0_102] : memref<3x1x32xf32, #tpu.memory_space<vmem>>, vector<1x1x32xf32>
    %240 = vector.shape_cast %239 : vector<1x1x32xf32> to vector<1x32xf32>
    %241 = vector.broadcast %240 : vector<1x32xf32> to vector<16x32xf32>
    %242 = arith.mulf %238, %241 : vector<16x32xf32>
    %c0_103 = arith.constant 0 : index
    %c0_104 = arith.constant 0 : index
    %c0_105 = arith.constant 0 : index
    %243 = vector.load %arg13[%c0_103, %c0_104, %c0_105] : memref<3x1x32xf32, #tpu.memory_space<vmem>>, vector<1x1x32xf32>
    %244 = vector.shape_cast %243 : vector<1x1x32xf32> to vector<1x32xf32>
    %245 = vector.broadcast %244 : vector<1x32xf32> to vector<16x32xf32>
    %246 = arith.addf %242, %245 : vector<16x32xf32>
    %247 = arith.truncf %246 : vector<16x32xf32> to vector<16x32xbf16>
    %c1_106 = arith.constant 1 : index
    %c0_107 = arith.constant 0 : index
    %c0_108 = arith.constant 0 : index
    %248 = vector.load %arg5[%c1_106, %c0_107, %c0_108] : memref<3x32x256xbf16, #tpu.memory_space<vmem>>, vector<1x32x256xbf16>
    %249 = vector.shape_cast %248 : vector<1x32x256xbf16> to vector<32x256xbf16>
    %cst_109 = arith.constant dense<0.000000e+00> : vector<16x256xf32>
    %250 = tpu.matmul %247, %249, %cst_109 {dimension_numbers = #tpu.dot_dimension_numbers<[1], [0], [0], [1], [0, 0, 1, 1], [], []>} : vector<16x32xbf16>, vector<32x256xbf16>, vector<16x256xf32> -> vector<16x256xf32>
    %c1_110 = arith.constant 1 : index
    %c0_111 = arith.constant 0 : index
    %c0_112 = arith.constant 0 : index
    %251 = vector.load %arg6[%c1_110, %c0_111, %c0_112] : memref<3x1x256xf32, #tpu.memory_space<vmem>>, vector<1x1x256xf32>
    %252 = vector.shape_cast %251 : vector<1x1x256xf32> to vector<1x256xf32>
    %253 = vector.broadcast %252 : vector<1x256xf32> to vector<16x256xf32>
    %254 = arith.addf %250, %253 : vector<16x256xf32>
    %cst_113 = arith.constant 0.000000e+00 : f32
    %255 = vector.broadcast %cst_113 : f32 to vector<16x1xf32>
    %256 = vector.extract_strided_slice %254 {offsets = [0, 0], sizes = [16, 32], strides = [1, 1]} : vector<16x256xf32> to vector<16x32xf32>
    %257 = vector.extract_strided_slice %254 {offsets = [0, 64], sizes = [16, 32], strides = [1, 1]} : vector<16x256xf32> to vector<16x32xf32>
    %258 = vector.extract_strided_slice %254 {offsets = [0, 128], sizes = [16, 32], strides = [1, 1]} : vector<16x256xf32> to vector<16x32xf32>
    %259 = vector.extract_strided_slice %254 {offsets = [0, 192], sizes = [16, 32], strides = [1, 1]} : vector<16x256xf32> to vector<16x32xf32>
    %c1_114 = arith.constant 1 : index
    %c0_115 = arith.constant 0 : index
    %c0_116 = arith.constant 0 : index
    %c0_117 = arith.constant 0 : index
    %260 = vector.load %arg7[%c1_114, %c0_115, %c0_116, %c0_117] : memref<3x2x6x32xbf16, #tpu.memory_space<vmem>>, vector<1x1x6x32xbf16>
    %261 = vector.shape_cast %260 : vector<1x1x6x32xbf16> to vector<6x32xbf16>
    %262 = arith.truncf %256 : vector<16x32xf32> to vector<16x32xbf16>
    %263 = arith.truncf %257 : vector<16x32xf32> to vector<16x32xbf16>
    "tpu.trace_start"() <{level = 10 : i32, message = "ie,je->ij"}> : () -> ()
    %cst_118 = arith.constant dense<0.000000e+00> : vector<16x16xf32>
    %264 = tpu.matmul %262, %263, %cst_118 {dimension_numbers = #tpu.dot_dimension_numbers<[1], [1], [0], [0], [0, 0, 1, 0], [], []>} : vector<16x32xbf16>, vector<16x32xbf16>, vector<16x16xf32> -> vector<16x16xf32>
    "tpu.trace_stop"() : () -> ()
    "tpu.trace_start"() <{level = 10 : i32, message = "ie,de->id"}> : () -> ()
    %cst_119 = arith.constant dense<0.000000e+00> : vector<16x6xf32>
    %265 = tpu.matmul %262, %261, %cst_119 {dimension_numbers = #tpu.dot_dimension_numbers<[1], [1], [0], [0], [0, 0, 1, 0], [], []>} : vector<16x32xbf16>, vector<6x32xbf16>, vector<16x6xf32> -> vector<16x6xf32>
    "tpu.trace_stop"() : () -> ()
    %266 = vector.extract_strided_slice %265 {offsets = [0, 0], sizes = [16, 1], strides = [1, 1]} : vector<16x6xf32> to vector<16x1xf32>
    %267 = vector.broadcast %266 : vector<16x1xf32> to vector<16x16xf32>
    %268 = arith.mulf %3, %267 : vector<16x16xf32>
    %269 = arith.addf %264, %268 : vector<16x16xf32>
    %270 = vector.extract_strided_slice %265 {offsets = [0, 1], sizes = [16, 1], strides = [1, 1]} : vector<16x6xf32> to vector<16x1xf32>
    %271 = vector.broadcast %270 : vector<16x1xf32> to vector<16x16xf32>
    %272 = arith.mulf %5, %271 : vector<16x16xf32>
    %273 = arith.addf %269, %272 : vector<16x16xf32>
    %274 = vector.extract_strided_slice %265 {offsets = [0, 2], sizes = [16, 1], strides = [1, 1]} : vector<16x6xf32> to vector<16x1xf32>
    %275 = vector.broadcast %274 : vector<16x1xf32> to vector<16x16xf32>
    %276 = arith.mulf %7, %275 : vector<16x16xf32>
    %277 = arith.addf %273, %276 : vector<16x16xf32>
    %278 = vector.extract_strided_slice %265 {offsets = [0, 3], sizes = [16, 1], strides = [1, 1]} : vector<16x6xf32> to vector<16x1xf32>
    %279 = vector.broadcast %278 : vector<16x1xf32> to vector<16x16xf32>
    %280 = arith.mulf %9, %279 : vector<16x16xf32>
    %281 = arith.addf %277, %280 : vector<16x16xf32>
    %282 = vector.extract_strided_slice %265 {offsets = [0, 4], sizes = [16, 1], strides = [1, 1]} : vector<16x6xf32> to vector<16x1xf32>
    %283 = vector.broadcast %282 : vector<16x1xf32> to vector<16x16xf32>
    %284 = arith.mulf %11, %283 : vector<16x16xf32>
    %285 = arith.addf %281, %284 : vector<16x16xf32>
    %286 = vector.extract_strided_slice %265 {offsets = [0, 5], sizes = [16, 1], strides = [1, 1]} : vector<16x6xf32> to vector<16x1xf32>
    %287 = vector.broadcast %286 : vector<16x1xf32> to vector<16x16xf32>
    %288 = arith.mulf %13, %287 : vector<16x16xf32>
    %289 = arith.addf %285, %288 : vector<16x16xf32>
    %290 = arith.addf %289, %1 : vector<16x16xf32>
    %cst_120 = arith.constant dense<0xFF800000> : vector<16xf32>
    %291 = vector.multi_reduction <maximumf>, %290, %cst_120 [1] : vector<16x16xf32> to vector<16xf32>
    %292 = vector.shape_cast %291 : vector<16xf32> to vector<16x1xf32>
    %293 = vector.broadcast %292 : vector<16x1xf32> to vector<16x16xf32>
    %294 = arith.subf %290, %293 : vector<16x16xf32>
    %295 = math.exp %294 : vector<16x16xf32>
    %296 = arith.mulf %295, %0 : vector<16x16xf32>
    %cst_121 = arith.constant dense<0.000000e+00> : vector<16xf32>
    %297 = vector.multi_reduction <add>, %296, %cst_121 [1] : vector<16x16xf32> to vector<16xf32>
    %298 = vector.shape_cast %297 : vector<16xf32> to vector<16x1xf32>
    %cst_122 = arith.constant 0.000000e+00 : f32
    %299 = vector.broadcast %cst_122 : f32 to vector<16x1xf32>
    %300 = arith.cmpf ogt, %298, %299 : vector<16x1xf32>
    %cst_123 = arith.constant 1.000000e+00 : f32
    %301 = vector.broadcast %cst_123 : f32 to vector<16x1xf32>
    %302 = arith.select %300, %298, %301 : vector<16x1xi1>, vector<16x1xf32>
    %303 = tpu.reciprocal %302 : vector<16x1xf32> -> vector<16x1xf32>
    %304 = vector.broadcast %303 : vector<16x1xf32> to vector<16x16xf32>
    %305 = arith.mulf %296, %304 : vector<16x16xf32>
    %306 = arith.truncf %305 : vector<16x16xf32> to vector<16x16xbf16>
    %307 = arith.truncf %258 : vector<16x32xf32> to vector<16x32xbf16>
    "tpu.trace_start"() <{level = 10 : i32, message = "ij,je->ie"}> : () -> ()
    %cst_124 = arith.constant dense<0.000000e+00> : vector<16x32xf32>
    %308 = tpu.matmul %306, %307, %cst_124 {dimension_numbers = #tpu.dot_dimension_numbers<[1], [0], [0], [1], [0, 0, 1, 1], [], []>} : vector<16x16xbf16>, vector<16x32xbf16>, vector<16x32xf32> -> vector<16x32xf32>
    "tpu.trace_stop"() : () -> ()
    %309 = arith.mulf %305, %3 : vector<16x16xf32>
    %cst_125 = arith.constant dense<0.000000e+00> : vector<16xf32>
    %310 = vector.multi_reduction <add>, %309, %cst_125 [1] : vector<16x16xf32> to vector<16xf32>
    %311 = vector.shape_cast %310 : vector<16xf32> to vector<16x1xf32>
    %312 = arith.mulf %305, %5 : vector<16x16xf32>
    %cst_126 = arith.constant dense<0.000000e+00> : vector<16xf32>
    %313 = vector.multi_reduction <add>, %312, %cst_126 [1] : vector<16x16xf32> to vector<16xf32>
    %314 = vector.shape_cast %313 : vector<16xf32> to vector<16x1xf32>
    %315 = arith.mulf %305, %7 : vector<16x16xf32>
    %cst_127 = arith.constant dense<0.000000e+00> : vector<16xf32>
    %316 = vector.multi_reduction <add>, %315, %cst_127 [1] : vector<16x16xf32> to vector<16xf32>
    %317 = vector.shape_cast %316 : vector<16xf32> to vector<16x1xf32>
    %318 = arith.mulf %305, %9 : vector<16x16xf32>
    %cst_128 = arith.constant dense<0.000000e+00> : vector<16xf32>
    %319 = vector.multi_reduction <add>, %318, %cst_128 [1] : vector<16x16xf32> to vector<16xf32>
    %320 = vector.shape_cast %319 : vector<16xf32> to vector<16x1xf32>
    %321 = arith.mulf %305, %11 : vector<16x16xf32>
    %cst_129 = arith.constant dense<0.000000e+00> : vector<16xf32>
    %322 = vector.multi_reduction <add>, %321, %cst_129 [1] : vector<16x16xf32> to vector<16xf32>
    %323 = vector.shape_cast %322 : vector<16xf32> to vector<16x1xf32>
    %324 = arith.mulf %305, %13 : vector<16x16xf32>
    %cst_130 = arith.constant dense<0.000000e+00> : vector<16xf32>
    %325 = vector.multi_reduction <add>, %324, %cst_130 [1] : vector<16x16xf32> to vector<16xf32>
    %326 = vector.shape_cast %325 : vector<16xf32> to vector<16x1xf32>
    %327 = tpu.concatenate %311, %314, %317, %320, %323, %326 in 1 : vector<16x1xf32>, vector<16x1xf32>, vector<16x1xf32>, vector<16x1xf32>, vector<16x1xf32>, vector<16x1xf32> -> vector<16x6xf32>
    %328 = arith.truncf %327 : vector<16x6xf32> to vector<16x6xbf16>
    "tpu.trace_start"() <{level = 10 : i32, message = "id,de->ie"}> : () -> ()
    %cst_131 = arith.constant dense<0.000000e+00> : vector<16x32xf32>
    %329 = tpu.matmul %328, %261, %cst_131 {dimension_numbers = #tpu.dot_dimension_numbers<[1], [0], [0], [1], [0, 0, 1, 1], [], []>} : vector<16x6xbf16>, vector<6x32xbf16>, vector<16x32xf32> -> vector<16x32xf32>
    "tpu.trace_stop"() : () -> ()
    %330 = arith.addf %308, %329 : vector<16x32xf32>
    %c1_132 = arith.constant 1 : index
    %c0_133 = arith.constant 0 : index
    %c0_134 = arith.constant 0 : index
    %c0_135 = arith.constant 0 : index
    %331 = vector.load %arg8[%c1_132, %c0_133, %c0_134, %c0_135] : memref<3x2x1x32xf32, #tpu.memory_space<vmem>>, vector<1x1x1x32xf32>
    %332 = vector.shape_cast %331 : vector<1x1x1x32xf32> to vector<1x32xf32>
    %333 = vector.broadcast %332 : vector<1x32xf32> to vector<16x32xf32>
    %334 = arith.mulf %330, %333 : vector<16x32xf32>
    %cst_136 = arith.constant dense<0.000000e+00> : vector<16xf32>
    %335 = vector.multi_reduction <add>, %334, %cst_136 [1] : vector<16x32xf32> to vector<16xf32>
    %336 = vector.shape_cast %335 : vector<16xf32> to vector<16x1xf32>
    %337 = arith.addf %255, %336 : vector<16x1xf32>
    %c1_137 = arith.constant 1 : index
    %c0_138 = arith.constant 0 : index
    %c0_139 = arith.constant 0 : index
    %c0_140 = arith.constant 0 : index
    %338 = vector.load %arg9[%c1_137, %c0_138, %c0_139, %c0_140] : memref<3x2x1x32xf32, #tpu.memory_space<vmem>>, vector<1x1x1x32xf32>
    %339 = vector.shape_cast %338 : vector<1x1x1x32xf32> to vector<1x32xf32>
    %340 = vector.broadcast %339 : vector<1x32xf32> to vector<16x32xf32>
    %341 = arith.mulf %259, %340 : vector<16x32xf32>
    %cst_141 = arith.constant dense<0.000000e+00> : vector<16xf32>
    %342 = vector.multi_reduction <add>, %341, %cst_141 [1] : vector<16x32xf32> to vector<16xf32>
    %343 = vector.shape_cast %342 : vector<16xf32> to vector<16x1xf32>
    %344 = arith.addf %337, %343 : vector<16x1xf32>
    %345 = vector.extract_strided_slice %254 {offsets = [0, 32], sizes = [16, 32], strides = [1, 1]} : vector<16x256xf32> to vector<16x32xf32>
    %346 = vector.extract_strided_slice %254 {offsets = [0, 96], sizes = [16, 32], strides = [1, 1]} : vector<16x256xf32> to vector<16x32xf32>
    %347 = vector.extract_strided_slice %254 {offsets = [0, 160], sizes = [16, 32], strides = [1, 1]} : vector<16x256xf32> to vector<16x32xf32>
    %348 = vector.extract_strided_slice %254 {offsets = [0, 224], sizes = [16, 32], strides = [1, 1]} : vector<16x256xf32> to vector<16x32xf32>
    %c1_142 = arith.constant 1 : index
    %c1_143 = arith.constant 1 : index
    %c0_144 = arith.constant 0 : index
    %c0_145 = arith.constant 0 : index
    %349 = vector.load %arg7[%c1_142, %c1_143, %c0_144, %c0_145] : memref<3x2x6x32xbf16, #tpu.memory_space<vmem>>, vector<1x1x6x32xbf16>
    %350 = vector.shape_cast %349 : vector<1x1x6x32xbf16> to vector<6x32xbf16>
    %351 = arith.truncf %345 : vector<16x32xf32> to vector<16x32xbf16>
    %352 = arith.truncf %346 : vector<16x32xf32> to vector<16x32xbf16>
    "tpu.trace_start"() <{level = 10 : i32, message = "ie,je->ij"}> : () -> ()
    %cst_146 = arith.constant dense<0.000000e+00> : vector<16x16xf32>
    %353 = tpu.matmul %351, %352, %cst_146 {dimension_numbers = #tpu.dot_dimension_numbers<[1], [1], [0], [0], [0, 0, 1, 0], [], []>} : vector<16x32xbf16>, vector<16x32xbf16>, vector<16x16xf32> -> vector<16x16xf32>
    "tpu.trace_stop"() : () -> ()
    "tpu.trace_start"() <{level = 10 : i32, message = "ie,de->id"}> : () -> ()
    %cst_147 = arith.constant dense<0.000000e+00> : vector<16x6xf32>
    %354 = tpu.matmul %351, %350, %cst_147 {dimension_numbers = #tpu.dot_dimension_numbers<[1], [1], [0], [0], [0, 0, 1, 0], [], []>} : vector<16x32xbf16>, vector<6x32xbf16>, vector<16x6xf32> -> vector<16x6xf32>
    "tpu.trace_stop"() : () -> ()
    %355 = vector.extract_strided_slice %354 {offsets = [0, 0], sizes = [16, 1], strides = [1, 1]} : vector<16x6xf32> to vector<16x1xf32>
    %356 = vector.broadcast %355 : vector<16x1xf32> to vector<16x16xf32>
    %357 = arith.mulf %3, %356 : vector<16x16xf32>
    %358 = arith.addf %353, %357 : vector<16x16xf32>
    %359 = vector.extract_strided_slice %354 {offsets = [0, 1], sizes = [16, 1], strides = [1, 1]} : vector<16x6xf32> to vector<16x1xf32>
    %360 = vector.broadcast %359 : vector<16x1xf32> to vector<16x16xf32>
    %361 = arith.mulf %5, %360 : vector<16x16xf32>
    %362 = arith.addf %358, %361 : vector<16x16xf32>
    %363 = vector.extract_strided_slice %354 {offsets = [0, 2], sizes = [16, 1], strides = [1, 1]} : vector<16x6xf32> to vector<16x1xf32>
    %364 = vector.broadcast %363 : vector<16x1xf32> to vector<16x16xf32>
    %365 = arith.mulf %7, %364 : vector<16x16xf32>
    %366 = arith.addf %362, %365 : vector<16x16xf32>
    %367 = vector.extract_strided_slice %354 {offsets = [0, 3], sizes = [16, 1], strides = [1, 1]} : vector<16x6xf32> to vector<16x1xf32>
    %368 = vector.broadcast %367 : vector<16x1xf32> to vector<16x16xf32>
    %369 = arith.mulf %9, %368 : vector<16x16xf32>
    %370 = arith.addf %366, %369 : vector<16x16xf32>
    %371 = vector.extract_strided_slice %354 {offsets = [0, 4], sizes = [16, 1], strides = [1, 1]} : vector<16x6xf32> to vector<16x1xf32>
    %372 = vector.broadcast %371 : vector<16x1xf32> to vector<16x16xf32>
    %373 = arith.mulf %11, %372 : vector<16x16xf32>
    %374 = arith.addf %370, %373 : vector<16x16xf32>
    %375 = vector.extract_strided_slice %354 {offsets = [0, 5], sizes = [16, 1], strides = [1, 1]} : vector<16x6xf32> to vector<16x1xf32>
    %376 = vector.broadcast %375 : vector<16x1xf32> to vector<16x16xf32>
    %377 = arith.mulf %13, %376 : vector<16x16xf32>
    %378 = arith.addf %374, %377 : vector<16x16xf32>
    %379 = arith.addf %378, %1 : vector<16x16xf32>
    %cst_148 = arith.constant dense<0xFF800000> : vector<16xf32>
    %380 = vector.multi_reduction <maximumf>, %379, %cst_148 [1] : vector<16x16xf32> to vector<16xf32>
    %381 = vector.shape_cast %380 : vector<16xf32> to vector<16x1xf32>
    %382 = vector.broadcast %381 : vector<16x1xf32> to vector<16x16xf32>
    %383 = arith.subf %379, %382 : vector<16x16xf32>
    %384 = math.exp %383 : vector<16x16xf32>
    %385 = arith.mulf %384, %0 : vector<16x16xf32>
    %cst_149 = arith.constant dense<0.000000e+00> : vector<16xf32>
    %386 = vector.multi_reduction <add>, %385, %cst_149 [1] : vector<16x16xf32> to vector<16xf32>
    %387 = vector.shape_cast %386 : vector<16xf32> to vector<16x1xf32>
    %cst_150 = arith.constant 0.000000e+00 : f32
    %388 = vector.broadcast %cst_150 : f32 to vector<16x1xf32>
    %389 = arith.cmpf ogt, %387, %388 : vector<16x1xf32>
    %cst_151 = arith.constant 1.000000e+00 : f32
    %390 = vector.broadcast %cst_151 : f32 to vector<16x1xf32>
    %391 = arith.select %389, %387, %390 : vector<16x1xi1>, vector<16x1xf32>
    %392 = tpu.reciprocal %391 : vector<16x1xf32> -> vector<16x1xf32>
    %393 = vector.broadcast %392 : vector<16x1xf32> to vector<16x16xf32>
    %394 = arith.mulf %385, %393 : vector<16x16xf32>
    %395 = arith.truncf %394 : vector<16x16xf32> to vector<16x16xbf16>
    %396 = arith.truncf %347 : vector<16x32xf32> to vector<16x32xbf16>
    "tpu.trace_start"() <{level = 10 : i32, message = "ij,je->ie"}> : () -> ()
    %cst_152 = arith.constant dense<0.000000e+00> : vector<16x32xf32>
    %397 = tpu.matmul %395, %396, %cst_152 {dimension_numbers = #tpu.dot_dimension_numbers<[1], [0], [0], [1], [0, 0, 1, 1], [], []>} : vector<16x16xbf16>, vector<16x32xbf16>, vector<16x32xf32> -> vector<16x32xf32>
    "tpu.trace_stop"() : () -> ()
    %398 = arith.mulf %394, %3 : vector<16x16xf32>
    %cst_153 = arith.constant dense<0.000000e+00> : vector<16xf32>
    %399 = vector.multi_reduction <add>, %398, %cst_153 [1] : vector<16x16xf32> to vector<16xf32>
    %400 = vector.shape_cast %399 : vector<16xf32> to vector<16x1xf32>
    %401 = arith.mulf %394, %5 : vector<16x16xf32>
    %cst_154 = arith.constant dense<0.000000e+00> : vector<16xf32>
    %402 = vector.multi_reduction <add>, %401, %cst_154 [1] : vector<16x16xf32> to vector<16xf32>
    %403 = vector.shape_cast %402 : vector<16xf32> to vector<16x1xf32>
    %404 = arith.mulf %394, %7 : vector<16x16xf32>
    %cst_155 = arith.constant dense<0.000000e+00> : vector<16xf32>
    %405 = vector.multi_reduction <add>, %404, %cst_155 [1] : vector<16x16xf32> to vector<16xf32>
    %406 = vector.shape_cast %405 : vector<16xf32> to vector<16x1xf32>
    %407 = arith.mulf %394, %9 : vector<16x16xf32>
    %cst_156 = arith.constant dense<0.000000e+00> : vector<16xf32>
    %408 = vector.multi_reduction <add>, %407, %cst_156 [1] : vector<16x16xf32> to vector<16xf32>
    %409 = vector.shape_cast %408 : vector<16xf32> to vector<16x1xf32>
    %410 = arith.mulf %394, %11 : vector<16x16xf32>
    %cst_157 = arith.constant dense<0.000000e+00> : vector<16xf32>
    %411 = vector.multi_reduction <add>, %410, %cst_157 [1] : vector<16x16xf32> to vector<16xf32>
    %412 = vector.shape_cast %411 : vector<16xf32> to vector<16x1xf32>
    %413 = arith.mulf %394, %13 : vector<16x16xf32>
    %cst_158 = arith.constant dense<0.000000e+00> : vector<16xf32>
    %414 = vector.multi_reduction <add>, %413, %cst_158 [1] : vector<16x16xf32> to vector<16xf32>
    %415 = vector.shape_cast %414 : vector<16xf32> to vector<16x1xf32>
    %416 = tpu.concatenate %400, %403, %406, %409, %412, %415 in 1 : vector<16x1xf32>, vector<16x1xf32>, vector<16x1xf32>, vector<16x1xf32>, vector<16x1xf32>, vector<16x1xf32> -> vector<16x6xf32>
    %417 = arith.truncf %416 : vector<16x6xf32> to vector<16x6xbf16>
    "tpu.trace_start"() <{level = 10 : i32, message = "id,de->ie"}> : () -> ()
    %cst_159 = arith.constant dense<0.000000e+00> : vector<16x32xf32>
    %418 = tpu.matmul %417, %350, %cst_159 {dimension_numbers = #tpu.dot_dimension_numbers<[1], [0], [0], [1], [0, 0, 1, 1], [], []>} : vector<16x6xbf16>, vector<6x32xbf16>, vector<16x32xf32> -> vector<16x32xf32>
    "tpu.trace_stop"() : () -> ()
    %419 = arith.addf %397, %418 : vector<16x32xf32>
    %c1_160 = arith.constant 1 : index
    %c1_161 = arith.constant 1 : index
    %c0_162 = arith.constant 0 : index
    %c0_163 = arith.constant 0 : index
    %420 = vector.load %arg8[%c1_160, %c1_161, %c0_162, %c0_163] : memref<3x2x1x32xf32, #tpu.memory_space<vmem>>, vector<1x1x1x32xf32>
    %421 = vector.shape_cast %420 : vector<1x1x1x32xf32> to vector<1x32xf32>
    %422 = vector.broadcast %421 : vector<1x32xf32> to vector<16x32xf32>
    %423 = arith.mulf %419, %422 : vector<16x32xf32>
    %cst_164 = arith.constant dense<0.000000e+00> : vector<16xf32>
    %424 = vector.multi_reduction <add>, %423, %cst_164 [1] : vector<16x32xf32> to vector<16xf32>
    %425 = vector.shape_cast %424 : vector<16xf32> to vector<16x1xf32>
    %426 = arith.addf %344, %425 : vector<16x1xf32>
    %c1_165 = arith.constant 1 : index
    %c1_166 = arith.constant 1 : index
    %c0_167 = arith.constant 0 : index
    %c0_168 = arith.constant 0 : index
    %427 = vector.load %arg9[%c1_165, %c1_166, %c0_167, %c0_168] : memref<3x2x1x32xf32, #tpu.memory_space<vmem>>, vector<1x1x1x32xf32>
    %428 = vector.shape_cast %427 : vector<1x1x1x32xf32> to vector<1x32xf32>
    %429 = vector.broadcast %428 : vector<1x32xf32> to vector<16x32xf32>
    %430 = arith.mulf %348, %429 : vector<16x32xf32>
    %cst_169 = arith.constant dense<0.000000e+00> : vector<16xf32>
    %431 = vector.multi_reduction <add>, %430, %cst_169 [1] : vector<16x32xf32> to vector<16xf32>
    %432 = vector.shape_cast %431 : vector<16xf32> to vector<16x1xf32>
    %433 = arith.addf %426, %432 : vector<16x1xf32>
    %434 = arith.negf %433 : vector<16x1xf32>
    %435 = math.exp %434 : vector<16x1xf32>
    %cst_170 = arith.constant 1.000000e+00 : f32
    %436 = vector.broadcast %cst_170 : f32 to vector<16x1xf32>
    %437 = arith.addf %436, %435 : vector<16x1xf32>
    %438 = arith.divf %436, %437 : vector<16x1xf32>
    %c1_171 = arith.constant 1 : index
    %c0_172 = arith.constant 0 : index
    %c0_173 = arith.constant 0 : index
    %439 = vector.load %arg11[%c1_171, %c0_172, %c0_173] : memref<3x1x32xf32, #tpu.memory_space<vmem>>, vector<1x1x32xf32>
    %440 = vector.shape_cast %439 : vector<1x1x32xf32> to vector<1x32xf32>
    %441 = vector.broadcast %438 : vector<16x1xf32> to vector<16x32xf32>
    %442 = arith.mulf %441, %259 : vector<16x32xf32>
    %cst_174 = arith.constant 1.000000e+00 : f32
    %443 = vector.broadcast %cst_174 : f32 to vector<16x1xf32>
    %444 = arith.subf %443, %438 : vector<16x1xf32>
    %445 = vector.broadcast %444 : vector<16x1xf32> to vector<16x32xf32>
    %446 = arith.mulf %445, %330 : vector<16x32xf32>
    %447 = arith.addf %442, %446 : vector<16x32xf32>
    %448 = arith.truncf %447 : vector<16x32xf32> to vector<16x32xbf16>
    %c1_175 = arith.constant 1 : index
    %c0_176 = arith.constant 0 : index
    %c0_177 = arith.constant 0 : index
    %c0_178 = arith.constant 0 : index
    %449 = vector.load %arg10[%c1_175, %c0_176, %c0_177, %c0_178] : memref<3x2x32x32xbf16, #tpu.memory_space<vmem>>, vector<1x1x32x32xbf16>
    %450 = vector.shape_cast %449 : vector<1x1x32x32xbf16> to vector<32x32xbf16>
    %cst_179 = arith.constant dense<0.000000e+00> : vector<16x32xf32>
    %451 = tpu.matmul %448, %450, %cst_179 {dimension_numbers = #tpu.dot_dimension_numbers<[1], [0], [0], [1], [0, 0, 1, 1], [], []>} : vector<16x32xbf16>, vector<32x32xbf16>, vector<16x32xf32> -> vector<16x32xf32>
    %452 = vector.broadcast %440 : vector<1x32xf32> to vector<16x32xf32>
    %453 = arith.addf %452, %451 : vector<16x32xf32>
    %454 = vector.broadcast %438 : vector<16x1xf32> to vector<16x32xf32>
    %455 = arith.mulf %454, %348 : vector<16x32xf32>
    %cst_180 = arith.constant 1.000000e+00 : f32
    %456 = vector.broadcast %cst_180 : f32 to vector<16x1xf32>
    %457 = arith.subf %456, %438 : vector<16x1xf32>
    %458 = vector.broadcast %457 : vector<16x1xf32> to vector<16x32xf32>
    %459 = arith.mulf %458, %419 : vector<16x32xf32>
    %460 = arith.addf %455, %459 : vector<16x32xf32>
    %461 = arith.truncf %460 : vector<16x32xf32> to vector<16x32xbf16>
    %c1_181 = arith.constant 1 : index
    %c1_182 = arith.constant 1 : index
    %c0_183 = arith.constant 0 : index
    %c0_184 = arith.constant 0 : index
    %462 = vector.load %arg10[%c1_181, %c1_182, %c0_183, %c0_184] : memref<3x2x32x32xbf16, #tpu.memory_space<vmem>>, vector<1x1x32x32xbf16>
    %463 = vector.shape_cast %462 : vector<1x1x32x32xbf16> to vector<32x32xbf16>
    %cst_185 = arith.constant dense<0.000000e+00> : vector<16x32xf32>
    %464 = tpu.matmul %461, %463, %cst_185 {dimension_numbers = #tpu.dot_dimension_numbers<[1], [0], [0], [1], [0, 0, 1, 1], [], []>} : vector<16x32xbf16>, vector<32x32xbf16>, vector<16x32xf32> -> vector<16x32xf32>
    %465 = arith.addf %453, %464 : vector<16x32xf32>
    %cst_186 = arith.constant 0.00999999977 : f32
    %466 = vector.broadcast %cst_186 : f32 to vector<16x32xf32>
    %467 = arith.mulf %466, %465 : vector<16x32xf32>
    %468 = arith.maximumf %465, %467 : vector<16x32xf32>
    %c1_187 = arith.constant 1 : index
    %c0_188 = arith.constant 0 : index
    %c0_189 = arith.constant 0 : index
    %469 = vector.load %arg12[%c1_187, %c0_188, %c0_189] : memref<3x1x32xf32, #tpu.memory_space<vmem>>, vector<1x1x32xf32>
    %470 = vector.shape_cast %469 : vector<1x1x32xf32> to vector<1x32xf32>
    %471 = vector.broadcast %470 : vector<1x32xf32> to vector<16x32xf32>
    %472 = arith.mulf %468, %471 : vector<16x32xf32>
    %c1_190 = arith.constant 1 : index
    %c0_191 = arith.constant 0 : index
    %c0_192 = arith.constant 0 : index
    %473 = vector.load %arg13[%c1_190, %c0_191, %c0_192] : memref<3x1x32xf32, #tpu.memory_space<vmem>>, vector<1x1x32xf32>
    %474 = vector.shape_cast %473 : vector<1x1x32xf32> to vector<1x32xf32>
    %475 = vector.broadcast %474 : vector<1x32xf32> to vector<16x32xf32>
    %476 = arith.addf %472, %475 : vector<16x32xf32>
    %477 = vector.shape_cast %476 : vector<16x32xf32> to vector<2x8x32xf32>
    %cst_193 = arith.constant dense<0xFF800000> : vector<2x32xf32>
    %478 = vector.multi_reduction <maximumf>, %477, %cst_193 [1] : vector<2x8x32xf32> to vector<2x32xf32>
    %cst_194 = arith.constant dense<0.000000e+00> : vector<2x32xf32>
    %479 = vector.multi_reduction <add>, %477, %cst_194 [1] : vector<2x8x32xf32> to vector<2x32xf32>
    %cst_195 = arith.constant 1.250000e-01 : f32
    %480 = vector.broadcast %cst_195 : f32 to vector<2x32xf32>
    %481 = arith.mulf %479, %480 : vector<2x32xf32>
    %482 = arith.addf %15, %478 : vector<2x32xf32>
    %483 = arith.addf %16, %481 : vector<2x32xf32>
    %484 = arith.truncf %476 : vector<16x32xf32> to vector<16x32xbf16>
    %c2_196 = arith.constant 2 : index
    %c0_197 = arith.constant 0 : index
    %c0_198 = arith.constant 0 : index
    %485 = vector.load %arg5[%c2_196, %c0_197, %c0_198] : memref<3x32x256xbf16, #tpu.memory_space<vmem>>, vector<1x32x256xbf16>
    %486 = vector.shape_cast %485 : vector<1x32x256xbf16> to vector<32x256xbf16>
    %cst_199 = arith.constant dense<0.000000e+00> : vector<16x256xf32>
    %487 = tpu.matmul %484, %486, %cst_199 {dimension_numbers = #tpu.dot_dimension_numbers<[1], [0], [0], [1], [0, 0, 1, 1], [], []>} : vector<16x32xbf16>, vector<32x256xbf16>, vector<16x256xf32> -> vector<16x256xf32>
    %c2_200 = arith.constant 2 : index
    %c0_201 = arith.constant 0 : index
    %c0_202 = arith.constant 0 : index
    %488 = vector.load %arg6[%c2_200, %c0_201, %c0_202] : memref<3x1x256xf32, #tpu.memory_space<vmem>>, vector<1x1x256xf32>
    %489 = vector.shape_cast %488 : vector<1x1x256xf32> to vector<1x256xf32>
    %490 = vector.broadcast %489 : vector<1x256xf32> to vector<16x256xf32>
    %491 = arith.addf %487, %490 : vector<16x256xf32>
    %cst_203 = arith.constant 0.000000e+00 : f32
    %492 = vector.broadcast %cst_203 : f32 to vector<16x1xf32>
    %493 = vector.extract_strided_slice %491 {offsets = [0, 0], sizes = [16, 32], strides = [1, 1]} : vector<16x256xf32> to vector<16x32xf32>
    %494 = vector.extract_strided_slice %491 {offsets = [0, 64], sizes = [16, 32], strides = [1, 1]} : vector<16x256xf32> to vector<16x32xf32>
    %495 = vector.extract_strided_slice %491 {offsets = [0, 128], sizes = [16, 32], strides = [1, 1]} : vector<16x256xf32> to vector<16x32xf32>
    %496 = vector.extract_strided_slice %491 {offsets = [0, 192], sizes = [16, 32], strides = [1, 1]} : vector<16x256xf32> to vector<16x32xf32>
    %c2_204 = arith.constant 2 : index
    %c0_205 = arith.constant 0 : index
    %c0_206 = arith.constant 0 : index
    %c0_207 = arith.constant 0 : index
    %497 = vector.load %arg7[%c2_204, %c0_205, %c0_206, %c0_207] : memref<3x2x6x32xbf16, #tpu.memory_space<vmem>>, vector<1x1x6x32xbf16>
    %498 = vector.shape_cast %497 : vector<1x1x6x32xbf16> to vector<6x32xbf16>
    %499 = arith.truncf %493 : vector<16x32xf32> to vector<16x32xbf16>
    %500 = arith.truncf %494 : vector<16x32xf32> to vector<16x32xbf16>
    "tpu.trace_start"() <{level = 10 : i32, message = "ie,je->ij"}> : () -> ()
    %cst_208 = arith.constant dense<0.000000e+00> : vector<16x16xf32>
    %501 = tpu.matmul %499, %500, %cst_208 {dimension_numbers = #tpu.dot_dimension_numbers<[1], [1], [0], [0], [0, 0, 1, 0], [], []>} : vector<16x32xbf16>, vector<16x32xbf16>, vector<16x16xf32> -> vector<16x16xf32>
    "tpu.trace_stop"() : () -> ()
    "tpu.trace_start"() <{level = 10 : i32, message = "ie,de->id"}> : () -> ()
    %cst_209 = arith.constant dense<0.000000e+00> : vector<16x6xf32>
    %502 = tpu.matmul %499, %498, %cst_209 {dimension_numbers = #tpu.dot_dimension_numbers<[1], [1], [0], [0], [0, 0, 1, 0], [], []>} : vector<16x32xbf16>, vector<6x32xbf16>, vector<16x6xf32> -> vector<16x6xf32>
    "tpu.trace_stop"() : () -> ()
    %503 = vector.extract_strided_slice %502 {offsets = [0, 0], sizes = [16, 1], strides = [1, 1]} : vector<16x6xf32> to vector<16x1xf32>
    %504 = vector.broadcast %503 : vector<16x1xf32> to vector<16x16xf32>
    %505 = arith.mulf %3, %504 : vector<16x16xf32>
    %506 = arith.addf %501, %505 : vector<16x16xf32>
    %507 = vector.extract_strided_slice %502 {offsets = [0, 1], sizes = [16, 1], strides = [1, 1]} : vector<16x6xf32> to vector<16x1xf32>
    %508 = vector.broadcast %507 : vector<16x1xf32> to vector<16x16xf32>
    %509 = arith.mulf %5, %508 : vector<16x16xf32>
    %510 = arith.addf %506, %509 : vector<16x16xf32>
    %511 = vector.extract_strided_slice %502 {offsets = [0, 2], sizes = [16, 1], strides = [1, 1]} : vector<16x6xf32> to vector<16x1xf32>
    %512 = vector.broadcast %511 : vector<16x1xf32> to vector<16x16xf32>
    %513 = arith.mulf %7, %512 : vector<16x16xf32>
    %514 = arith.addf %510, %513 : vector<16x16xf32>
    %515 = vector.extract_strided_slice %502 {offsets = [0, 3], sizes = [16, 1], strides = [1, 1]} : vector<16x6xf32> to vector<16x1xf32>
    %516 = vector.broadcast %515 : vector<16x1xf32> to vector<16x16xf32>
    %517 = arith.mulf %9, %516 : vector<16x16xf32>
    %518 = arith.addf %514, %517 : vector<16x16xf32>
    %519 = vector.extract_strided_slice %502 {offsets = [0, 4], sizes = [16, 1], strides = [1, 1]} : vector<16x6xf32> to vector<16x1xf32>
    %520 = vector.broadcast %519 : vector<16x1xf32> to vector<16x16xf32>
    %521 = arith.mulf %11, %520 : vector<16x16xf32>
    %522 = arith.addf %518, %521 : vector<16x16xf32>
    %523 = vector.extract_strided_slice %502 {offsets = [0, 5], sizes = [16, 1], strides = [1, 1]} : vector<16x6xf32> to vector<16x1xf32>
    %524 = vector.broadcast %523 : vector<16x1xf32> to vector<16x16xf32>
    %525 = arith.mulf %13, %524 : vector<16x16xf32>
    %526 = arith.addf %522, %525 : vector<16x16xf32>
    %527 = arith.addf %526, %1 : vector<16x16xf32>
    %cst_210 = arith.constant dense<0xFF800000> : vector<16xf32>
    %528 = vector.multi_reduction <maximumf>, %527, %cst_210 [1] : vector<16x16xf32> to vector<16xf32>
    %529 = vector.shape_cast %528 : vector<16xf32> to vector<16x1xf32>
    %530 = vector.broadcast %529 : vector<16x1xf32> to vector<16x16xf32>
    %531 = arith.subf %527, %530 : vector<16x16xf32>
    %532 = math.exp %531 : vector<16x16xf32>
    %533 = arith.mulf %532, %0 : vector<16x16xf32>
    %cst_211 = arith.constant dense<0.000000e+00> : vector<16xf32>
    %534 = vector.multi_reduction <add>, %533, %cst_211 [1] : vector<16x16xf32> to vector<16xf32>
    %535 = vector.shape_cast %534 : vector<16xf32> to vector<16x1xf32>
    %cst_212 = arith.constant 0.000000e+00 : f32
    %536 = vector.broadcast %cst_212 : f32 to vector<16x1xf32>
    %537 = arith.cmpf ogt, %535, %536 : vector<16x1xf32>
    %cst_213 = arith.constant 1.000000e+00 : f32
    %538 = vector.broadcast %cst_213 : f32 to vector<16x1xf32>
    %539 = arith.select %537, %535, %538 : vector<16x1xi1>, vector<16x1xf32>
    %540 = tpu.reciprocal %539 : vector<16x1xf32> -> vector<16x1xf32>
    %541 = vector.broadcast %540 : vector<16x1xf32> to vector<16x16xf32>
    %542 = arith.mulf %533, %541 : vector<16x16xf32>
    %543 = arith.truncf %542 : vector<16x16xf32> to vector<16x16xbf16>
    %544 = arith.truncf %495 : vector<16x32xf32> to vector<16x32xbf16>
    "tpu.trace_start"() <{level = 10 : i32, message = "ij,je->ie"}> : () -> ()
    %cst_214 = arith.constant dense<0.000000e+00> : vector<16x32xf32>
    %545 = tpu.matmul %543, %544, %cst_214 {dimension_numbers = #tpu.dot_dimension_numbers<[1], [0], [0], [1], [0, 0, 1, 1], [], []>} : vector<16x16xbf16>, vector<16x32xbf16>, vector<16x32xf32> -> vector<16x32xf32>
    "tpu.trace_stop"() : () -> ()
    %546 = arith.mulf %542, %3 : vector<16x16xf32>
    %cst_215 = arith.constant dense<0.000000e+00> : vector<16xf32>
    %547 = vector.multi_reduction <add>, %546, %cst_215 [1] : vector<16x16xf32> to vector<16xf32>
    %548 = vector.shape_cast %547 : vector<16xf32> to vector<16x1xf32>
    %549 = arith.mulf %542, %5 : vector<16x16xf32>
    %cst_216 = arith.constant dense<0.000000e+00> : vector<16xf32>
    %550 = vector.multi_reduction <add>, %549, %cst_216 [1] : vector<16x16xf32> to vector<16xf32>
    %551 = vector.shape_cast %550 : vector<16xf32> to vector<16x1xf32>
    %552 = arith.mulf %542, %7 : vector<16x16xf32>
    %cst_217 = arith.constant dense<0.000000e+00> : vector<16xf32>
    %553 = vector.multi_reduction <add>, %552, %cst_217 [1] : vector<16x16xf32> to vector<16xf32>
    %554 = vector.shape_cast %553 : vector<16xf32> to vector<16x1xf32>
    %555 = arith.mulf %542, %9 : vector<16x16xf32>
    %cst_218 = arith.constant dense<0.000000e+00> : vector<16xf32>
    %556 = vector.multi_reduction <add>, %555, %cst_218 [1] : vector<16x16xf32> to vector<16xf32>
    %557 = vector.shape_cast %556 : vector<16xf32> to vector<16x1xf32>
    %558 = arith.mulf %542, %11 : vector<16x16xf32>
    %cst_219 = arith.constant dense<0.000000e+00> : vector<16xf32>
    %559 = vector.multi_reduction <add>, %558, %cst_219 [1] : vector<16x16xf32> to vector<16xf32>
    %560 = vector.shape_cast %559 : vector<16xf32> to vector<16x1xf32>
    %561 = arith.mulf %542, %13 : vector<16x16xf32>
    %cst_220 = arith.constant dense<0.000000e+00> : vector<16xf32>
    %562 = vector.multi_reduction <add>, %561, %cst_220 [1] : vector<16x16xf32> to vector<16xf32>
    %563 = vector.shape_cast %562 : vector<16xf32> to vector<16x1xf32>
    %564 = tpu.concatenate %548, %551, %554, %557, %560, %563 in 1 : vector<16x1xf32>, vector<16x1xf32>, vector<16x1xf32>, vector<16x1xf32>, vector<16x1xf32>, vector<16x1xf32> -> vector<16x6xf32>
    %565 = arith.truncf %564 : vector<16x6xf32> to vector<16x6xbf16>
    "tpu.trace_start"() <{level = 10 : i32, message = "id,de->ie"}> : () -> ()
    %cst_221 = arith.constant dense<0.000000e+00> : vector<16x32xf32>
    %566 = tpu.matmul %565, %498, %cst_221 {dimension_numbers = #tpu.dot_dimension_numbers<[1], [0], [0], [1], [0, 0, 1, 1], [], []>} : vector<16x6xbf16>, vector<6x32xbf16>, vector<16x32xf32> -> vector<16x32xf32>
    "tpu.trace_stop"() : () -> ()
    %567 = arith.addf %545, %566 : vector<16x32xf32>
    %c2_222 = arith.constant 2 : index
    %c0_223 = arith.constant 0 : index
    %c0_224 = arith.constant 0 : index
    %c0_225 = arith.constant 0 : index
    %568 = vector.load %arg8[%c2_222, %c0_223, %c0_224, %c0_225] : memref<3x2x1x32xf32, #tpu.memory_space<vmem>>, vector<1x1x1x32xf32>
    %569 = vector.shape_cast %568 : vector<1x1x1x32xf32> to vector<1x32xf32>
    %570 = vector.broadcast %569 : vector<1x32xf32> to vector<16x32xf32>
    %571 = arith.mulf %567, %570 : vector<16x32xf32>
    %cst_226 = arith.constant dense<0.000000e+00> : vector<16xf32>
    %572 = vector.multi_reduction <add>, %571, %cst_226 [1] : vector<16x32xf32> to vector<16xf32>
    %573 = vector.shape_cast %572 : vector<16xf32> to vector<16x1xf32>
    %574 = arith.addf %492, %573 : vector<16x1xf32>
    %c2_227 = arith.constant 2 : index
    %c0_228 = arith.constant 0 : index
    %c0_229 = arith.constant 0 : index
    %c0_230 = arith.constant 0 : index
    %575 = vector.load %arg9[%c2_227, %c0_228, %c0_229, %c0_230] : memref<3x2x1x32xf32, #tpu.memory_space<vmem>>, vector<1x1x1x32xf32>
    %576 = vector.shape_cast %575 : vector<1x1x1x32xf32> to vector<1x32xf32>
    %577 = vector.broadcast %576 : vector<1x32xf32> to vector<16x32xf32>
    %578 = arith.mulf %496, %577 : vector<16x32xf32>
    %cst_231 = arith.constant dense<0.000000e+00> : vector<16xf32>
    %579 = vector.multi_reduction <add>, %578, %cst_231 [1] : vector<16x32xf32> to vector<16xf32>
    %580 = vector.shape_cast %579 : vector<16xf32> to vector<16x1xf32>
    %581 = arith.addf %574, %580 : vector<16x1xf32>
    %582 = vector.extract_strided_slice %491 {offsets = [0, 32], sizes = [16, 32], strides = [1, 1]} : vector<16x256xf32> to vector<16x32xf32>
    %583 = vector.extract_strided_slice %491 {offsets = [0, 96], sizes = [16, 32], strides = [1, 1]} : vector<16x256xf32> to vector<16x32xf32>
    %584 = vector.extract_strided_slice %491 {offsets = [0, 160], sizes = [16, 32], strides = [1, 1]} : vector<16x256xf32> to vector<16x32xf32>
    %585 = vector.extract_strided_slice %491 {offsets = [0, 224], sizes = [16, 32], strides = [1, 1]} : vector<16x256xf32> to vector<16x32xf32>
    %c2_232 = arith.constant 2 : index
    %c1_233 = arith.constant 1 : index
    %c0_234 = arith.constant 0 : index
    %c0_235 = arith.constant 0 : index
    %586 = vector.load %arg7[%c2_232, %c1_233, %c0_234, %c0_235] : memref<3x2x6x32xbf16, #tpu.memory_space<vmem>>, vector<1x1x6x32xbf16>
    %587 = vector.shape_cast %586 : vector<1x1x6x32xbf16> to vector<6x32xbf16>
    %588 = arith.truncf %582 : vector<16x32xf32> to vector<16x32xbf16>
    %589 = arith.truncf %583 : vector<16x32xf32> to vector<16x32xbf16>
    "tpu.trace_start"() <{level = 10 : i32, message = "ie,je->ij"}> : () -> ()
    %cst_236 = arith.constant dense<0.000000e+00> : vector<16x16xf32>
    %590 = tpu.matmul %588, %589, %cst_236 {dimension_numbers = #tpu.dot_dimension_numbers<[1], [1], [0], [0], [0, 0, 1, 0], [], []>} : vector<16x32xbf16>, vector<16x32xbf16>, vector<16x16xf32> -> vector<16x16xf32>
    "tpu.trace_stop"() : () -> ()
    "tpu.trace_start"() <{level = 10 : i32, message = "ie,de->id"}> : () -> ()
    %cst_237 = arith.constant dense<0.000000e+00> : vector<16x6xf32>
    %591 = tpu.matmul %588, %587, %cst_237 {dimension_numbers = #tpu.dot_dimension_numbers<[1], [1], [0], [0], [0, 0, 1, 0], [], []>} : vector<16x32xbf16>, vector<6x32xbf16>, vector<16x6xf32> -> vector<16x6xf32>
    "tpu.trace_stop"() : () -> ()
    %592 = vector.extract_strided_slice %591 {offsets = [0, 0], sizes = [16, 1], strides = [1, 1]} : vector<16x6xf32> to vector<16x1xf32>
    %593 = vector.broadcast %592 : vector<16x1xf32> to vector<16x16xf32>
    %594 = arith.mulf %3, %593 : vector<16x16xf32>
    %595 = arith.addf %590, %594 : vector<16x16xf32>
    %596 = vector.extract_strided_slice %591 {offsets = [0, 1], sizes = [16, 1], strides = [1, 1]} : vector<16x6xf32> to vector<16x1xf32>
    %597 = vector.broadcast %596 : vector<16x1xf32> to vector<16x16xf32>
    %598 = arith.mulf %5, %597 : vector<16x16xf32>
    %599 = arith.addf %595, %598 : vector<16x16xf32>
    %600 = vector.extract_strided_slice %591 {offsets = [0, 2], sizes = [16, 1], strides = [1, 1]} : vector<16x6xf32> to vector<16x1xf32>
    %601 = vector.broadcast %600 : vector<16x1xf32> to vector<16x16xf32>
    %602 = arith.mulf %7, %601 : vector<16x16xf32>
    %603 = arith.addf %599, %602 : vector<16x16xf32>
    %604 = vector.extract_strided_slice %591 {offsets = [0, 3], sizes = [16, 1], strides = [1, 1]} : vector<16x6xf32> to vector<16x1xf32>
    %605 = vector.broadcast %604 : vector<16x1xf32> to vector<16x16xf32>
    %606 = arith.mulf %9, %605 : vector<16x16xf32>
    %607 = arith.addf %603, %606 : vector<16x16xf32>
    %608 = vector.extract_strided_slice %591 {offsets = [0, 4], sizes = [16, 1], strides = [1, 1]} : vector<16x6xf32> to vector<16x1xf32>
    %609 = vector.broadcast %608 : vector<16x1xf32> to vector<16x16xf32>
    %610 = arith.mulf %11, %609 : vector<16x16xf32>
    %611 = arith.addf %607, %610 : vector<16x16xf32>
    %612 = vector.extract_strided_slice %591 {offsets = [0, 5], sizes = [16, 1], strides = [1, 1]} : vector<16x6xf32> to vector<16x1xf32>
    %613 = vector.broadcast %612 : vector<16x1xf32> to vector<16x16xf32>
    %614 = arith.mulf %13, %613 : vector<16x16xf32>
    %615 = arith.addf %611, %614 : vector<16x16xf32>
    %616 = arith.addf %615, %1 : vector<16x16xf32>
    %cst_238 = arith.constant dense<0xFF800000> : vector<16xf32>
    %617 = vector.multi_reduction <maximumf>, %616, %cst_238 [1] : vector<16x16xf32> to vector<16xf32>
    %618 = vector.shape_cast %617 : vector<16xf32> to vector<16x1xf32>
    %619 = vector.broadcast %618 : vector<16x1xf32> to vector<16x16xf32>
    %620 = arith.subf %616, %619 : vector<16x16xf32>
    %621 = math.exp %620 : vector<16x16xf32>
    %622 = arith.mulf %621, %0 : vector<16x16xf32>
    %cst_239 = arith.constant dense<0.000000e+00> : vector<16xf32>
    %623 = vector.multi_reduction <add>, %622, %cst_239 [1] : vector<16x16xf32> to vector<16xf32>
    %624 = vector.shape_cast %623 : vector<16xf32> to vector<16x1xf32>
    %cst_240 = arith.constant 0.000000e+00 : f32
    %625 = vector.broadcast %cst_240 : f32 to vector<16x1xf32>
    %626 = arith.cmpf ogt, %624, %625 : vector<16x1xf32>
    %cst_241 = arith.constant 1.000000e+00 : f32
    %627 = vector.broadcast %cst_241 : f32 to vector<16x1xf32>
    %628 = arith.select %626, %624, %627 : vector<16x1xi1>, vector<16x1xf32>
    %629 = tpu.reciprocal %628 : vector<16x1xf32> -> vector<16x1xf32>
    %630 = vector.broadcast %629 : vector<16x1xf32> to vector<16x16xf32>
    %631 = arith.mulf %622, %630 : vector<16x16xf32>
    %632 = arith.truncf %631 : vector<16x16xf32> to vector<16x16xbf16>
    %633 = arith.truncf %584 : vector<16x32xf32> to vector<16x32xbf16>
    "tpu.trace_start"() <{level = 10 : i32, message = "ij,je->ie"}> : () -> ()
    %cst_242 = arith.constant dense<0.000000e+00> : vector<16x32xf32>
    %634 = tpu.matmul %632, %633, %cst_242 {dimension_numbers = #tpu.dot_dimension_numbers<[1], [0], [0], [1], [0, 0, 1, 1], [], []>} : vector<16x16xbf16>, vector<16x32xbf16>, vector<16x32xf32> -> vector<16x32xf32>
    "tpu.trace_stop"() : () -> ()
    %635 = arith.mulf %631, %3 : vector<16x16xf32>
    %cst_243 = arith.constant dense<0.000000e+00> : vector<16xf32>
    %636 = vector.multi_reduction <add>, %635, %cst_243 [1] : vector<16x16xf32> to vector<16xf32>
    %637 = vector.shape_cast %636 : vector<16xf32> to vector<16x1xf32>
    %638 = arith.mulf %631, %5 : vector<16x16xf32>
    %cst_244 = arith.constant dense<0.000000e+00> : vector<16xf32>
    %639 = vector.multi_reduction <add>, %638, %cst_244 [1] : vector<16x16xf32> to vector<16xf32>
    %640 = vector.shape_cast %639 : vector<16xf32> to vector<16x1xf32>
    %641 = arith.mulf %631, %7 : vector<16x16xf32>
    %cst_245 = arith.constant dense<0.000000e+00> : vector<16xf32>
    %642 = vector.multi_reduction <add>, %641, %cst_245 [1] : vector<16x16xf32> to vector<16xf32>
    %643 = vector.shape_cast %642 : vector<16xf32> to vector<16x1xf32>
    %644 = arith.mulf %631, %9 : vector<16x16xf32>
    %cst_246 = arith.constant dense<0.000000e+00> : vector<16xf32>
    %645 = vector.multi_reduction <add>, %644, %cst_246 [1] : vector<16x16xf32> to vector<16xf32>
    %646 = vector.shape_cast %645 : vector<16xf32> to vector<16x1xf32>
    %647 = arith.mulf %631, %11 : vector<16x16xf32>
    %cst_247 = arith.constant dense<0.000000e+00> : vector<16xf32>
    %648 = vector.multi_reduction <add>, %647, %cst_247 [1] : vector<16x16xf32> to vector<16xf32>
    %649 = vector.shape_cast %648 : vector<16xf32> to vector<16x1xf32>
    %650 = arith.mulf %631, %13 : vector<16x16xf32>
    %cst_248 = arith.constant dense<0.000000e+00> : vector<16xf32>
    %651 = vector.multi_reduction <add>, %650, %cst_248 [1] : vector<16x16xf32> to vector<16xf32>
    %652 = vector.shape_cast %651 : vector<16xf32> to vector<16x1xf32>
    %653 = tpu.concatenate %637, %640, %643, %646, %649, %652 in 1 : vector<16x1xf32>, vector<16x1xf32>, vector<16x1xf32>, vector<16x1xf32>, vector<16x1xf32>, vector<16x1xf32> -> vector<16x6xf32>
    %654 = arith.truncf %653 : vector<16x6xf32> to vector<16x6xbf16>
    "tpu.trace_start"() <{level = 10 : i32, message = "id,de->ie"}> : () -> ()
    %cst_249 = arith.constant dense<0.000000e+00> : vector<16x32xf32>
    %655 = tpu.matmul %654, %587, %cst_249 {dimension_numbers = #tpu.dot_dimension_numbers<[1], [0], [0], [1], [0, 0, 1, 1], [], []>} : vector<16x6xbf16>, vector<6x32xbf16>, vector<16x32xf32> -> vector<16x32xf32>
    "tpu.trace_stop"() : () -> ()
    %656 = arith.addf %634, %655 : vector<16x32xf32>
    %c2_250 = arith.constant 2 : index
    %c1_251 = arith.constant 1 : index
    %c0_252 = arith.constant 0 : index
    %c0_253 = arith.constant 0 : index
    %657 = vector.load %arg8[%c2_250, %c1_251, %c0_252, %c0_253] : memref<3x2x1x32xf32, #tpu.memory_space<vmem>>, vector<1x1x1x32xf32>
    %658 = vector.shape_cast %657 : vector<1x1x1x32xf32> to vector<1x32xf32>
    %659 = vector.broadcast %658 : vector<1x32xf32> to vector<16x32xf32>
    %660 = arith.mulf %656, %659 : vector<16x32xf32>
    %cst_254 = arith.constant dense<0.000000e+00> : vector<16xf32>
    %661 = vector.multi_reduction <add>, %660, %cst_254 [1] : vector<16x32xf32> to vector<16xf32>
    %662 = vector.shape_cast %661 : vector<16xf32> to vector<16x1xf32>
    %663 = arith.addf %581, %662 : vector<16x1xf32>
    %c2_255 = arith.constant 2 : index
    %c1_256 = arith.constant 1 : index
    %c0_257 = arith.constant 0 : index
    %c0_258 = arith.constant 0 : index
    %664 = vector.load %arg9[%c2_255, %c1_256, %c0_257, %c0_258] : memref<3x2x1x32xf32, #tpu.memory_space<vmem>>, vector<1x1x1x32xf32>
    %665 = vector.shape_cast %664 : vector<1x1x1x32xf32> to vector<1x32xf32>
    %666 = vector.broadcast %665 : vector<1x32xf32> to vector<16x32xf32>
    %667 = arith.mulf %585, %666 : vector<16x32xf32>
    %cst_259 = arith.constant dense<0.000000e+00> : vector<16xf32>
    %668 = vector.multi_reduction <add>, %667, %cst_259 [1] : vector<16x32xf32> to vector<16xf32>
    %669 = vector.shape_cast %668 : vector<16xf32> to vector<16x1xf32>
    %670 = arith.addf %663, %669 : vector<16x1xf32>
    %671 = arith.negf %670 : vector<16x1xf32>
    %672 = math.exp %671 : vector<16x1xf32>
    %cst_260 = arith.constant 1.000000e+00 : f32
    %673 = vector.broadcast %cst_260 : f32 to vector<16x1xf32>
    %674 = arith.addf %673, %672 : vector<16x1xf32>
    %675 = arith.divf %673, %674 : vector<16x1xf32>
    %c2_261 = arith.constant 2 : index
    %c0_262 = arith.constant 0 : index
    %c0_263 = arith.constant 0 : index
    %676 = vector.load %arg11[%c2_261, %c0_262, %c0_263] : memref<3x1x32xf32, #tpu.memory_space<vmem>>, vector<1x1x32xf32>
    %677 = vector.shape_cast %676 : vector<1x1x32xf32> to vector<1x32xf32>
    %678 = vector.broadcast %675 : vector<16x1xf32> to vector<16x32xf32>
    %679 = arith.mulf %678, %496 : vector<16x32xf32>
    %cst_264 = arith.constant 1.000000e+00 : f32
    %680 = vector.broadcast %cst_264 : f32 to vector<16x1xf32>
    %681 = arith.subf %680, %675 : vector<16x1xf32>
    %682 = vector.broadcast %681 : vector<16x1xf32> to vector<16x32xf32>
    %683 = arith.mulf %682, %567 : vector<16x32xf32>
    %684 = arith.addf %679, %683 : vector<16x32xf32>
    %685 = arith.truncf %684 : vector<16x32xf32> to vector<16x32xbf16>
    %c2_265 = arith.constant 2 : index
    %c0_266 = arith.constant 0 : index
    %c0_267 = arith.constant 0 : index
    %c0_268 = arith.constant 0 : index
    %686 = vector.load %arg10[%c2_265, %c0_266, %c0_267, %c0_268] : memref<3x2x32x32xbf16, #tpu.memory_space<vmem>>, vector<1x1x32x32xbf16>
    %687 = vector.shape_cast %686 : vector<1x1x32x32xbf16> to vector<32x32xbf16>
    %cst_269 = arith.constant dense<0.000000e+00> : vector<16x32xf32>
    %688 = tpu.matmul %685, %687, %cst_269 {dimension_numbers = #tpu.dot_dimension_numbers<[1], [0], [0], [1], [0, 0, 1, 1], [], []>} : vector<16x32xbf16>, vector<32x32xbf16>, vector<16x32xf32> -> vector<16x32xf32>
    %689 = vector.broadcast %677 : vector<1x32xf32> to vector<16x32xf32>
    %690 = arith.addf %689, %688 : vector<16x32xf32>
    %691 = vector.broadcast %675 : vector<16x1xf32> to vector<16x32xf32>
    %692 = arith.mulf %691, %585 : vector<16x32xf32>
    %cst_270 = arith.constant 1.000000e+00 : f32
    %693 = vector.broadcast %cst_270 : f32 to vector<16x1xf32>
    %694 = arith.subf %693, %675 : vector<16x1xf32>
    %695 = vector.broadcast %694 : vector<16x1xf32> to vector<16x32xf32>
    %696 = arith.mulf %695, %656 : vector<16x32xf32>
    %697 = arith.addf %692, %696 : vector<16x32xf32>
    %698 = arith.truncf %697 : vector<16x32xf32> to vector<16x32xbf16>
    %c2_271 = arith.constant 2 : index
    %c1_272 = arith.constant 1 : index
    %c0_273 = arith.constant 0 : index
    %c0_274 = arith.constant 0 : index
    %699 = vector.load %arg10[%c2_271, %c1_272, %c0_273, %c0_274] : memref<3x2x32x32xbf16, #tpu.memory_space<vmem>>, vector<1x1x32x32xbf16>
    %700 = vector.shape_cast %699 : vector<1x1x32x32xbf16> to vector<32x32xbf16>
    %cst_275 = arith.constant dense<0.000000e+00> : vector<16x32xf32>
    %701 = tpu.matmul %698, %700, %cst_275 {dimension_numbers = #tpu.dot_dimension_numbers<[1], [0], [0], [1], [0, 0, 1, 1], [], []>} : vector<16x32xbf16>, vector<32x32xbf16>, vector<16x32xf32> -> vector<16x32xf32>
    %702 = arith.addf %690, %701 : vector<16x32xf32>
    %cst_276 = arith.constant 0.00999999977 : f32
    %703 = vector.broadcast %cst_276 : f32 to vector<16x32xf32>
    %704 = arith.mulf %703, %702 : vector<16x32xf32>
    %705 = arith.maximumf %702, %704 : vector<16x32xf32>
    %c2_277 = arith.constant 2 : index
    %c0_278 = arith.constant 0 : index
    %c0_279 = arith.constant 0 : index
    %706 = vector.load %arg12[%c2_277, %c0_278, %c0_279] : memref<3x1x32xf32, #tpu.memory_space<vmem>>, vector<1x1x32xf32>
    %707 = vector.shape_cast %706 : vector<1x1x32xf32> to vector<1x32xf32>
    %708 = vector.broadcast %707 : vector<1x32xf32> to vector<16x32xf32>
    %709 = arith.mulf %705, %708 : vector<16x32xf32>
    %c2_280 = arith.constant 2 : index
    %c0_281 = arith.constant 0 : index
    %c0_282 = arith.constant 0 : index
    %710 = vector.load %arg13[%c2_280, %c0_281, %c0_282] : memref<3x1x32xf32, #tpu.memory_space<vmem>>, vector<1x1x32xf32>
    %711 = vector.shape_cast %710 : vector<1x1x32xf32> to vector<1x32xf32>
    %712 = vector.broadcast %711 : vector<1x32xf32> to vector<16x32xf32>
    %713 = arith.addf %709, %712 : vector<16x32xf32>
    %714 = vector.shape_cast %713 : vector<16x32xf32> to vector<2x8x32xf32>
    %cst_283 = arith.constant dense<0xFF800000> : vector<2x32xf32>
    %715 = vector.multi_reduction <maximumf>, %714, %cst_283 [1] : vector<2x8x32xf32> to vector<2x32xf32>
    %cst_284 = arith.constant dense<0.000000e+00> : vector<2x32xf32>
    %716 = vector.multi_reduction <add>, %714, %cst_284 [1] : vector<2x8x32xf32> to vector<2x32xf32>
    %cst_285 = arith.constant 1.250000e-01 : f32
    %717 = vector.broadcast %cst_285 : f32 to vector<2x32xf32>
    %718 = arith.mulf %716, %717 : vector<2x32xf32>
    %719 = arith.addf %482, %715 : vector<2x32xf32>
    %720 = arith.addf %483, %718 : vector<2x32xf32>
    %cst_286 = arith.constant 0.000000e+00 : f32
    %721 = vector.broadcast %cst_286 : f32 to vector<2x64xf32>
    %722 = tpu.concatenate %719, %720, %721 in 1 : vector<2x32xf32>, vector<2x32xf32>, vector<2x64xf32> -> vector<2x128xf32>
    %cst_287 = arith.constant 0.000000e+00 : f32
    %723 = vector.broadcast %cst_287 : f32 to vector<6x128xf32>
    %724 = tpu.concatenate %722, %723 in 0 : vector<2x128xf32>, vector<6x128xf32> -> vector<8x128xf32>
    %c0_288 = arith.constant 0 : index
    %c0_289 = arith.constant 0 : index
    %725 = vector.load %arg14[%c0_288, %c0_289] : memref<8x128xf32, #tpu.memory_space<vmem>>, vector<8x128xf32>
    tpu.vector_store %arg14[%c0_288, %c0_289], %724 {strides = array<i32>} : memref<8x128xf32, #tpu.memory_space<vmem>>, vector<8x128xf32>,
    return
  }
}

</mosaic_0001>

<llo_original>
// kernel: tpu_custom_call.1
$region0: #{tpu_custom_call.1}
  #allocation0 [shape = 'u32[]', space=smem, size = 0x4, offset = 0x4, fixed_abs, tag = 'smem constant byte address 0x4 - core index']
  #allocation1 [shape = 'u32[144,128]{1,0:T(1,128)}', space=vmem, size = 0x12000, scoped, tag = 'internal scratch']
  %s0 = inlined_call_operand.vmem [shape: f32[16,32], index: 0, kind: input, shape index: {}]
  %s1 = inlined_call_operand.vmem [shape: f32[16,16], index: 1, kind: input, shape index: {}]
  %s2 = inlined_call_operand.hbm [shape: f32[16,16], index: 2, kind: input, shape index: {}]
  %s3 = inlined_call_operand.hbm [shape: f32[6,16,16], index: 3, kind: input, shape index: {}]
  %s4 = inlined_call_operand.hbm [shape: f32[2,16], index: 4, kind: input, shape index: {}]
  %s5 = inlined_call_operand.hbm [shape: bf16[3,32,256], index: 5, kind: input, shape index: {}]
  %s6 = inlined_call_operand.vmem [shape: f32[3,1,256], index: 6, kind: input, shape index: {}]
  %s7 = inlined_call_operand.vmem [shape: bf16[3,2,6,32], index: 7, kind: input, shape index: {}]
  %s8 = inlined_call_operand.vmem [shape: f32[3,2,1,32], index: 8, kind: input, shape index: {}]
  %s9 = inlined_call_operand.vmem [shape: f32[3,2,1,32], index: 9, kind: input, shape index: {}]
  %s10 = inlined_call_operand.hbm [shape: bf16[3,2,32,32], index: 10, kind: input, shape index: {}]
  %s11 = inlined_call_operand.vmem [shape: f32[3,1,32], index: 11, kind: input, shape index: {}]
  %s12 = inlined_call_operand.vmem [shape: f32[3,1,32], index: 12, kind: input, shape index: {}]
  %s13 = inlined_call_operand.vmem [shape: f32[3,1,32], index: 13, kind: input, shape index: {}]
  %s14 = inlined_call_operand.hbm [shape: f32[8,128], index: 14, kind: output, shape index: {}]
  %s15 = sld [smem:[#allocation0]]
  $region86: #{tpu_custom_call.1} parent=0
    _
  %s17 = ssub.s32 1, %s15
  %s18 = scalar_select 0, %s17, %s15
  $region1: #{tpu_custom_call.1} parent=0
    #allocation2 [shape = 'u8[8192]{0}', space=vmem, size = 0x2000, scoped, tag = 'input window, operand 2, single buffered']
    #allocation3 [shape = 's32[1]{0}', space=sflag, size = 0x4, scoped, tag = 'scoped memory for tpu_custom_call.1']
    #allocation4 [shape = 's32[1]{0}', space=sflag, size = 0x4, scoped, tag = 'scoped memory for tpu_custom_call.1']
    #allocation5 [shape = 'u8[49152]{0}', space=vmem, size = 0xc000, scoped, tag = 'input window, operand 3, single buffered']
    #allocation6 [shape = 's32[1]{0}', space=sflag, size = 0x4, scoped, tag = 'scoped memory for tpu_custom_call.1']
    #allocation7 [shape = 'u8[1024]{0}', space=vmem, size = 0x400, scoped, tag = 'input window, operand 4, single buffered']
    #allocation8 [shape = 'u8[49152]{0}', space=vmem, size = 0xc000, scoped, tag = 'input window, operand 5, single buffered']
    #allocation9 [shape = 's32[1]{0}', space=sflag, size = 0x4, scoped, tag = 'scoped memory for tpu_custom_call.1']
    #allocation10 [shape = 'u8[49152]{0}', space=vmem, size = 0xc000, scoped, tag = 'input window, operand 10, single buffered']
    #allocation11 [shape = 'u8[4096]{0}', space=vmem, size = 0x1000, scoped, tag = 'output window, operand 0, single buffered']
    %19 = vsyncpa [#allocation3], 0
    %20 = vsyncpa [#allocation6], 0
    %21 = vsyncpa [#allocation9], 0
    %22 = vsyncpa [#allocation4], 0
    // Predicated region
    $region2: #{tpu_custom_call.1} parent=1 // pred_check
      _
    $region3: #{tpu_custom_call.1} parent=1 // pred_check_branch
      %24 = sbr.rel (0) target = $region5
    $region4: #{tpu_custom_call.1} parent=1 // pred_region
      _
    $region5: #{tpu_custom_call.1} parent=1 // pred_fallthru
      _
    // Predicated region
    $region6: #{tpu_custom_call.1} parent=1 // pred_check
      _
    $region7: #{tpu_custom_call.1} parent=1 // pred_check_branch
      %26 = sbr.rel (0) target = $region9
    $region8: #{tpu_custom_call.1} parent=1 // pred_region
      _
    $region9: #{tpu_custom_call.1} parent=1 // pred_fallthru
      _
    // Predicated region
    $region10: #{tpu_custom_call.1} parent=1 // pred_check
      _
    $region11: #{tpu_custom_call.1} parent=1 // pred_check_branch
      %28 = sbr.rel (0) target = $region13
    $region12: #{tpu_custom_call.1} parent=1 // pred_region
      %s30 = ssub.s32 256, 256
      %31 = vsyncadd [#allocation3], %s30
      %s32 = sshll.u32 [#allocation2], 4
      %s33 = int_to_ptr.vmem [resolvable:$true] %s32
      %38 = dma.hbm_to_vmem [thread:$0]  %s2, 256, %s33, [#allocation3], 128, 128, 8
    $region13: #{tpu_custom_call.1} parent=1 // pred_fallthru
      _
    // Predicated region
    $region14: #{tpu_custom_call.1} parent=1 // pred_check
      _
    $region15: #{tpu_custom_call.1} parent=1 // pred_check_branch
      %40 = sbr.rel (0) target = $region17
    $region16: #{tpu_custom_call.1} parent=1 // pred_region
      %s42 = ssub.s32 1536, 1536
      %43 = vsyncadd [#allocation6], %s42
      %s44 = sshll.u32 [#allocation5], 4
      %s45 = int_to_ptr.vmem [resolvable:$true] %s44
      %50 = dma.hbm_to_vmem [thread:$0]  %s3, 1536, %s45, [#allocation6], 128, 128, 8
    $region17: #{tpu_custom_call.1} parent=1 // pred_fallthru
      _
    // Predicated region
    $region18: #{tpu_custom_call.1} parent=1 // pred_check
      _
    $region19: #{tpu_custom_call.1} parent=1 // pred_check_branch
      %52 = sbr.rel (0) target = $region21
    $region20: #{tpu_custom_call.1} parent=1 // pred_region
      %s54 = ssub.s32 32, 32
      %55 = vsyncadd [#allocation6], %s54
      %s57 = sshll.u32 [#allocation7], 4
      %s58 = int_to_ptr.vmem [resolvable:$true] %s57
      %60 = dma.hbm_to_vmem [thread:$0]  %s4, 32, %s58, [#allocation6]
    $region21: #{tpu_custom_call.1} parent=1 // pred_fallthru
      _
    // Predicated region
    $region22: #{tpu_custom_call.1} parent=1 // pred_check
      _
    $region23: #{tpu_custom_call.1} parent=1 // pred_check_branch
      %62 = sbr.rel (0) target = $region25
    $region24: #{tpu_custom_call.1} parent=1 // pred_region
      %s64 = ssub.s32 1536, 1536
      %65 = vsyncadd [#allocation9], %s64
      %s66 = sshll.u32 [#allocation8], 4
      %s67 = int_to_ptr.vmem [resolvable:$true] %s66
      %72 = dma.hbm_to_vmem [thread:$0]  %s5, 1536, %s67, [#allocation9], 128, 128, 8
    $region25: #{tpu_custom_call.1} parent=1 // pred_fallthru
      _
    // Predicated region
    $region26: #{tpu_custom_call.1} parent=1 // pred_check
      _
    $region27: #{tpu_custom_call.1} parent=1 // pred_check_branch
      %74 = sbr.rel (0) target = $region29
    $region28: #{tpu_custom_call.1} parent=1 // pred_region
      _
    $region29: #{tpu_custom_call.1} parent=1 // pred_fallthru
      _
    // Predicated region
    $region30: #{tpu_custom_call.1} parent=1 // pred_check
      _
    $region31: #{tpu_custom_call.1} parent=1 // pred_check_branch
      %76 = sbr.rel (0) target = $region33
    $region32: #{tpu_custom_call.1} parent=1 // pred_region
      _
    $region33: #{tpu_custom_call.1} parent=1 // pred_fallthru
      _
    // Predicated region
    $region34: #{tpu_custom_call.1} parent=1 // pred_check
      _
    $region35: #{tpu_custom_call.1} parent=1 // pred_check_branch
      %78 = sbr.rel (0) target = $region37
    $region36: #{tpu_custom_call.1} parent=1 // pred_region
      _
    $region37: #{tpu_custom_call.1} parent=1 // pred_fallthru
      _
    // Predicated region
    $region38: #{tpu_custom_call.1} parent=1 // pred_check
      _
    $region39: #{tpu_custom_call.1} parent=1 // pred_check_branch
      %80 = sbr.rel (0) target = $region41
    $region40: #{tpu_custom_call.1} parent=1 // pred_region
      _
    $region41: #{tpu_custom_call.1} parent=1 // pred_fallthru
      _
    // Predicated region
    $region42: #{tpu_custom_call.1} parent=1 // pred_check
      _
    $region43: #{tpu_custom_call.1} parent=1 // pred_check_branch
      %82 = sbr.rel (0) target = $region45
    $region44: #{tpu_custom_call.1} parent=1 // pred_region
      %s84 = ssub.s32 1536, 1536
      %85 = vsyncadd [#allocation9], %s84
      %s86 = sshll.u32 [#allocation10], 4
      %s87 = int_to_ptr.vmem [resolvable:$true] %s86
      %92 = dma.hbm_to_vmem [thread:$0]  %s10, 1536, %s87, [#allocation9], 64, 64, 4
    $region45: #{tpu_custom_call.1} parent=1 // pred_fallthru
      _
    // Predicated region
    $region46: #{tpu_custom_call.1} parent=1 // pred_check
      _
    $region47: #{tpu_custom_call.1} parent=1 // pred_check_branch
      %94 = sbr.rel (0) target = $region49
    $region48: #{tpu_custom_call.1} parent=1 // pred_region
      _
    $region49: #{tpu_custom_call.1} parent=1 // pred_fallthru
      _
    // Predicated region
    $region50: #{tpu_custom_call.1} parent=1 // pred_check
      _
    $region51: #{tpu_custom_call.1} parent=1 // pred_check_branch
      %96 = sbr.rel (0) target = $region53
    $region52: #{tpu_custom_call.1} parent=1 // pred_region
      _
    $region53: #{tpu_custom_call.1} parent=1 // pred_fallthru
      _
    // Predicated region
    $region54: #{tpu_custom_call.1} parent=1 // pred_check
      _
    $region55: #{tpu_custom_call.1} parent=1 // pred_check_branch
      %98 = sbr.rel (0) target = $region57
    $region56: #{tpu_custom_call.1} parent=1 // pred_region
      _
    $region57: #{tpu_custom_call.1} parent=1 // pred_fallthru
      _
    // Predicated region
    $region58: #{tpu_custom_call.1} parent=1 // pred_check
      _
    $region59: #{tpu_custom_call.1} parent=1 // pred_check_branch
      %100 = sbr.rel (0) target = $region61
    $region60: #{tpu_custom_call.1} parent=1 // pred_region
      %101 = dma.done [#allocation3], 256
    $region61: #{tpu_custom_call.1} parent=1 // pred_fallthru
      _
    // Predicated region
    $region62: #{tpu_custom_call.1} parent=1 // pred_check
      _
    $region63: #{tpu_custom_call.1} parent=1 // pred_check_branch
      %103 = sbr.rel (0) target = $region65
    $region64: #{tpu_custom_call.1} parent=1 // pred_region
      %104 = dma.done [#allocation6], 1536
    $region65: #{tpu_custom_call.1} parent=1 // pred_fallthru
      _
    // Predicated region
    $region66: #{tpu_custom_call.1} parent=1 // pred_check
      _
    $region67: #{tpu_custom_call.1} parent=1 // pred_check_branch
      %106 = sbr.rel (0) target = $region69
    $region68: #{tpu_custom_call.1} parent=1 // pred_region
      %107 = dma.done [#allocation6], 32
    $region69: #{tpu_custom_call.1} parent=1 // pred_fallthru
      _
    // Predicated region
    $region70: #{tpu_custom_call.1} parent=1 // pred_check
      _
    $region71: #{tpu_custom_call.1} parent=1 // pred_check_branch
      %109 = sbr.rel (0) target = $region73
    $region72: #{tpu_custom_call.1} parent=1 // pred_region
      %110 = dma.done [#allocation9], 1536
    $region73: #{tpu_custom_call.1} parent=1 // pred_fallthru
      _
    // Predicated region
    $region74: #{tpu_custom_call.1} parent=1 // pred_check
      _
    $region75: #{tpu_custom_call.1} parent=1 // pred_check_branch
      %112 = sbr.rel (0) target = $region77
    $region76: #{tpu_custom_call.1} parent=1 // pred_region
      %113 = dma.done [#allocation9], 1536
    $region77: #{tpu_custom_call.1} parent=1 // pred_fallthru
      _
    %v115 = vld [vmem:[%s1] sm:$0xff]
    %v116 = vld [vmem:[%s1 + $0x8] sm:$0xff]
    %v117 = vld [vmem:[#allocation2] sm:$0xff]
    %v118 = vld [vmem:[#allocation2 + $0x8] sm:$0xff]
    %v119 = vld [vmem:[#allocation5] sm:$0xff]
    %v120 = vld [vmem:[#allocation5 + $0x8] sm:$0xff]
    %s121 = scalar_lea.vmem [#allocation5], 16
    %v122 = vld [vmem:[%s121] sm:$0xff]
    %v123 = vld [vmem:[%s121 + $0x8] sm:$0xff]
    %s124 = scalar_lea.vmem [#allocation5], 32
    %v125 = vld [vmem:[%s124] sm:$0xff]
    %v126 = vld [vmem:[%s124 + $0x8] sm:$0xff]
    %s127 = scalar_lea.vmem [#allocation5], 48
    %v128 = vld [vmem:[%s127] sm:$0xff]
    %v129 = vld [vmem:[%s127 + $0x8] sm:$0xff]
    %s130 = scalar_lea.vmem [#allocation5], 64
    %v131 = vld [vmem:[%s130] sm:$0xff]
    %v132 = vld [vmem:[%s130 + $0x8] sm:$0xff]
    %s133 = scalar_lea.vmem [#allocation5], 80
    %v134 = vld [vmem:[%s133] sm:$0xff]
    %v135 = vld [vmem:[%s133 + $0x8] sm:$0xff]
    %v136 = vld [vmem:[%s0] sm:$0xff]
    %v137 = vld [vmem:[%s0 + $0x8] sm:$0xff]
    %v138 = vpack.c.bf16 %v137, %v136
    %v139 = vld [vmem:[#allocation8] sm:$0xff]
    %v140 = vld [vmem:[#allocation8 + $0x8] sm:$0xff]
    %v141 = vld [vmem:[#allocation8 + $0x10] sm:$0xff]
    %v142 = vld [vmem:[#allocation8 + $0x18] sm:$0xff]
    %v143 = vld [vmem:[%s6] sm:$0x3]
    %v145 = vlaneseq
    %v146 = vshrl.u32 %v145, 7
    %v147 = vsub.s32 0, %v146
    %v148 = vrot.slane %v143, %v147
    %v149 = vlaneseq
    %v150 = vshrl.u32 %v149, 7
    %v151 = vsub.s32 1, %v150
    %v152 = vrot.slane %v143, %v151
    %v159 = vunpack.c.l.b16 %v139
    %v160 = vunpack.c.h.b16 %v139
    %v161 = vunpack.c.l.b16 %v140
    %v162 = vunpack.c.h.b16 %v140
    %v163 = vunpack.c.l.b16 %v141
    %v164 = vunpack.c.h.b16 %v141
    %v165 = vunpack.c.l.b16 %v142
    %v166 = vunpack.c.h.b16 %v142
    %v167 = vpack.c.b16 %v161, %v159
    %v168 = vpack.c.b16 %v162, %v160
    %v169 = vpack.c.b16 %v165, %v163
    %v170 = vpack.c.b16 %v166, %v164
    %vm175 = vcmask 261120
    %v177 = vsel %vm175, %v138, 0
    %179 = vmatprep.subr.bf16.mxu0 0
    %180 = vmatpush1.bf16.msra.mxu0 0
    %181 = vmatprep.subr.bf16.mxu0 0
    %182 = vmatpush1.bf16.msra.mxu0 0
    %183 = vmatprep.subr.bf16.mxu0 0
    %184 = vmatpush1.bf16.msra.mxu0 0
    %185 = vmatprep.subr.bf16.mxu0 0
    %186 = vmatpush1.bf16.msra.mxu0 0
    %187 = vmatprep.subr.bf16.mxu0 0
    %188 = vmatpush1.bf16.msra.mxu0 0
    %189 = vmatprep.subr.bf16.mxu0 0
    %190 = vmatpush1.bf16.msra.mxu0 0
    %191 = vmatprep.subr.bf16.mxu0 %v170
    %192 = vmatpush1.bf16.msra.mxu0 %v169
    %193 = vmatprep.subr.bf16.mxu0 %v168
    %194 = vmatpush1.bf16.msra.mxu0 %v167
    %195 = vmatprep.subr.bf16.mxu0 0
    %196 = vmatpush2.bf16.msra.mxu0 0
    %197 = vmatprep.subr.bf16.mxu0 0
    %198 = vmatpush2.bf16.msra.mxu0 0
    %199 = vmatprep.subr.bf16.mxu0 0
    %200 = vmatpush2.bf16.msra.mxu0 0
    %201 = vmatprep.subr.bf16.mxu0 0
    %202 = vmatpush2.bf16.msra.mxu0 0
    %203 = vmatprep.subr.bf16.mxu0 0
    %204 = vmatpush2.bf16.msra.mxu0 0
    %205 = vmatprep.subr.bf16.mxu0 0
    %206 = vmatpush2.bf16.msra.mxu0 0
    %207 = vmatprep.subr.bf16.mxu0 0
    %208 = vmatpush2.bf16.msra.mxu0 0
    %209 = vmatprep.subr.bf16.mxu0 0
    %210 = vmatpush2.bf16.msra.mxu0 0
    %211 = vmatprep.mubr.bf16.mxu0 0
    %212 = vmatmul.mubr.bf16.gmra.mxu0 %v177
    %v213 = vpop.f32.mrf.mxu0
    %v214 = vadd.f32 %v148, %v213
    %v215 = vpop.f32.mrf.mxu0
    %v216 = vadd.f32 %v152, %v215
    %v217 = vpop.f32.mrf.mxu0
    %v218 = vadd.f32 %v148, %v217
    %v219 = vpop.f32.mrf.mxu0
    %v220 = vadd.f32 %v152, %v219
    %221 = vdwg.mxu0
    %v222 = vld [vmem:[%s7] sm:$0x7]
    %v223 = vpack.c.bf16 %v218, %v214
    %v225 = vsel %vm175, %v223, 0
    %v228 = vsel %vm175, %v222, 0
    %230 = vmatprep.subr.bf16.mxu0 0
    %231 = vmatpush1.bf16.xpose.msra.mxu0 0
    %232 = vmatprep.subr.bf16.mxu0 0
    %233 = vmatpush1.bf16.xpose.msra.mxu0 0
    %234 = vmatprep.subr.bf16.mxu0 0
    %235 = vmatpush1.bf16.xpose.msra.mxu0 0
    %236 = vmatprep.subr.bf16.mxu0 0
    %237 = vmatpush1.bf16.xpose.msra.mxu0 0
    %238 = vmatprep.subr.bf16.mxu0 0
    %239 = vmatpush1.bf16.xpose.msra.mxu0 0
    %240 = vmatprep.subr.bf16.mxu0 0
    %241 = vmatpush1.bf16.xpose.msra.mxu0 0
    %242 = vmatprep.subr.bf16.mxu0 0
    %243 = vmatpush1.bf16.xpose.msra.mxu0 0
    %244 = vmatprep.subr.bf16.mxu0 0
    %245 = vmatpush1.bf16.xpose.msra.mxu0 %v228
    %246 = vmatprep.subr.bf16.mxu0 0
    %247 = vmatpush2.bf16.xpose.msra.mxu0 0
    %248 = vmatprep.subr.bf16.mxu0 0
    %249 = vmatpush2.bf16.xpose.msra.mxu0 0
    %250 = vmatprep.subr.bf16.mxu0 0
    %251 = vmatpush2.bf16.xpose.msra.mxu0 0
    %252 = vmatprep.subr.bf16.mxu0 0
    %253 = vmatpush2.bf16.xpose.msra.mxu0 0
    %254 = vmatprep.subr.bf16.mxu0 0
    %255 = vmatpush2.bf16.xpose.msra.mxu0 0
    %256 = vmatprep.subr.bf16.mxu0 0
    %257 = vmatpush2.bf16.xpose.msra.mxu0 0
    %258 = vmatprep.subr.bf16.mxu0 0
    %259 = vmatpush2.bf16.xpose.msra.mxu0 0
    %260 = vmatprep.subr.bf16.mxu0 0
    %261 = vmatpush2.bf16.xpose.msra.mxu0 0
    %262 = vmatprep.mubr.bf16.mxu0 0
    %263 = vmatmul.mubr.bf16.gmra.mxu0 %v225
    %v264 = vpop.f32.mrf.mxu0
    %v265 = vadd.f32 0.0, %v264
    %v266 = vpop.f32.mrf.mxu0
    %v267 = vpop.f32.mrf.mxu0
    %v268 = vadd.f32 0.0, %v267
    %v269 = vpop.f32.mrf.mxu0
    %270 = vdwg.mxu0
    %272 = vset.pattern.permute.xlu0 0
    %273 = vperm.xlu0 %272, %v265
    %v274 = vpop.permute.xlu0 %273
    %277 = vset.pattern.permute.xlu0 0
    %278 = vperm.xlu0 %277, %v268
    %v279 = vpop.permute.xlu0 %278
    %v281 = vmul.f32 %v119, %v274
    %v282 = vmul.f32 %v120, %v279
    %284 = vrot.lane.b32.xlu0 %v223, 64
    %v285 = vpop.permute.xlu0 %284
    %v287 = vsel %vm175, %v285, 0
    %289 = vmatprep.subr.bf16.mxu0 0
    %290 = vmatpush1.bf16.xpose.msra.mxu0 0
    %291 = vmatprep.subr.bf16.mxu0 0
    %292 = vmatpush1.bf16.xpose.msra.mxu0 0
    %293 = vmatprep.subr.bf16.mxu0 0
    %294 = vmatpush1.bf16.xpose.msra.mxu0 0
    %295 = vmatprep.subr.bf16.mxu0 0
    %296 = vmatpush1.bf16.xpose.msra.mxu0 0
    %297 = vmatprep.subr.bf16.mxu0 0
    %298 = vmatpush1.bf16.xpose.msra.mxu0 0
    %299 = vmatprep.subr.bf16.mxu0 0
    %300 = vmatpush1.bf16.xpose.msra.mxu0 0
    %301 = vmatprep.subr.bf16.mxu0 0
    %302 = vmatpush1.bf16.xpose.msra.mxu0 0
    %303 = vmatprep.subr.bf16.mxu0 0
    %304 = vmatpush1.bf16.xpose.msra.mxu0 %v287
    %305 = vmatprep.subr.bf16.mxu0 0
    %306 = vmatpush2.bf16.xpose.msra.mxu0 0
    %307 = vmatprep.subr.bf16.mxu0 0
    %308 = vmatpush2.bf16.xpose.msra.mxu0 0
    %309 = vmatprep.subr.bf16.mxu0 0
    %310 = vmatpush2.bf16.xpose.msra.mxu0 0
    %311 = vmatprep.subr.bf16.mxu0 0
    %312 = vmatpush2.bf16.xpose.msra.mxu0 0
    %313 = vmatprep.subr.bf16.mxu0 0
    %314 = vmatpush2.bf16.xpose.msra.mxu0 0
    %315 = vmatprep.subr.bf16.mxu0 0
    %316 = vmatpush2.bf16.xpose.msra.mxu0 0
    %317 = vmatprep.subr.bf16.mxu0 0
    %318 = vmatpush2.bf16.xpose.msra.mxu0 0
    %319 = vmatprep.subr.bf16.mxu0 0
    %320 = vmatpush2.bf16.xpose.msra.mxu0 0
    %321 = vmatprep.mubr.bf16.mxu0 0
    %322 = vmatmul.mubr.bf16.gmra.mxu0 %v225
    %v323 = vpop.f32.mrf.mxu0
    %v324 = vadd.f32 %v281, %v323
    %v325 = vpop.f32.mrf.mxu0
    %v326 = vpop.f32.mrf.mxu0
    %v327 = vadd.f32 %v282, %v326
    %v328 = vpop.f32.mrf.mxu0
    %329 = vdwg.mxu0
    %330 = vset.pattern.permute.xlu0 1
    %331 = vperm.xlu0 %330, %v265
    %v332 = vpop.permute.xlu0 %331
    %334 = vset.pattern.permute.xlu0 1
    %335 = vperm.xlu0 %334, %v268
    %v336 = vpop.permute.xlu0 %335
    %v338 = vmul.f32 %v122, %v332
    %v339 = vmul.f32 %v123, %v336
    %v340 = vadd.f32 %v324, %v338
    %v341 = vadd.f32 %v327, %v339
    %342 = vset.pattern.permute.xlu0 2
    %343 = vperm.xlu0 %342, %v265
    %v344 = vpop.permute.xlu0 %343
    %346 = vset.pattern.permute.xlu0 2
    %347 = vperm.xlu0 %346, %v268
    %v348 = vpop.permute.xlu0 %347
    %v350 = vmul.f32 %v125, %v344
    %v351 = vmul.f32 %v126, %v348
    %v352 = vadd.f32 %v340, %v350
    %v353 = vadd.f32 %v341, %v351
    %354 = vset.pattern.permute.xlu0 3
    %355 = vperm.xlu0 %354, %v265
    %v356 = vpop.permute.xlu0 %355
    %358 = vset.pattern.permute.xlu0 3
    %359 = vperm.xlu0 %358, %v268
    %v360 = vpop.permute.xlu0 %359
    %v362 = vmul.f32 %v128, %v356
    %v363 = vmul.f32 %v129, %v360
    %v364 = vadd.f32 %v352, %v362
    %v365 = vadd.f32 %v353, %v363
    %366 = vset.pattern.permute.xlu0 4
    %367 = vperm.xlu0 %366, %v265
    %v368 = vpop.permute.xlu0 %367
    %370 = vset.pattern.permute.xlu0 4
    %371 = vperm.xlu0 %370, %v268
    %v372 = vpop.permute.xlu0 %371
    %v374 = vmul.f32 %v131, %v368
    %v375 = vmul.f32 %v132, %v372
    %v376 = vadd.f32 %v364, %v374
    %v377 = vadd.f32 %v365, %v375
    %378 = vset.pattern.permute.xlu0 5
    %379 = vperm.xlu0 %378, %v265
    %v380 = vpop.permute.xlu0 %379
    %382 = vset.pattern.permute.xlu0 5
    %383 = vperm.xlu0 %382, %v268
    %v384 = vpop.permute.xlu0 %383
    %v386 = vmul.f32 %v134, %v380
    %v387 = vmul.f32 %v135, %v384
    %v388 = vadd.f32 %v376, %v386
    %v389 = vadd.f32 %v377, %v387
    %v390 = vadd.f32 %v388, %v117
    %v391 = vadd.f32 %v389, %v118
    %vm392 = vcmask 130048
    %v393 = vsel %vm392, %v390, -inf
    %394 = vmax.xlane.f32.xlu0 %v393
    %v395 = vpop.xlane.xlu0 %394
    %v396 = vsel %vm392, %v391, -inf
    %397 = vmax.xlane.f32.xlu0 %v396
    %v398 = vpop.xlane.xlu0 %397
    %v399 = vsub.f32 %v390, %v395
    %v400 = vsub.f32 %v391, %v398
    %v401 = vmul.f32 %v399, 1.442695
    %v402 = vpow.pop %v401
    %v403 = vmul.f32 %v400, 1.442695
    %v404 = vpow.pop %v403
    %v405 = vmul.f32 %v402, %v115
    %v406 = vmul.f32 %v404, %v116
    %v407 = vsel %vm392, %v405, 0.0
    %408 = vadd.xlane.f32.xlu0 %v407
    %v409 = vpop.xlane.xlu0 %408
    %v410 = vsel %vm392, %v406, 0.0
    %411 = vadd.xlane.f32.xlu0 %v410
    %v412 = vpop.xlane.xlu0 %411
    %vm413 = vcmp.gt.f32.partialorder %v409, 0.0
    %vm414 = vcmp.gt.f32.partialorder %v412, 0.0
    %v415 = vsel %vm413, %v409, 1.0
    %v416 = vsel %vm414, %v412, 1.0
    %v417 = vrcp.pop %v415
    %v418 = vrcp.pop %v416
    %v419 = vmul.f32 %v405, %v417
    %v420 = vmul.f32 %v406, %v418
    %v421 = vpack.c.bf16 %v420, %v419
    %v422 = vpack.c.bf16 %v220, %v216
    %v423 = vmul.f32 %v419, %v119
    %v424 = vmul.f32 %v420, %v120
    %v425 = vsel %vm392, %v423, 0.0
    %426 = vadd.xlane.f32.xlu0 %v425
    %v427 = vpop.xlane.xlu0 %426
    %v428 = vsel %vm392, %v424, 0.0
    %429 = vadd.xlane.f32.xlu0 %v428
    %v430 = vpop.xlane.xlu0 %429
    %v431 = vmul.f32 %v419, %v122
    %v432 = vmul.f32 %v420, %v123
    %v433 = vsel %vm392, %v431, 0.0
    %434 = vadd.xlane.f32.xlu0 %v433
    %v435 = vpop.xlane.xlu0 %434
    %v436 = vsel %vm392, %v432, 0.0
    %437 = vadd.xlane.f32.xlu0 %v436
    %v438 = vpop.xlane.xlu0 %437
    %v439 = vmul.f32 %v419, %v125
    %v440 = vmul.f32 %v420, %v126
    %v441 = vsel %vm392, %v439, 0.0
    %442 = vadd.xlane.f32.xlu0 %v441
    %v443 = vpop.xlane.xlu0 %442
    %v444 = vsel %vm392, %v440, 0.0
    %445 = vadd.xlane.f32.xlu0 %v444
    %v446 = vpop.xlane.xlu0 %445
    %v447 = vmul.f32 %v419, %v128
    %v448 = vmul.f32 %v420, %v129
    %v449 = vsel %vm392, %v447, 0.0
    %450 = vadd.xlane.f32.xlu0 %v449
    %v451 = vpop.xlane.xlu0 %450
    %v452 = vsel %vm392, %v448, 0.0
    %453 = vadd.xlane.f32.xlu0 %v452
    %v454 = vpop.xlane.xlu0 %453
    %v455 = vmul.f32 %v419, %v131
    %v456 = vmul.f32 %v420, %v132
    %v457 = vsel %vm392, %v455, 0.0
    %458 = vadd.xlane.f32.xlu0 %v457
    %v459 = vpop.xlane.xlu0 %458
    %v460 = vsel %vm392, %v456, 0.0
    %461 = vadd.xlane.f32.xlu0 %v460
    %v462 = vpop.xlane.xlu0 %461
    %v463 = vmul.f32 %v419, %v134
    %v464 = vmul.f32 %v420, %v135
    %v465 = vsel %vm392, %v463, 0.0
    %466 = vadd.xlane.f32.xlu0 %v465
    %v467 = vpop.xlane.xlu0 %466
    %v468 = vsel %vm392, %v464, 0.0
    %469 = vadd.xlane.f32.xlu0 %v468
    %v470 = vpop.xlane.xlu0 %469
    %vm471 = vcmask 7168
    %v472 = vsel %vm471, %v427, %v435
    %v473 = vsel %vm471, %v430, %v438
    %vm474 = vcmask 15360
    %v475 = vsel %vm474, %v472, %v443
    %v476 = vsel %vm474, %v473, %v446
    %vm477 = vcmask 23552
    %v478 = vsel %vm477, %v475, %v451
    %v479 = vsel %vm477, %v476, %v454
    %vm480 = vcmask 31744
    %v481 = vsel %vm480, %v478, %v459
    %v482 = vsel %vm480, %v479, %v462
    %vm483 = vcmask 39936
    %v484 = vsel %vm483, %v481, %v467
    %v485 = vsel %vm483, %v482, %v470
    %v486 = vpack.c.bf16 %v485, %v484
    %vm487 = vcmask 48128
    %v489 = vsel %vm487, %v486, 0
    %vm491 = vcmask 1042432
    %v492 = vsel %vm491, %v222, 0
    %494 = vmatprep.subr.bf16.mxu0 0
    %495 = vmatpush1.bf16.msra.mxu0 0
    %496 = vmatprep.subr.bf16.mxu0 0
    %497 = vmatpush1.bf16.msra.mxu0 0
    %498 = vmatprep.subr.bf16.mxu0 0
    %499 = vmatpush1.bf16.msra.mxu0 0
    %500 = vmatprep.subr.bf16.mxu0 0
    %501 = vmatpush1.bf16.msra.mxu0 0
    %502 = vmatprep.subr.bf16.mxu0 0
    %503 = vmatpush1.bf16.msra.mxu0 0
    %504 = vmatprep.subr.bf16.mxu0 0
    %505 = vmatpush1.bf16.msra.mxu0 0
    %506 = vmatprep.subr.bf16.mxu0 0
    %507 = vmatpush1.bf16.msra.mxu0 0
    %508 = vmatprep.subr.bf16.mxu0 0
    %509 = vmatpush1.bf16.msra.mxu0 %v492
    %510 = vmatprep.subr.bf16.mxu0 0
    %511 = vmatpush2.bf16.msra.mxu0 0
    %512 = vmatprep.subr.bf16.mxu0 0
    %513 = vmatpush2.bf16.msra.mxu0 0
    %514 = vmatprep.subr.bf16.mxu0 0
    %515 = vmatpush2.bf16.msra.mxu0 0
    %516 = vmatprep.subr.bf16.mxu0 0
    %517 = vmatpush2.bf16.msra.mxu0 0
    %518 = vmatprep.subr.bf16.mxu0 0
    %519 = vmatpush2.bf16.msra.mxu0 0
    %520 = vmatprep.subr.bf16.mxu0 0
    %521 = vmatpush2.bf16.msra.mxu0 0
    %522 = vmatprep.subr.bf16.mxu0 0
    %523 = vmatpush2.bf16.msra.mxu0 0
    %524 = vmatprep.subr.bf16.mxu0 0
    %525 = vmatpush2.bf16.msra.mxu0 0
    %526 = vmatprep.mubr.bf16.mxu0 0
    %527 = vmatmul.mubr.bf16.gmra.mxu0 %v489
    %v528 = vpop.f32.mrf.mxu0
    %v529 = vadd.f32 0.0, %v528
    %v530 = vpop.f32.mrf.mxu0
    %v531 = vpop.f32.mrf.mxu0
    %v532 = vadd.f32 0.0, %v531
    %v533 = vpop.f32.mrf.mxu0
    %534 = vdwg.mxu0
    %v536 = vsel %vm392, %v421, 0
    %538 = vmatprep.subr.bf16.mxu0 0
    %539 = vmatpush1.bf16.msra.mxu0 0
    %540 = vmatprep.subr.bf16.mxu0 0
    %541 = vmatpush1.bf16.msra.mxu0 0
    %542 = vmatprep.subr.bf16.mxu0 0
    %543 = vmatpush1.bf16.msra.mxu0 0
    %544 = vmatprep.subr.bf16.mxu0 0
    %545 = vmatpush1.bf16.msra.mxu0 0
    %546 = vmatprep.subr.bf16.mxu0 0
    %547 = vmatpush1.bf16.msra.mxu0 0
    %548 = vmatprep.subr.bf16.mxu0 0
    %549 = vmatpush1.bf16.msra.mxu0 0
    %550 = vmatprep.subr.bf16.mxu0 0
    %551 = vmatpush1.bf16.msra.mxu0 0
    %552 = vmatprep.subr.bf16.mxu0 0
    %553 = vmatpush1.bf16.msra.mxu0 %v422
    %554 = vmatprep.subr.bf16.mxu0 0
    %555 = vmatpush2.bf16.msra.mxu0 0
    %556 = vmatprep.subr.bf16.mxu0 0
    %557 = vmatpush2.bf16.msra.mxu0 0
    %558 = vmatprep.subr.bf16.mxu0 0
    %559 = vmatpush2.bf16.msra.mxu0 0
    %560 = vmatprep.subr.bf16.mxu0 0
    %561 = vmatpush2.bf16.msra.mxu0 0
    %562 = vmatprep.subr.bf16.mxu0 0
    %563 = vmatpush2.bf16.msra.mxu0 0
    %564 = vmatprep.subr.bf16.mxu0 0
    %565 = vmatpush2.bf16.msra.mxu0 0
    %566 = vmatprep.subr.bf16.mxu0 0
    %567 = vmatpush2.bf16.msra.mxu0 0
    %568 = vmatprep.subr.bf16.mxu0 0
    %569 = vmatpush2.bf16.msra.mxu0 0
    %570 = vmatprep.mubr.bf16.mxu0 0
    %571 = vmatmul.mubr.bf16.gmra.mxu0 %v536
    %v572 = vpop.f32.mrf.mxu0
    %v573 = vadd.f32 %v529, %v572
    %v574 = vpop.f32.mrf.mxu0
    %v575 = vpop.f32.mrf.mxu0
    %v576 = vadd.f32 %v532, %v575
    %v577 = vpop.f32.mrf.mxu0
    %578 = vdwg.mxu0
    %v579 = vld [vmem:[%s8] sm:$0x1]
    %v581 = vlaneseq
    %v582 = vshrl.u32 %v581, 7
    %v583 = vsub.s32 0, %v582
    %v584 = vrot.slane %v579, %v583
    %v586 = vmul.f32 %v573, %v584
    %v587 = vmul.f32 %v576, %v584
    %v588 = vsel %vm175, %v586, 0.0
    %589 = vadd.xlane.f32.xlu0 %v588
    %v590 = vpop.xlane.xlu0 %589
    %v591 = vsel %vm175, %v587, 0.0
    %592 = vadd.xlane.f32.xlu0 %v591
    %v593 = vpop.xlane.xlu0 %592
    %v594 = vadd.f32 %v590, 0.0
    %v595 = vadd.f32 %v593, 0.0
    %v596 = vld [vmem:[%s9] sm:$0x1]
    %v598 = vlaneseq
    %v599 = vshrl.u32 %v598, 7
    %v600 = vsub.s32 0, %v599
    %v601 = vrot.slane %v596, %v600
    %602 = vrot.lane.b32.xlu0 %v601, 64
    %v603 = vpop.permute.xlu0 %602
    %v605 = vmul.f32 %v216, %v603
    %v606 = vmul.f32 %v220, %v603
    %609 = vrot.lane.b32.xlu0 %v605, 64
    %v610 = vpop.permute.xlu0 %609
    %611 = vrot.lane.b32.xlu0 %v606, 64
    %v612 = vpop.permute.xlu0 %611
    %v615 = vsel %vm175, %v610, 0.0
    %616 = vadd.xlane.f32.xlu0 %v615
    %v617 = vpop.xlane.xlu0 %616
    %v618 = vsel %vm175, %v612, 0.0
    %619 = vadd.xlane.f32.xlu0 %v618
    %v620 = vpop.xlane.xlu0 %619
    %v621 = vadd.f32 %v594, %v617
    %v622 = vadd.f32 %v595, %v620
    %s623 = scalar_lea.vmem %s7, 4
    %v624 = vld [vmem:[%s623] sm:$0x7]
    %625 = vrot.lane.b32.xlu0 %v223, 96
    %v626 = vpop.permute.xlu0 %625
    %v628 = vsel %vm175, %v626, 0
    %v631 = vsel %vm175, %v624, 0
    %633 = vmatprep.subr.bf16.mxu0 0
    %634 = vmatpush1.bf16.xpose.msra.mxu0 0
    %635 = vmatprep.subr.bf16.mxu0 0
    %636 = vmatpush1.bf16.xpose.msra.mxu0 0
    %637 = vmatprep.subr.bf16.mxu0 0
    %638 = vmatpush1.bf16.xpose.msra.mxu0 0
    %639 = vmatprep.subr.bf16.mxu0 0
    %640 = vmatpush1.bf16.xpose.msra.mxu0 0
    %641 = vmatprep.subr.bf16.mxu0 0
    %642 = vmatpush1.bf16.xpose.msra.mxu0 0
    %643 = vmatprep.subr.bf16.mxu0 0
    %644 = vmatpush1.bf16.xpose.msra.mxu0 0
    %645 = vmatprep.subr.bf16.mxu0 0
    %646 = vmatpush1.bf16.xpose.msra.mxu0 0
    %647 = vmatprep.subr.bf16.mxu0 0
    %648 = vmatpush1.bf16.xpose.msra.mxu0 %v631
    %649 = vmatprep.subr.bf16.mxu0 0
    %650 = vmatpush2.bf16.xpose.msra.mxu0 0
    %651 = vmatprep.subr.bf16.mxu0 0
    %652 = vmatpush2.bf16.xpose.msra.mxu0 0
    %653 = vmatprep.subr.bf16.mxu0 0
    %654 = vmatpush2.bf16.xpose.msra.mxu0 0
    %655 = vmatprep.subr.bf16.mxu0 0
    %656 = vmatpush2.bf16.xpose.msra.mxu0 0
    %657 = vmatprep.subr.bf16.mxu0 0
    %658 = vmatpush2.bf16.xpose.msra.mxu0 0
    %659 = vmatprep.subr.bf16.mxu0 0
    %660 = vmatpush2.bf16.xpose.msra.mxu0 0
    %661 = vmatprep.subr.bf16.mxu0 0
    %662 = vmatpush2.bf16.xpose.msra.mxu0 0
    %663 = vmatprep.subr.bf16.mxu0 0
    %664 = vmatpush2.bf16.xpose.msra.mxu0 0
    %665 = vmatprep.mubr.bf16.mxu0 0
    %666 = vmatmul.mubr.bf16.gmra.mxu0 %v628
    %v667 = vpop.f32.mrf.mxu0
    %v668 = vadd.f32 0.0, %v667
    %v669 = vpop.f32.mrf.mxu0
    %v670 = vpop.f32.mrf.mxu0
    %v671 = vadd.f32 0.0, %v670
    %v672 = vpop.f32.mrf.mxu0
    %673 = vdwg.mxu0
    %675 = vset.pattern.permute.xlu0 0
    %676 = vperm.xlu0 %675, %v668
    %v677 = vpop.permute.xlu0 %676
    %680 = vset.pattern.permute.xlu0 0
    %681 = vperm.xlu0 %680, %v671
    %v682 = vpop.permute.xlu0 %681
    %v684 = vmul.f32 %v119, %v677
    %v685 = vmul.f32 %v120, %v682
    %686 = vrot.lane.b32.xlu0 %v223, 32
    %v687 = vpop.permute.xlu0 %686
    %v689 = vsel %vm175, %v687, 0
    %691 = vmatprep.subr.bf16.mxu0 0
    %692 = vmatpush1.bf16.xpose.msra.mxu0 0
    %693 = vmatprep.subr.bf16.mxu0 0
    %694 = vmatpush1.bf16.xpose.msra.mxu0 0
    %695 = vmatprep.subr.bf16.mxu0 0
    %696 = vmatpush1.bf16.xpose.msra.mxu0 0
    %697 = vmatprep.subr.bf16.mxu0 0
    %698 = vmatpush1.bf16.xpose.msra.mxu0 0
    %699 = vmatprep.subr.bf16.mxu0 0
    %700 = vmatpush1.bf16.xpose.msra.mxu0 0
    %701 = vmatprep.subr.bf16.mxu0 0
    %702 = vmatpush1.bf16.xpose.msra.mxu0 0
    %703 = vmatprep.subr.bf16.mxu0 0
    %704 = vmatpush1.bf16.xpose.msra.mxu0 0
    %705 = vmatprep.subr.bf16.mxu0 0
    %706 = vmatpush1.bf16.xpose.msra.mxu0 %v689
    %707 = vmatprep.subr.bf16.mxu0 0
    %708 = vmatpush2.bf16.xpose.msra.mxu0 0
    %709 = vmatprep.subr.bf16.mxu0 0
    %710 = vmatpush2.bf16.xpose.msra.mxu0 0
    %711 = vmatprep.subr.bf16.mxu0 0
    %712 = vmatpush2.bf16.xpose.msra.mxu0 0
    %713 = vmatprep.subr.bf16.mxu0 0
    %714 = vmatpush2.bf16.xpose.msra.mxu0 0
    %715 = vmatprep.subr.bf16.mxu0 0
    %716 = vmatpush2.bf16.xpose.msra.mxu0 0
    %717 = vmatprep.subr.bf16.mxu0 0
    %718 = vmatpush2.bf16.xpose.msra.mxu0 0
    %719 = vmatprep.subr.bf16.mxu0 0
    %720 = vmatpush2.bf16.xpose.msra.mxu0 0
    %721 = vmatprep.subr.bf16.mxu0 0
    %722 = vmatpush2.bf16.xpose.msra.mxu0 0
    %723 = vmatprep.mubr.bf16.mxu0 0
    %724 = vmatmul.mubr.bf16.gmra.mxu0 %v628
    %v725 = vpop.f32.mrf.mxu0
    %v726 = vadd.f32 %v684, %v725
    %v727 = vpop.f32.mrf.mxu0
    %v728 = vpop.f32.mrf.mxu0
    %v729 = vadd.f32 %v685, %v728
    %v730 = vpop.f32.mrf.mxu0
    %731 = vdwg.mxu0
    %732 = vset.pattern.permute.xlu0 1
    %733 = vperm.xlu0 %732, %v668
    %v734 = vpop.permute.xlu0 %733
    %736 = vset.pattern.permute.xlu0 1
    %737 = vperm.xlu0 %736, %v671
    %v738 = vpop.permute.xlu0 %737
    %v740 = vmul.f32 %v122, %v734
    %v741 = vmul.f32 %v123, %v738
    %v742 = vadd.f32 %v726, %v740
    %v743 = vadd.f32 %v729, %v741
    %744 = vset.pattern.permute.xlu0 2
    %745 = vperm.xlu0 %744, %v668
    %v746 = vpop.permute.xlu0 %745
    %748 = vset.pattern.permute.xlu0 2
    %749 = vperm.xlu0 %748, %v671
    %v750 = vpop.permute.xlu0 %749
    %v752 = vmul.f32 %v125, %v746
    %v753 = vmul.f32 %v126, %v750
    %v754 = vadd.f32 %v742, %v752
    %v755 = vadd.f32 %v743, %v753
    %756 = vset.pattern.permute.xlu0 3
    %757 = vperm.xlu0 %756, %v668
    %v758 = vpop.permute.xlu0 %757
    %760 = vset.pattern.permute.xlu0 3
    %761 = vperm.xlu0 %760, %v671
    %v762 = vpop.permute.xlu0 %761
    %v764 = vmul.f32 %v128, %v758
    %v765 = vmul.f32 %v129, %v762
    %v766 = vadd.f32 %v754, %v764
    %v767 = vadd.f32 %v755, %v765
    %768 = vset.pattern.permute.xlu0 4
    %769 = vperm.xlu0 %768, %v668
    %v770 = vpop.permute.xlu0 %769
    %772 = vset.pattern.permute.xlu0 4
    %773 = vperm.xlu0 %772, %v671
    %v774 = vpop.permute.xlu0 %773
    %v776 = vmul.f32 %v131, %v770
    %v777 = vmul.f32 %v132, %v774
    %v778 = vadd.f32 %v766, %v776
    %v779 = vadd.f32 %v767, %v777
    %780 = vset.pattern.permute.xlu0 5
    %781 = vperm.xlu0 %780, %v668
    %v782 = vpop.permute.xlu0 %781
    %784 = vset.pattern.permute.xlu0 5
    %785 = vperm.xlu0 %784, %v671
    %v786 = vpop.permute.xlu0 %785
    %v788 = vmul.f32 %v134, %v782
    %v789 = vmul.f32 %v135, %v786
    %v790 = vadd.f32 %v778, %v788
    %v791 = vadd.f32 %v779, %v789
    %v792 = vadd.f32 %v790, %v117
    %v793 = vadd.f32 %v791, %v118
    %v794 = vsel %vm392, %v792, -inf
    %795 = vmax.xlane.f32.xlu0 %v794
    %v796 = vpop.xlane.xlu0 %795
    %v797 = vsel %vm392, %v793, -inf
    %798 = vmax.xlane.f32.xlu0 %v797
    %v799 = vpop.xlane.xlu0 %798
    %v800 = vsub.f32 %v792, %v796
    %v801 = vsub.f32 %v793, %v799
    %v802 = vmul.f32 %v800, 1.442695
    %v803 = vpow.pop %v802
    %v804 = vmul.f32 %v801, 1.442695
    %v805 = vpow.pop %v804
    %v806 = vmul.f32 %v803, %v115
    %v807 = vmul.f32 %v805, %v116
    %v808 = vsel %vm392, %v806, 0.0
    %809 = vadd.xlane.f32.xlu0 %v808
    %v810 = vpop.xlane.xlu0 %809
    %v811 = vsel %vm392, %v807, 0.0
    %812 = vadd.xlane.f32.xlu0 %v811
    %v813 = vpop.xlane.xlu0 %812
    %vm814 = vcmp.gt.f32.partialorder %v810, 0.0
    %vm815 = vcmp.gt.f32.partialorder %v813, 0.0
    %v816 = vsel %vm814, %v810, 1.0
    %v817 = vsel %vm815, %v813, 1.0
    %v818 = vrcp.pop %v816
    %v819 = vrcp.pop %v817
    %v820 = vmul.f32 %v806, %v818
    %v821 = vmul.f32 %v807, %v819
    %v822 = vpack.c.bf16 %v821, %v820
    %v823 = vmul.f32 %v820, %v119
    %v824 = vmul.f32 %v821, %v120
    %v825 = vsel %vm392, %v823, 0.0
    %826 = vadd.xlane.f32.xlu0 %v825
    %v827 = vpop.xlane.xlu0 %826
    %v828 = vsel %vm392, %v824, 0.0
    %829 = vadd.xlane.f32.xlu0 %v828
    %v830 = vpop.xlane.xlu0 %829
    %v831 = vmul.f32 %v820, %v122
    %v832 = vmul.f32 %v821, %v123
    %v833 = vsel %vm392, %v831, 0.0
    %834 = vadd.xlane.f32.xlu0 %v833
    %v835 = vpop.xlane.xlu0 %834
    %v836 = vsel %vm392, %v832, 0.0
    %837 = vadd.xlane.f32.xlu0 %v836
    %v838 = vpop.xlane.xlu0 %837
    %v839 = vmul.f32 %v820, %v125
    %v840 = vmul.f32 %v821, %v126
    %v841 = vsel %vm392, %v839, 0.0
    %842 = vadd.xlane.f32.xlu0 %v841
    %v843 = vpop.xlane.xlu0 %842
    %v844 = vsel %vm392, %v840, 0.0
    %845 = vadd.xlane.f32.xlu0 %v844
    %v846 = vpop.xlane.xlu0 %845
    %v847 = vmul.f32 %v820, %v128
    %v848 = vmul.f32 %v821, %v129
    %v849 = vsel %vm392, %v847, 0.0
    %850 = vadd.xlane.f32.xlu0 %v849
    %v851 = vpop.xlane.xlu0 %850
    %v852 = vsel %vm392, %v848, 0.0
    %853 = vadd.xlane.f32.xlu0 %v852
    %v854 = vpop.xlane.xlu0 %853
    %v855 = vmul.f32 %v820, %v131
    %v856 = vmul.f32 %v821, %v132
    %v857 = vsel %vm392, %v855, 0.0
    %858 = vadd.xlane.f32.xlu0 %v857
    %v859 = vpop.xlane.xlu0 %858
    %v860 = vsel %vm392, %v856, 0.0
    %861 = vadd.xlane.f32.xlu0 %v860
    %v862 = vpop.xlane.xlu0 %861
    %v863 = vmul.f32 %v820, %v134
    %v864 = vmul.f32 %v821, %v135
    %v865 = vsel %vm392, %v863, 0.0
    %866 = vadd.xlane.f32.xlu0 %v865
    %v867 = vpop.xlane.xlu0 %866
    %v868 = vsel %vm392, %v864, 0.0
    %869 = vadd.xlane.f32.xlu0 %v868
    %v870 = vpop.xlane.xlu0 %869
    %v871 = vsel %vm471, %v827, %v835
    %v872 = vsel %vm471, %v830, %v838
    %v873 = vsel %vm474, %v871, %v843
    %v874 = vsel %vm474, %v872, %v846
    %v875 = vsel %vm477, %v873, %v851
    %v876 = vsel %vm477, %v874, %v854
    %v877 = vsel %vm480, %v875, %v859
    %v878 = vsel %vm480, %v876, %v862
    %v879 = vsel %vm483, %v877, %v867
    %v880 = vsel %vm483, %v878, %v870
    %v881 = vpack.c.bf16 %v880, %v879
    %v883 = vsel %vm487, %v881, 0
    %v885 = vsel %vm491, %v624, 0
    %887 = vmatprep.subr.bf16.mxu0 0
    %888 = vmatpush1.bf16.msra.mxu0 0
    %889 = vmatprep.subr.bf16.mxu0 0
    %890 = vmatpush1.bf16.msra.mxu0 0
    %891 = vmatprep.subr.bf16.mxu0 0
    %892 = vmatpush1.bf16.msra.mxu0 0
    %893 = vmatprep.subr.bf16.mxu0 0
    %894 = vmatpush1.bf16.msra.mxu0 0
    %895 = vmatprep.subr.bf16.mxu0 0
    %896 = vmatpush1.bf16.msra.mxu0 0
    %897 = vmatprep.subr.bf16.mxu0 0
    %898 = vmatpush1.bf16.msra.mxu0 0
    %899 = vmatprep.subr.bf16.mxu0 0
    %900 = vmatpush1.bf16.msra.mxu0 0
    %901 = vmatprep.subr.bf16.mxu0 0
    %902 = vmatpush1.bf16.msra.mxu0 %v885
    %903 = vmatprep.subr.bf16.mxu0 0
    %904 = vmatpush2.bf16.msra.mxu0 0
    %905 = vmatprep.subr.bf16.mxu0 0
    %906 = vmatpush2.bf16.msra.mxu0 0
    %907 = vmatprep.subr.bf16.mxu0 0
    %908 = vmatpush2.bf16.msra.mxu0 0
    %909 = vmatprep.subr.bf16.mxu0 0
    %910 = vmatpush2.bf16.msra.mxu0 0
    %911 = vmatprep.subr.bf16.mxu0 0
    %912 = vmatpush2.bf16.msra.mxu0 0
    %913 = vmatprep.subr.bf16.mxu0 0
    %914 = vmatpush2.bf16.msra.mxu0 0
    %915 = vmatprep.subr.bf16.mxu0 0
    %916 = vmatpush2.bf16.msra.mxu0 0
    %917 = vmatprep.subr.bf16.mxu0 0
    %918 = vmatpush2.bf16.msra.mxu0 0
    %919 = vmatprep.mubr.bf16.mxu0 0
    %920 = vmatmul.mubr.bf16.gmra.mxu0 %v883
    %v921 = vpop.f32.mrf.mxu0
    %v922 = vadd.f32 0.0, %v921
    %v923 = vpop.f32.mrf.mxu0
    %v924 = vpop.f32.mrf.mxu0
    %v925 = vadd.f32 0.0, %v924
    %v926 = vpop.f32.mrf.mxu0
    %927 = vdwg.mxu0
    %929 = vrot.lane.b32.xlu0 %v422, 96
    %v930 = vpop.permute.xlu0 %929
    %v933 = vsel %vm392, %v822, 0
    %935 = vmatprep.subr.bf16.mxu0 0
    %936 = vmatpush1.bf16.msra.mxu0 0
    %937 = vmatprep.subr.bf16.mxu0 0
    %938 = vmatpush1.bf16.msra.mxu0 0
    %939 = vmatprep.subr.bf16.mxu0 0
    %940 = vmatpush1.bf16.msra.mxu0 0
    %941 = vmatprep.subr.bf16.mxu0 0
    %942 = vmatpush1.bf16.msra.mxu0 0
    %943 = vmatprep.subr.bf16.mxu0 0
    %944 = vmatpush1.bf16.msra.mxu0 0
    %945 = vmatprep.subr.bf16.mxu0 0
    %946 = vmatpush1.bf16.msra.mxu0 0
    %947 = vmatprep.subr.bf16.mxu0 0
    %948 = vmatpush1.bf16.msra.mxu0 0
    %949 = vmatprep.subr.bf16.mxu0 0
    %950 = vmatpush1.bf16.msra.mxu0 %v930
    %951 = vmatprep.subr.bf16.mxu0 0
    %952 = vmatpush2.bf16.msra.mxu0 0
    %953 = vmatprep.subr.bf16.mxu0 0
    %954 = vmatpush2.bf16.msra.mxu0 0
    %955 = vmatprep.subr.bf16.mxu0 0
    %956 = vmatpush2.bf16.msra.mxu0 0
    %957 = vmatprep.subr.bf16.mxu0 0
    %958 = vmatpush2.bf16.msra.mxu0 0
    %959 = vmatprep.subr.bf16.mxu0 0
    %960 = vmatpush2.bf16.msra.mxu0 0
    %961 = vmatprep.subr.bf16.mxu0 0
    %962 = vmatpush2.bf16.msra.mxu0 0
    %963 = vmatprep.subr.bf16.mxu0 0
    %964 = vmatpush2.bf16.msra.mxu0 0
    %965 = vmatprep.subr.bf16.mxu0 0
    %966 = vmatpush2.bf16.msra.mxu0 0
    %967 = vmatprep.mubr.bf16.mxu0 0
    %968 = vmatmul.mubr.bf16.gmra.mxu0 %v933
    %v969 = vpop.f32.mrf.mxu0
    %v970 = vadd.f32 %v922, %v969
    %v971 = vpop.f32.mrf.mxu0
    %v972 = vpop.f32.mrf.mxu0
    %v973 = vadd.f32 %v925, %v972
    %v974 = vpop.f32.mrf.mxu0
    %975 = vdwg.mxu0
    %s976 = scalar_lea.vmem %s8, 1
    %v977 = vld [vmem:[%s976] sm:$0x1]
    %v979 = vlaneseq
    %v980 = vshrl.u32 %v979, 7
    %v981 = vsub.s32 0, %v980
    %v982 = vrot.slane %v977, %v981
    %v984 = vmul.f32 %v970, %v982
    %v985 = vmul.f32 %v973, %v982
    %v986 = vsel %vm175, %v984, 0.0
    %987 = vadd.xlane.f32.xlu0 %v986
    %v988 = vpop.xlane.xlu0 %987
    %v989 = vsel %vm175, %v985, 0.0
    %990 = vadd.xlane.f32.xlu0 %v989
    %v991 = vpop.xlane.xlu0 %990
    %v992 = vadd.f32 %v621, %v988
    %v993 = vadd.f32 %v622, %v991
    %s994 = scalar_lea.vmem %s9, 1
    %v995 = vld [vmem:[%s994] sm:$0x1]
    %v997 = vlaneseq
    %v998 = vshrl.u32 %v997, 7
    %v999 = vsub.s32 0, %v998
    %v1000 = vrot.slane %v995, %v999
    %1001 = vrot.lane.b32.xlu0 %v1000, 96
    %v1002 = vpop.permute.xlu0 %1001
    %v1004 = vmul.f32 %v216, %v1002
    %v1005 = vmul.f32 %v220, %v1002
    %1008 = vrot.lane.b32.xlu0 %v1004, 32
    %v1009 = vpop.permute.xlu0 %1008
    %1010 = vrot.lane.b32.xlu0 %v1005, 32
    %v1011 = vpop.permute.xlu0 %1010
    %v1014 = vsel %vm175, %v1009, 0.0
    %1015 = vadd.xlane.f32.xlu0 %v1014
    %v1016 = vpop.xlane.xlu0 %1015
    %v1017 = vsel %vm175, %v1011, 0.0
    %1018 = vadd.xlane.f32.xlu0 %v1017
    %v1019 = vpop.xlane.xlu0 %1018
    %v1020 = vadd.f32 %v992, %v1016
    %v1021 = vadd.f32 %v993, %v1019
    %v1022 = vxor.u32 %v1020, 2147483648
    %v1023 = vxor.u32 %v1021, 2147483648
    %v1024 = vmul.f32 %v1022, 1.442695
    %v1025 = vpow.pop %v1024
    %v1026 = vmul.f32 %v1023, 1.442695
    %v1027 = vpow.pop %v1026
    %v1028 = vadd.f32 %v1025, 1.0
    %v1029 = vadd.f32 %v1027, 1.0
    %v1030 = vrcp.pop %v1028
    %v1031 = vmul.f32 1.0, %v1030
    %v1032 = vrcp.pop %v1029
    %v1033 = vmul.f32 1.0, %v1032
    %v1034 = vld [vmem:[%s11] sm:$0x1]
    %v1035 = vmul.f32 %v1031, %v216
    %v1036 = vmul.f32 %v1033, %v220
    %v1037 = vsub.f32 1.0, %v1031
    %v1038 = vsub.f32 1.0, %v1033
    %v1039 = vmul.f32 %v1037, %v573
    %v1040 = vmul.f32 %v1038, %v576
    %1043 = vrot.lane.b32.xlu0 %v1039, 64
    %v1044 = vpop.permute.xlu0 %1043
    %1045 = vrot.lane.b32.xlu0 %v1040, 64
    %v1046 = vpop.permute.xlu0 %1045
    %v1049 = vadd.f32 %v1035, %v1044
    %v1050 = vadd.f32 %v1036, %v1046
    %v1051 = vpack.c.bf16 %v1050, %v1049
    %v1052 = vld [vmem:[#allocation10] sm:$0xf]
    %v1053 = vld [vmem:[#allocation10 + $0x4] sm:$0xf]
    %v1054 = vld [vmem:[#allocation10 + $0x8] sm:$0xf]
    %v1055 = vld [vmem:[#allocation10 + $0xc] sm:$0xf]
    %1057 = vrot.lane.b32.xlu0 %v1051, 64
    %v1058 = vpop.permute.xlu0 %1057
    %v1063 = vunpack.c.l.b16 %v1052
    %v1064 = vunpack.c.l.b16 %v1053
    %v1065 = vunpack.c.l.b16 %v1054
    %v1066 = vunpack.c.l.b16 %v1055
    %v1067 = vpack.c.b16 %v1064, %v1063
    %v1068 = vpack.c.b16 %v1066, %v1065
    %v1072 = vsel %vm175, %v1058, 0
    %1074 = vmatprep.subr.bf16.mxu0 0
    %1075 = vmatpush1.bf16.msra.mxu0 0
    %1076 = vmatprep.subr.bf16.mxu0 0
    %1077 = vmatpush1.bf16.msra.mxu0 0
    %1078 = vmatprep.subr.bf16.mxu0 0
    %1079 = vmatpush1.bf16.msra.mxu0 0
    %1080 = vmatprep.subr.bf16.mxu0 0
    %1081 = vmatpush1.bf16.msra.mxu0 0
    %1082 = vmatprep.subr.bf16.mxu0 0
    %1083 = vmatpush1.bf16.msra.mxu0 0
    %1084 = vmatprep.subr.bf16.mxu0 0
    %1085 = vmatpush1.bf16.msra.mxu0 0
    %1086 = vmatprep.subr.bf16.mxu0 0
    %1087 = vmatpush1.bf16.msra.mxu0 %v1068
    %1088 = vmatprep.subr.bf16.mxu0 0
    %1089 = vmatpush1.bf16.msra.mxu0 %v1067
    %1090 = vmatprep.subr.bf16.mxu0 0
    %1091 = vmatpush2.bf16.msra.mxu0 0
    %1092 = vmatprep.subr.bf16.mxu0 0
    %1093 = vmatpush2.bf16.msra.mxu0 0
    %1094 = vmatprep.subr.bf16.mxu0 0
    %1095 = vmatpush2.bf16.msra.mxu0 0
    %1096 = vmatprep.subr.bf16.mxu0 0
    %1097 = vmatpush2.bf16.msra.mxu0 0
    %1098 = vmatprep.subr.bf16.mxu0 0
    %1099 = vmatpush2.bf16.msra.mxu0 0
    %1100 = vmatprep.subr.bf16.mxu0 0
    %1101 = vmatpush2.bf16.msra.mxu0 0
    %1102 = vmatprep.subr.bf16.mxu0 0
    %1103 = vmatpush2.bf16.msra.mxu0 0
    %1104 = vmatprep.subr.bf16.mxu0 0
    %1105 = vmatpush2.bf16.msra.mxu0 0
    %1106 = vmatprep.mubr.bf16.mxu0 0
    %1107 = vmatmul.mubr.bf16.gmra.mxu0 %v1072
    %v1108 = vpop.f32.mrf.mxu0
    %v1109 = vadd.f32 0.0, %v1108
    %v1110 = vpop.f32.mrf.mxu0
    %v1111 = vpop.f32.mrf.mxu0
    %v1112 = vadd.f32 0.0, %v1111
    %v1113 = vpop.f32.mrf.mxu0
    %1114 = vdwg.mxu0
    %v1116 = vlaneseq
    %v1117 = vshrl.u32 %v1116, 7
    %v1118 = vsub.s32 0, %v1117
    %v1119 = vrot.slane %v1034, %v1118
    %v1121 = vadd.f32 %v1119, %v1109
    %v1122 = vadd.f32 %v1119, %v1112
    %v1123 = vmul.f32 %v1037, %v970
    %v1124 = vmul.f32 %v1038, %v973
    %1127 = vrot.lane.b32.xlu0 %v1123, 96
    %v1128 = vpop.permute.xlu0 %1127
    %1129 = vrot.lane.b32.xlu0 %v1124, 96
    %v1130 = vpop.permute.xlu0 %1129
    %v1133 = vadd.f32 %v1035, %v1128
    %v1134 = vadd.f32 %v1036, %v1130
    %v1135 = vpack.c.bf16 %v1134, %v1133
    %s1136 = scalar_lea.vmem [#allocation10], 16
    %v1137 = vld [vmem:[%s1136] sm:$0xf]
    %v1138 = vld [vmem:[%s1136 + $0x4] sm:$0xf]
    %v1139 = vld [vmem:[%s1136 + $0x8] sm:$0xf]
    %v1140 = vld [vmem:[%s1136 + $0xc] sm:$0xf]
    %1142 = vrot.lane.b32.xlu0 %v1135, 32
    %v1143 = vpop.permute.xlu0 %1142
    %v1148 = vunpack.c.l.b16 %v1137
    %v1149 = vunpack.c.l.b16 %v1138
    %v1150 = vunpack.c.l.b16 %v1139
    %v1151 = vunpack.c.l.b16 %v1140
    %v1152 = vpack.c.b16 %v1149, %v1148
    %v1153 = vpack.c.b16 %v1151, %v1150
    %v1157 = vsel %vm175, %v1143, 0
    %1159 = vmatprep.subr.bf16.mxu0 0
    %1160 = vmatpush1.bf16.msra.mxu0 0
    %1161 = vmatprep.subr.bf16.mxu0 0
    %1162 = vmatpush1.bf16.msra.mxu0 0
    %1163 = vmatprep.subr.bf16.mxu0 0
    %1164 = vmatpush1.bf16.msra.mxu0 0
    %1165 = vmatprep.subr.bf16.mxu0 0
    %1166 = vmatpush1.bf16.msra.mxu0 0
    %1167 = vmatprep.subr.bf16.mxu0 0
    %1168 = vmatpush1.bf16.msra.mxu0 0
    %1169 = vmatprep.subr.bf16.mxu0 0
    %1170 = vmatpush1.bf16.msra.mxu0 0
    %1171 = vmatprep.subr.bf16.mxu0 0
    %1172 = vmatpush1.bf16.msra.mxu0 %v1153
    %1173 = vmatprep.subr.bf16.mxu0 0
    %1174 = vmatpush1.bf16.msra.mxu0 %v1152
    %1175 = vmatprep.subr.bf16.mxu0 0
    %1176 = vmatpush2.bf16.msra.mxu0 0
    %1177 = vmatprep.subr.bf16.mxu0 0
    %1178 = vmatpush2.bf16.msra.mxu0 0
    %1179 = vmatprep.subr.bf16.mxu0 0
    %1180 = vmatpush2.bf16.msra.mxu0 0
    %1181 = vmatprep.subr.bf16.mxu0 0
    %1182 = vmatpush2.bf16.msra.mxu0 0
    %1183 = vmatprep.subr.bf16.mxu0 0
    %1184 = vmatpush2.bf16.msra.mxu0 0
    %1185 = vmatprep.subr.bf16.mxu0 0
    %1186 = vmatpush2.bf16.msra.mxu0 0
    %1187 = vmatprep.subr.bf16.mxu0 0
    %1188 = vmatpush2.bf16.msra.mxu0 0
    %1189 = vmatprep.subr.bf16.mxu0 0
    %1190 = vmatpush2.bf16.msra.mxu0 0
    %1191 = vmatprep.mubr.bf16.mxu0 0
    %1192 = vmatmul.mubr.bf16.gmra.mxu0 %v1157
    %v1193 = vpop.f32.mrf.mxu0
    %v1194 = vadd.f32 0.0, %v1193
    %v1195 = vpop.f32.mrf.mxu0
    %v1196 = vpop.f32.mrf.mxu0
    %v1197 = vadd.f32 0.0, %v1196
    %v1198 = vpop.f32.mrf.mxu0
    %1199 = vdwg.mxu0
    %v1200 = vadd.f32 %v1121, %v1194
    %v1201 = vadd.f32 %v1122, %v1197
    %v1202 = vmul.f32 %v1200, 0.01
    %v1203 = vmul.f32 %v1201, 0.01
    %v1204 = vmax.f32 %v1200, %v1202
    %v1205 = vmax.f32 %v1201, %v1203
    %v1206 = vld [vmem:[%s12] sm:$0x1]
    %v1208 = vlaneseq
    %v1209 = vshrl.u32 %v1208, 7
    %v1210 = vsub.s32 0, %v1209
    %v1211 = vrot.slane %v1206, %v1210
    %v1213 = vmul.f32 %v1204, %v1211
    %v1214 = vmul.f32 %v1205, %v1211
    %v1215 = vld [vmem:[%s13] sm:$0x1]
    %v1217 = vlaneseq
    %v1218 = vshrl.u32 %v1217, 7
    %v1219 = vsub.s32 0, %v1218
    %v1220 = vrot.slane %v1215, %v1219
    %v1222 = vadd.f32 %v1213, %v1220
    %v1223 = vadd.f32 %v1214, %v1220
    %v1224 = vpack.c.bf16 %v1223, %v1222
    %s1225 = scalar_lea.vmem [#allocation8], 32
    %v1226 = vld [vmem:[%s1225] sm:$0xff]
    %v1227 = vld [vmem:[%s1225 + $0x8] sm:$0xff]
    %v1228 = vld [vmem:[%s1225 + $0x10] sm:$0xff]
    %v1229 = vld [vmem:[%s1225 + $0x18] sm:$0xff]
    %s1230 = scalar_lea.vmem %s6, 2
    %v1231 = vld [vmem:[%s1230] sm:$0x3]
    %v1233 = vlaneseq
    %v1234 = vshrl.u32 %v1233, 7
    %v1235 = vsub.s32 0, %v1234
    %v1236 = vrot.slane %v1231, %v1235
    %v1237 = vlaneseq
    %v1238 = vshrl.u32 %v1237, 7
    %v1239 = vsub.s32 1, %v1238
    %v1240 = vrot.slane %v1231, %v1239
    %v1247 = vunpack.c.l.b16 %v1226
    %v1248 = vunpack.c.h.b16 %v1226
    %v1249 = vunpack.c.l.b16 %v1227
    %v1250 = vunpack.c.h.b16 %v1227
    %v1251 = vunpack.c.l.b16 %v1228
    %v1252 = vunpack.c.h.b16 %v1228
    %v1253 = vunpack.c.l.b16 %v1229
    %v1254 = vunpack.c.h.b16 %v1229
    %v1255 = vpack.c.b16 %v1249, %v1247
    %v1256 = vpack.c.b16 %v1250, %v1248
    %v1257 = vpack.c.b16 %v1253, %v1251
    %v1258 = vpack.c.b16 %v1254, %v1252
    %v1264 = vsel %vm175, %v1224, 0
    %1266 = vmatprep.subr.bf16.mxu0 0
    %1267 = vmatpush1.bf16.msra.mxu0 0
    %1268 = vmatprep.subr.bf16.mxu0 0
    %1269 = vmatpush1.bf16.msra.mxu0 0
    %1270 = vmatprep.subr.bf16.mxu0 0
    %1271 = vmatpush1.bf16.msra.mxu0 0
    %1272 = vmatprep.subr.bf16.mxu0 0
    %1273 = vmatpush1.bf16.msra.mxu0 0
    %1274 = vmatprep.subr.bf16.mxu0 0
    %1275 = vmatpush1.bf16.msra.mxu0 0
    %1276 = vmatprep.subr.bf16.mxu0 0
    %1277 = vmatpush1.bf16.msra.mxu0 0
    %1278 = vmatprep.subr.bf16.mxu0 %v1258
    %1279 = vmatpush1.bf16.msra.mxu0 %v1257
    %1280 = vmatprep.subr.bf16.mxu0 %v1256
    %1281 = vmatpush1.bf16.msra.mxu0 %v1255
    %1282 = vmatprep.subr.bf16.mxu0 0
    %1283 = vmatpush2.bf16.msra.mxu0 0
    %1284 = vmatprep.subr.bf16.mxu0 0
    %1285 = vmatpush2.bf16.msra.mxu0 0
    %1286 = vmatprep.subr.bf16.mxu0 0
    %1287 = vmatpush2.bf16.msra.mxu0 0
    %1288 = vmatprep.subr.bf16.mxu0 0
    %1289 = vmatpush2.bf16.msra.mxu0 0
    %1290 = vmatprep.subr.bf16.mxu0 0
    %1291 = vmatpush2.bf16.msra.mxu0 0
    %1292 = vmatprep.subr.bf16.mxu0 0
    %1293 = vmatpush2.bf16.msra.mxu0 0
    %1294 = vmatprep.subr.bf16.mxu0 0
    %1295 = vmatpush2.bf16.msra.mxu0 0
    %1296 = vmatprep.subr.bf16.mxu0 0
    %1297 = vmatpush2.bf16.msra.mxu0 0
    %1298 = vmatprep.mubr.bf16.mxu0 0
    %1299 = vmatmul.mubr.bf16.gmra.mxu0 %v1264
    %v1300 = vpop.f32.mrf.mxu0
    %v1301 = vadd.f32 %v1236, %v1300
    %v1302 = vpop.f32.mrf.mxu0
    %v1303 = vadd.f32 %v1240, %v1302
    %v1304 = vpop.f32.mrf.mxu0
    %v1305 = vadd.f32 %v1236, %v1304
    %v1306 = vpop.f32.mrf.mxu0
    %v1307 = vadd.f32 %v1240, %v1306
    %1308 = vdwg.mxu0
    %s1309 = scalar_lea.vmem %s7, 8
    %v1310 = vld [vmem:[%s1309] sm:$0x7]
    %v1311 = vpack.c.bf16 %v1305, %v1301
    %v1313 = vsel %vm175, %v1311, 0
    %v1316 = vsel %vm175, %v1310, 0
    %1318 = vmatprep.subr.bf16.mxu0 0
    %1319 = vmatpush1.bf16.xpose.msra.mxu0 0
    %1320 = vmatprep.subr.bf16.mxu0 0
    %1321 = vmatpush1.bf16.xpose.msra.mxu0 0
    %1322 = vmatprep.subr.bf16.mxu0 0
    %1323 = vmatpush1.bf16.xpose.msra.mxu0 0
    %1324 = vmatprep.subr.bf16.mxu0 0
    %1325 = vmatpush1.bf16.xpose.msra.mxu0 0
    %1326 = vmatprep.subr.bf16.mxu0 0
    %1327 = vmatpush1.bf16.xpose.msra.mxu0 0
    %1328 = vmatprep.subr.bf16.mxu0 0
    %1329 = vmatpush1.bf16.xpose.msra.mxu0 0
    %1330 = vmatprep.subr.bf16.mxu0 0
    %1331 = vmatpush1.bf16.xpose.msra.mxu0 0
    %1332 = vmatprep.subr.bf16.mxu0 0
    %1333 = vmatpush1.bf16.xpose.msra.mxu0 %v1316
    %1334 = vmatprep.subr.bf16.mxu0 0
    %1335 = vmatpush2.bf16.xpose.msra.mxu0 0
    %1336 = vmatprep.subr.bf16.mxu0 0
    %1337 = vmatpush2.bf16.xpose.msra.mxu0 0
    %1338 = vmatprep.subr.bf16.mxu0 0
    %1339 = vmatpush2.bf16.xpose.msra.mxu0 0
    %1340 = vmatprep.subr.bf16.mxu0 0
    %1341 = vmatpush2.bf16.xpose.msra.mxu0 0
    %1342 = vmatprep.subr.bf16.mxu0 0
    %1343 = vmatpush2.bf16.xpose.msra.mxu0 0
    %1344 = vmatprep.subr.bf16.mxu0 0
    %1345 = vmatpush2.bf16.xpose.msra.mxu0 0
    %1346 = vmatprep.subr.bf16.mxu0 0
    %1347 = vmatpush2.bf16.xpose.msra.mxu0 0
    %1348 = vmatprep.subr.bf16.mxu0 0
    %1349 = vmatpush2.bf16.xpose.msra.mxu0 0
    %1350 = vmatprep.mubr.bf16.mxu0 0
    %1351 = vmatmul.mubr.bf16.gmra.mxu0 %v1313
    %v1352 = vpop.f32.mrf.mxu0
    %v1353 = vadd.f32 0.0, %v1352
    %v1354 = vpop.f32.mrf.mxu0
    %v1355 = vpop.f32.mrf.mxu0
    %v1356 = vadd.f32 0.0, %v1355
    %v1357 = vpop.f32.mrf.mxu0
    %1358 = vdwg.mxu0
    %1360 = vset.pattern.permute.xlu0 0
    %1361 = vperm.xlu0 %1360, %v1353
    %v1362 = vpop.permute.xlu0 %1361
    %1365 = vset.pattern.permute.xlu0 0
    %1366 = vperm.xlu0 %1365, %v1356
    %v1367 = vpop.permute.xlu0 %1366
    %v1369 = vmul.f32 %v119, %v1362
    %v1370 = vmul.f32 %v120, %v1367
    %1372 = vrot.lane.b32.xlu0 %v1311, 64
    %v1373 = vpop.permute.xlu0 %1372
    %v1375 = vsel %vm175, %v1373, 0
    %1377 = vmatprep.subr.bf16.mxu0 0
    %1378 = vmatpush1.bf16.xpose.msra.mxu0 0
    %1379 = vmatprep.subr.bf16.mxu0 0
    %1380 = vmatpush1.bf16.xpose.msra.mxu0 0
    %1381 = vmatprep.subr.bf16.mxu0 0
    %1382 = vmatpush1.bf16.xpose.msra.mxu0 0
    %1383 = vmatprep.subr.bf16.mxu0 0
    %1384 = vmatpush1.bf16.xpose.msra.mxu0 0
    %1385 = vmatprep.subr.bf16.mxu0 0
    %1386 = vmatpush1.bf16.xpose.msra.mxu0 0
    %1387 = vmatprep.subr.bf16.mxu0 0
    %1388 = vmatpush1.bf16.xpose.msra.mxu0 0
    %1389 = vmatprep.subr.bf16.mxu0 0
    %1390 = vmatpush1.bf16.xpose.msra.mxu0 0
    %1391 = vmatprep.subr.bf16.mxu0 0
    %1392 = vmatpush1.bf16.xpose.msra.mxu0 %v1375
    %1393 = vmatprep.subr.bf16.mxu0 0
    %1394 = vmatpush2.bf16.xpose.msra.mxu0 0
    %1395 = vmatprep.subr.bf16.mxu0 0
    %1396 = vmatpush2.bf16.xpose.msra.mxu0 0
    %1397 = vmatprep.subr.bf16.mxu0 0
    %1398 = vmatpush2.bf16.xpose.msra.mxu0 0
    %1399 = vmatprep.subr.bf16.mxu0 0
    %1400 = vmatpush2.bf16.xpose.msra.mxu0 0
    %1401 = vmatprep.subr.bf16.mxu0 0
    %1402 = vmatpush2.bf16.xpose.msra.mxu0 0
    %1403 = vmatprep.subr.bf16.mxu0 0
    %1404 = vmatpush2.bf16.xpose.msra.mxu0 0
    %1405 = vmatprep.subr.bf16.mxu0 0
    %1406 = vmatpush2.bf16.xpose.msra.mxu0 0
    %1407 = vmatprep.subr.bf16.mxu0 0
    %1408 = vmatpush2.bf16.xpose.msra.mxu0 0
    %1409 = vmatprep.mubr.bf16.mxu0 0
    %1410 = vmatmul.mubr.bf16.gmra.mxu0 %v1313
    %v1411 = vpop.f32.mrf.mxu0
    %v1412 = vadd.f32 %v1369, %v1411
    %v1413 = vpop.f32.mrf.mxu0
    %v1414 = vpop.f32.mrf.mxu0
    %v1415 = vadd.f32 %v1370, %v1414
    %v1416 = vpop.f32.mrf.mxu0
    %1417 = vdwg.mxu0
    %1418 = vset.pattern.permute.xlu0 1
    %1419 = vperm.xlu0 %1418, %v1353
    %v1420 = vpop.permute.xlu0 %1419
    %1422 = vset.pattern.permute.xlu0 1
    %1423 = vperm.xlu0 %1422, %v1356
    %v1424 = vpop.permute.xlu0 %1423
    %v1426 = vmul.f32 %v122, %v1420
    %v1427 = vmul.f32 %v123, %v1424
    %v1428 = vadd.f32 %v1412, %v1426
    %v1429 = vadd.f32 %v1415, %v1427
    %1430 = vset.pattern.permute.xlu0 2
    %1431 = vperm.xlu0 %1430, %v1353
    %v1432 = vpop.permute.xlu0 %1431
    %1434 = vset.pattern.permute.xlu0 2
    %1435 = vperm.xlu0 %1434, %v1356
    %v1436 = vpop.permute.xlu0 %1435
    %v1438 = vmul.f32 %v125, %v1432
    %v1439 = vmul.f32 %v126, %v1436
    %v1440 = vadd.f32 %v1428, %v1438
    %v1441 = vadd.f32 %v1429, %v1439
    %1442 = vset.pattern.permute.xlu0 3
    %1443 = vperm.xlu0 %1442, %v1353
    %v1444 = vpop.permute.xlu0 %1443
    %1446 = vset.pattern.permute.xlu0 3
    %1447 = vperm.xlu0 %1446, %v1356
    %v1448 = vpop.permute.xlu0 %1447
    %v1450 = vmul.f32 %v128, %v1444
    %v1451 = vmul.f32 %v129, %v1448
    %v1452 = vadd.f32 %v1440, %v1450
    %v1453 = vadd.f32 %v1441, %v1451
    %1454 = vset.pattern.permute.xlu0 4
    %1455 = vperm.xlu0 %1454, %v1353
    %v1456 = vpop.permute.xlu0 %1455
    %1458 = vset.pattern.permute.xlu0 4
    %1459 = vperm.xlu0 %1458, %v1356
    %v1460 = vpop.permute.xlu0 %1459
    %v1462 = vmul.f32 %v131, %v1456
    %v1463 = vmul.f32 %v132, %v1460
    %v1464 = vadd.f32 %v1452, %v1462
    %v1465 = vadd.f32 %v1453, %v1463
    %1466 = vset.pattern.permute.xlu0 5
    %1467 = vperm.xlu0 %1466, %v1353
    %v1468 = vpop.permute.xlu0 %1467
    %1470 = vset.pattern.permute.xlu0 5
    %1471 = vperm.xlu0 %1470, %v1356
    %v1472 = vpop.permute.xlu0 %1471
    %v1474 = vmul.f32 %v134, %v1468
    %v1475 = vmul.f32 %v135, %v1472
    %v1476 = vadd.f32 %v1464, %v1474
    %v1477 = vadd.f32 %v1465, %v1475
    %v1478 = vadd.f32 %v1476, %v117
    %v1479 = vadd.f32 %v1477, %v118
    %v1480 = vsel %vm392, %v1478, -inf
    %1481 = vmax.xlane.f32.xlu0 %v1480
    %v1482 = vpop.xlane.xlu0 %1481
    %v1483 = vsel %vm392, %v1479, -inf
    %1484 = vmax.xlane.f32.xlu0 %v1483
    %v1485 = vpop.xlane.xlu0 %1484
    %v1486 = vsub.f32 %v1478, %v1482
    %v1487 = vsub.f32 %v1479, %v1485
    %v1488 = vmul.f32 %v1486, 1.442695
    %v1489 = vpow.pop %v1488
    %v1490 = vmul.f32 %v1487, 1.442695
    %v1491 = vpow.pop %v1490
    %v1492 = vmul.f32 %v1489, %v115
    %v1493 = vmul.f32 %v1491, %v116
    %v1494 = vsel %vm392, %v1492, 0.0
    %1495 = vadd.xlane.f32.xlu0 %v1494
    %v1496 = vpop.xlane.xlu0 %1495
    %v1497 = vsel %vm392, %v1493, 0.0
    %1498 = vadd.xlane.f32.xlu0 %v1497
    %v1499 = vpop.xlane.xlu0 %1498
    %vm1500 = vcmp.gt.f32.partialorder %v1496, 0.0
    %vm1501 = vcmp.gt.f32.partialorder %v1499, 0.0
    %v1502 = vsel %vm1500, %v1496, 1.0
    %v1503 = vsel %vm1501, %v1499, 1.0
    %v1504 = vrcp.pop %v1502
    %v1505 = vrcp.pop %v1503
    %v1506 = vmul.f32 %v1492, %v1504
    %v1507 = vmul.f32 %v1493, %v1505
    %v1508 = vpack.c.bf16 %v1507, %v1506
    %v1509 = vpack.c.bf16 %v1307, %v1303
    %v1510 = vmul.f32 %v1506, %v119
    %v1511 = vmul.f32 %v1507, %v120
    %v1512 = vsel %vm392, %v1510, 0.0
    %1513 = vadd.xlane.f32.xlu0 %v1512
    %v1514 = vpop.xlane.xlu0 %1513
    %v1515 = vsel %vm392, %v1511, 0.0
    %1516 = vadd.xlane.f32.xlu0 %v1515
    %v1517 = vpop.xlane.xlu0 %1516
    %v1518 = vmul.f32 %v1506, %v122
    %v1519 = vmul.f32 %v1507, %v123
    %v1520 = vsel %vm392, %v1518, 0.0
    %1521 = vadd.xlane.f32.xlu0 %v1520
    %v1522 = vpop.xlane.xlu0 %1521
    %v1523 = vsel %vm392, %v1519, 0.0
    %1524 = vadd.xlane.f32.xlu0 %v1523
    %v1525 = vpop.xlane.xlu0 %1524
    %v1526 = vmul.f32 %v1506, %v125
    %v1527 = vmul.f32 %v1507, %v126
    %v1528 = vsel %vm392, %v1526, 0.0
    %1529 = vadd.xlane.f32.xlu0 %v1528
    %v1530 = vpop.xlane.xlu0 %1529
    %v1531 = vsel %vm392, %v1527, 0.0
    %1532 = vadd.xlane.f32.xlu0 %v1531
    %v1533 = vpop.xlane.xlu0 %1532
    %v1534 = vmul.f32 %v1506, %v128
    %v1535 = vmul.f32 %v1507, %v129
    %v1536 = vsel %vm392, %v1534, 0.0
    %1537 = vadd.xlane.f32.xlu0 %v1536
    %v1538 = vpop.xlane.xlu0 %1537
    %v1539 = vsel %vm392, %v1535, 0.0
    %1540 = vadd.xlane.f32.xlu0 %v1539
    %v1541 = vpop.xlane.xlu0 %1540
    %v1542 = vmul.f32 %v1506, %v131
    %v1543 = vmul.f32 %v1507, %v132
    %v1544 = vsel %vm392, %v1542, 0.0
    %1545 = vadd.xlane.f32.xlu0 %v1544
    %v1546 = vpop.xlane.xlu0 %1545
    %v1547 = vsel %vm392, %v1543, 0.0
    %1548 = vadd.xlane.f32.xlu0 %v1547
    %v1549 = vpop.xlane.xlu0 %1548
    %v1550 = vmul.f32 %v1506, %v134
    %v1551 = vmul.f32 %v1507, %v135
    %v1552 = vsel %vm392, %v1550, 0.0
    %1553 = vadd.xlane.f32.xlu0 %v1552
    %v1554 = vpop.xlane.xlu0 %1553
    %v1555 = vsel %vm392, %v1551, 0.0
    %1556 = vadd.xlane.f32.xlu0 %v1555
    %v1557 = vpop.xlane.xlu0 %1556
    %v1558 = vsel %vm471, %v1514, %v1522
    %v1559 = vsel %vm471, %v1517, %v1525
    %v1560 = vsel %vm474, %v1558, %v1530
    %v1561 = vsel %vm474, %v1559, %v1533
    %v1562 = vsel %vm477, %v1560, %v1538
    %v1563 = vsel %vm477, %v1561, %v1541
    %v1564 = vsel %vm480, %v1562, %v1546
    %v1565 = vsel %vm480, %v1563, %v1549
    %v1566 = vsel %vm483, %v1564, %v1554
    %v1567 = vsel %vm483, %v1565, %v1557
    %v1568 = vpack.c.bf16 %v1567, %v1566
    %v1570 = vsel %vm487, %v1568, 0
    %v1572 = vsel %vm491, %v1310, 0
    %1574 = vmatprep.subr.bf16.mxu0 0
    %1575 = vmatpush1.bf16.msra.mxu0 0
    %1576 = vmatprep.subr.bf16.mxu0 0
    %1577 = vmatpush1.bf16.msra.mxu0 0
    %1578 = vmatprep.subr.bf16.mxu0 0
    %1579 = vmatpush1.bf16.msra.mxu0 0
    %1580 = vmatprep.subr.bf16.mxu0 0
    %1581 = vmatpush1.bf16.msra.mxu0 0
    %1582 = vmatprep.subr.bf16.mxu0 0
    %1583 = vmatpush1.bf16.msra.mxu0 0
    %1584 = vmatprep.subr.bf16.mxu0 0
    %1585 = vmatpush1.bf16.msra.mxu0 0
    %1586 = vmatprep.subr.bf16.mxu0 0
    %1587 = vmatpush1.bf16.msra.mxu0 0
    %1588 = vmatprep.subr.bf16.mxu0 0
    %1589 = vmatpush1.bf16.msra.mxu0 %v1572
    %1590 = vmatprep.subr.bf16.mxu0 0
    %1591 = vmatpush2.bf16.msra.mxu0 0
    %1592 = vmatprep.subr.bf16.mxu0 0
    %1593 = vmatpush2.bf16.msra.mxu0 0
    %1594 = vmatprep.subr.bf16.mxu0 0
    %1595 = vmatpush2.bf16.msra.mxu0 0
    %1596 = vmatprep.subr.bf16.mxu0 0
    %1597 = vmatpush2.bf16.msra.mxu0 0
    %1598 = vmatprep.subr.bf16.mxu0 0
    %1599 = vmatpush2.bf16.msra.mxu0 0
    %1600 = vmatprep.subr.bf16.mxu0 0
    %1601 = vmatpush2.bf16.msra.mxu0 0
    %1602 = vmatprep.subr.bf16.mxu0 0
    %1603 = vmatpush2.bf16.msra.mxu0 0
    %1604 = vmatprep.subr.bf16.mxu0 0
    %1605 = vmatpush2.bf16.msra.mxu0 0
    %1606 = vmatprep.mubr.bf16.mxu0 0
    %1607 = vmatmul.mubr.bf16.gmra.mxu0 %v1570
    %v1608 = vpop.f32.mrf.mxu0
    %v1609 = vadd.f32 0.0, %v1608
    %v1610 = vpop.f32.mrf.mxu0
    %v1611 = vpop.f32.mrf.mxu0
    %v1612 = vadd.f32 0.0, %v1611
    %v1613 = vpop.f32.mrf.mxu0
    %1614 = vdwg.mxu0
    %v1616 = vsel %vm392, %v1508, 0
    %1618 = vmatprep.subr.bf16.mxu0 0
    %1619 = vmatpush1.bf16.msra.mxu0 0
    %1620 = vmatprep.subr.bf16.mxu0 0
    %1621 = vmatpush1.bf16.msra.mxu0 0
    %1622 = vmatprep.subr.bf16.mxu0 0
    %1623 = vmatpush1.bf16.msra.mxu0 0
    %1624 = vmatprep.subr.bf16.mxu0 0
    %1625 = vmatpush1.bf16.msra.mxu0 0
    %1626 = vmatprep.subr.bf16.mxu0 0
    %1627 = vmatpush1.bf16.msra.mxu0 0
    %1628 = vmatprep.subr.bf16.mxu0 0
    %1629 = vmatpush1.bf16.msra.mxu0 0
    %1630 = vmatprep.subr.bf16.mxu0 0
    %1631 = vmatpush1.bf16.msra.mxu0 0
    %1632 = vmatprep.subr.bf16.mxu0 0
    %1633 = vmatpush1.bf16.msra.mxu0 %v1509
    %1634 = vmatprep.subr.bf16.mxu0 0
    %1635 = vmatpush2.bf16.msra.mxu0 0
    %1636 = vmatprep.subr.bf16.mxu0 0
    %1637 = vmatpush2.bf16.msra.mxu0 0
    %1638 = vmatprep.subr.bf16.mxu0 0
    %1639 = vmatpush2.bf16.msra.mxu0 0
    %1640 = vmatprep.subr.bf16.mxu0 0
    %1641 = vmatpush2.bf16.msra.mxu0 0
    %1642 = vmatprep.subr.bf16.mxu0 0
    %1643 = vmatpush2.bf16.msra.mxu0 0
    %1644 = vmatprep.subr.bf16.mxu0 0
    %1645 = vmatpush2.bf16.msra.mxu0 0
    %1646 = vmatprep.subr.bf16.mxu0 0
    %1647 = vmatpush2.bf16.msra.mxu0 0
    %1648 = vmatprep.subr.bf16.mxu0 0
    %1649 = vmatpush2.bf16.msra.mxu0 0
    %1650 = vmatprep.mubr.bf16.mxu0 0
    %1651 = vmatmul.mubr.bf16.gmra.mxu0 %v1616
    %v1652 = vpop.f32.mrf.mxu0
    %v1653 = vadd.f32 %v1609, %v1652
    %v1654 = vpop.f32.mrf.mxu0
    %v1655 = vpop.f32.mrf.mxu0
    %v1656 = vadd.f32 %v1612, %v1655
    %v1657 = vpop.f32.mrf.mxu0
    %1658 = vdwg.mxu0
    %s1659 = scalar_lea.vmem %s8, 2
    %v1660 = vld [vmem:[%s1659] sm:$0x1]
    %v1662 = vlaneseq
    %v1663 = vshrl.u32 %v1662, 7
    %v1664 = vsub.s32 0, %v1663
    %v1665 = vrot.slane %v1660, %v1664
    %v1667 = vmul.f32 %v1653, %v1665
    %v1668 = vmul.f32 %v1656, %v1665
    %v1669 = vsel %vm175, %v1667, 0.0
    %1670 = vadd.xlane.f32.xlu0 %v1669
    %v1671 = vpop.xlane.xlu0 %1670
    %v1672 = vsel %vm175, %v1668, 0.0
    %1673 = vadd.xlane.f32.xlu0 %v1672
    %v1674 = vpop.xlane.xlu0 %1673
    %v1675 = vadd.f32 %v1671, 0.0
    %v1676 = vadd.f32 %v1674, 0.0
    %s1677 = scalar_lea.vmem %s9, 2
    %v1678 = vld [vmem:[%s1677] sm:$0x1]
    %v1680 = vlaneseq
    %v1681 = vshrl.u32 %v1680, 7
    %v1682 = vsub.s32 0, %v1681
    %v1683 = vrot.slane %v1678, %v1682
    %1684 = vrot.lane.b32.xlu0 %v1683, 64
    %v1685 = vpop.permute.xlu0 %1684
    %v1687 = vmul.f32 %v1303, %v1685
    %v1688 = vmul.f32 %v1307, %v1685
    %1691 = vrot.lane.b32.xlu0 %v1687, 64
    %v1692 = vpop.permute.xlu0 %1691
    %1693 = vrot.lane.b32.xlu0 %v1688, 64
    %v1694 = vpop.permute.xlu0 %1693
    %v1697 = vsel %vm175, %v1692, 0.0
    %1698 = vadd.xlane.f32.xlu0 %v1697
    %v1699 = vpop.xlane.xlu0 %1698
    %v1700 = vsel %vm175, %v1694, 0.0
    %1701 = vadd.xlane.f32.xlu0 %v1700
    %v1702 = vpop.xlane.xlu0 %1701
    %v1703 = vadd.f32 %v1675, %v1699
    %v1704 = vadd.f32 %v1676, %v1702
    %s1705 = scalar_lea.vmem %s7, 12
    %v1706 = vld [vmem:[%s1705] sm:$0x7]
    %1707 = vrot.lane.b32.xlu0 %v1311, 96
    %v1708 = vpop.permute.xlu0 %1707
    %v1710 = vsel %vm175, %v1708, 0
    %v1713 = vsel %vm175, %v1706, 0
    %1715 = vmatprep.subr.bf16.mxu0 0
    %1716 = vmatpush1.bf16.xpose.msra.mxu0 0
    %1717 = vmatprep.subr.bf16.mxu0 0
    %1718 = vmatpush1.bf16.xpose.msra.mxu0 0
    %1719 = vmatprep.subr.bf16.mxu0 0
    %1720 = vmatpush1.bf16.xpose.msra.mxu0 0
    %1721 = vmatprep.subr.bf16.mxu0 0
    %1722 = vmatpush1.bf16.xpose.msra.mxu0 0
    %1723 = vmatprep.subr.bf16.mxu0 0
    %1724 = vmatpush1.bf16.xpose.msra.mxu0 0
    %1725 = vmatprep.subr.bf16.mxu0 0
    %1726 = vmatpush1.bf16.xpose.msra.mxu0 0
    %1727 = vmatprep.subr.bf16.mxu0 0
    %1728 = vmatpush1.bf16.xpose.msra.mxu0 0
    %1729 = vmatprep.subr.bf16.mxu0 0
    %1730 = vmatpush1.bf16.xpose.msra.mxu0 %v1713
    %1731 = vmatprep.subr.bf16.mxu0 0
    %1732 = vmatpush2.bf16.xpose.msra.mxu0 0
    %1733 = vmatprep.subr.bf16.mxu0 0
    %1734 = vmatpush2.bf16.xpose.msra.mxu0 0
    %1735 = vmatprep.subr.bf16.mxu0 0
    %1736 = vmatpush2.bf16.xpose.msra.mxu0 0
    %1737 = vmatprep.subr.bf16.mxu0 0
    %1738 = vmatpush2.bf16.xpose.msra.mxu0 0
    %1739 = vmatprep.subr.bf16.mxu0 0
    %1740 = vmatpush2.bf16.xpose.msra.mxu0 0
    %1741 = vmatprep.subr.bf16.mxu0 0
    %1742 = vmatpush2.bf16.xpose.msra.mxu0 0
    %1743 = vmatprep.subr.bf16.mxu0 0
    %1744 = vmatpush2.bf16.xpose.msra.mxu0 0
    %1745 = vmatprep.subr.bf16.mxu0 0
    %1746 = vmatpush2.bf16.xpose.msra.mxu0 0
    %1747 = vmatprep.mubr.bf16.mxu0 0
    %1748 = vmatmul.mubr.bf16.gmra.mxu0 %v1710
    %v1749 = vpop.f32.mrf.mxu0
    %v1750 = vadd.f32 0.0, %v1749
    %v1751 = vpop.f32.mrf.mxu0
    %v1752 = vpop.f32.mrf.mxu0
    %v1753 = vadd.f32 0.0, %v1752
    %v1754 = vpop.f32.mrf.mxu0
    %1755 = vdwg.mxu0
    %1757 = vset.pattern.permute.xlu0 0
    %1758 = vperm.xlu0 %1757, %v1750
    %v1759 = vpop.permute.xlu0 %1758
    %1762 = vset.pattern.permute.xlu0 0
    %1763 = vperm.xlu0 %1762, %v1753
    %v1764 = vpop.permute.xlu0 %1763
    %v1766 = vmul.f32 %v119, %v1759
    %v1767 = vmul.f32 %v120, %v1764
    %1768 = vrot.lane.b32.xlu0 %v1311, 32
    %v1769 = vpop.permute.xlu0 %1768
    %v1771 = vsel %vm175, %v1769, 0
    %1773 = vmatprep.subr.bf16.mxu0 0
    %1774 = vmatpush1.bf16.xpose.msra.mxu0 0
    %1775 = vmatprep.subr.bf16.mxu0 0
    %1776 = vmatpush1.bf16.xpose.msra.mxu0 0
    %1777 = vmatprep.subr.bf16.mxu0 0
    %1778 = vmatpush1.bf16.xpose.msra.mxu0 0
    %1779 = vmatprep.subr.bf16.mxu0 0
    %1780 = vmatpush1.bf16.xpose.msra.mxu0 0
    %1781 = vmatprep.subr.bf16.mxu0 0
    %1782 = vmatpush1.bf16.xpose.msra.mxu0 0
    %1783 = vmatprep.subr.bf16.mxu0 0
    %1784 = vmatpush1.bf16.xpose.msra.mxu0 0
    %1785 = vmatprep.subr.bf16.mxu0 0
    %1786 = vmatpush1.bf16.xpose.msra.mxu0 0
    %1787 = vmatprep.subr.bf16.mxu0 0
    %1788 = vmatpush1.bf16.xpose.msra.mxu0 %v1771
    %1789 = vmatprep.subr.bf16.mxu0 0
    %1790 = vmatpush2.bf16.xpose.msra.mxu0 0
    %1791 = vmatprep.subr.bf16.mxu0 0
    %1792 = vmatpush2.bf16.xpose.msra.mxu0 0
    %1793 = vmatprep.subr.bf16.mxu0 0
    %1794 = vmatpush2.bf16.xpose.msra.mxu0 0
    %1795 = vmatprep.subr.bf16.mxu0 0
    %1796 = vmatpush2.bf16.xpose.msra.mxu0 0
    %1797 = vmatprep.subr.bf16.mxu0 0
    %1798 = vmatpush2.bf16.xpose.msra.mxu0 0
    %1799 = vmatprep.subr.bf16.mxu0 0
    %1800 = vmatpush2.bf16.xpose.msra.mxu0 0
    %1801 = vmatprep.subr.bf16.mxu0 0
    %1802 = vmatpush2.bf16.xpose.msra.mxu0 0
    %1803 = vmatprep.subr.bf16.mxu0 0
    %1804 = vmatpush2.bf16.xpose.msra.mxu0 0
    %1805 = vmatprep.mubr.bf16.mxu0 0
    %1806 = vmatmul.mubr.bf16.gmra.mxu0 %v1710
    %v1807 = vpop.f32.mrf.mxu0
    %v1808 = vadd.f32 %v1766, %v1807
    %v1809 = vpop.f32.mrf.mxu0
    %v1810 = vpop.f32.mrf.mxu0
    %v1811 = vadd.f32 %v1767, %v1810
    %v1812 = vpop.f32.mrf.mxu0
    %1813 = vdwg.mxu0
    %1814 = vset.pattern.permute.xlu0 1
    %1815 = vperm.xlu0 %1814, %v1750
    %v1816 = vpop.permute.xlu0 %1815
    %1818 = vset.pattern.permute.xlu0 1
    %1819 = vperm.xlu0 %1818, %v1753
    %v1820 = vpop.permute.xlu0 %1819
    %v1822 = vmul.f32 %v122, %v1816
    %v1823 = vmul.f32 %v123, %v1820
    %v1824 = vadd.f32 %v1808, %v1822
    %v1825 = vadd.f32 %v1811, %v1823
    %1826 = vset.pattern.permute.xlu0 2
    %1827 = vperm.xlu0 %1826, %v1750
    %v1828 = vpop.permute.xlu0 %1827
    %1830 = vset.pattern.permute.xlu0 2
    %1831 = vperm.xlu0 %1830, %v1753
    %v1832 = vpop.permute.xlu0 %1831
    %v1834 = vmul.f32 %v125, %v1828
    %v1835 = vmul.f32 %v126, %v1832
    %v1836 = vadd.f32 %v1824, %v1834
    %v1837 = vadd.f32 %v1825, %v1835
    %1838 = vset.pattern.permute.xlu0 3
    %1839 = vperm.xlu0 %1838, %v1750
    %v1840 = vpop.permute.xlu0 %1839
    %1842 = vset.pattern.permute.xlu0 3
    %1843 = vperm.xlu0 %1842, %v1753
    %v1844 = vpop.permute.xlu0 %1843
    %v1846 = vmul.f32 %v128, %v1840
    %v1847 = vmul.f32 %v129, %v1844
    %v1848 = vadd.f32 %v1836, %v1846
    %v1849 = vadd.f32 %v1837, %v1847
    %1850 = vset.pattern.permute.xlu0 4
    %1851 = vperm.xlu0 %1850, %v1750
    %v1852 = vpop.permute.xlu0 %1851
    %1854 = vset.pattern.permute.xlu0 4
    %1855 = vperm.xlu0 %1854, %v1753
    %v1856 = vpop.permute.xlu0 %1855
    %v1858 = vmul.f32 %v131, %v1852
    %v1859 = vmul.f32 %v132, %v1856
    %v1860 = vadd.f32 %v1848, %v1858
    %v1861 = vadd.f32 %v1849, %v1859
    %1862 = vset.pattern.permute.xlu0 5
    %1863 = vperm.xlu0 %1862, %v1750
    %v1864 = vpop.permute.xlu0 %1863
    %1866 = vset.pattern.permute.xlu0 5
    %1867 = vperm.xlu0 %1866, %v1753
    %v1868 = vpop.permute.xlu0 %1867
    %v1870 = vmul.f32 %v134, %v1864
    %v1871 = vmul.f32 %v135, %v1868
    %v1872 = vadd.f32 %v1860, %v1870
    %v1873 = vadd.f32 %v1861, %v1871
    %v1874 = vadd.f32 %v1872, %v117
    %v1875 = vadd.f32 %v1873, %v118
    %v1876 = vsel %vm392, %v1874, -inf
    %1877 = vmax.xlane.f32.xlu0 %v1876
    %v1878 = vpop.xlane.xlu0 %1877
    %v1879 = vsel %vm392, %v1875, -inf
    %1880 = vmax.xlane.f32.xlu0 %v1879
    %v1881 = vpop.xlane.xlu0 %1880
    %v1882 = vsub.f32 %v1874, %v1878
    %v1883 = vsub.f32 %v1875, %v1881
    %v1884 = vmul.f32 %v1882, 1.442695
    %v1885 = vpow.pop %v1884
    %v1886 = vmul.f32 %v1883, 1.442695
    %v1887 = vpow.pop %v1886
    %v1888 = vmul.f32 %v1885, %v115
    %v1889 = vmul.f32 %v1887, %v116
    %v1890 = vsel %vm392, %v1888, 0.0
    %1891 = vadd.xlane.f32.xlu0 %v1890
    %v1892 = vpop.xlane.xlu0 %1891
    %v1893 = vsel %vm392, %v1889, 0.0
    %1894 = vadd.xlane.f32.xlu0 %v1893
    %v1895 = vpop.xlane.xlu0 %1894
    %vm1896 = vcmp.gt.f32.partialorder %v1892, 0.0
    %vm1897 = vcmp.gt.f32.partialorder %v1895, 0.0
    %v1898 = vsel %vm1896, %v1892, 1.0
    %v1899 = vsel %vm1897, %v1895, 1.0
    %v1900 = vrcp.pop %v1898
    %v1901 = vrcp.pop %v1899
    %v1902 = vmul.f32 %v1888, %v1900
    %v1903 = vmul.f32 %v1889, %v1901
    %v1904 = vpack.c.bf16 %v1903, %v1902
    %v1905 = vmul.f32 %v1902, %v119
    %v1906 = vmul.f32 %v1903, %v120
    %v1907 = vsel %vm392, %v1905, 0.0
    %1908 = vadd.xlane.f32.xlu0 %v1907
    %v1909 = vpop.xlane.xlu0 %1908
    %v1910 = vsel %vm392, %v1906, 0.0
    %1911 = vadd.xlane.f32.xlu0 %v1910
    %v1912 = vpop.xlane.xlu0 %1911
    %v1913 = vmul.f32 %v1902, %v122
    %v1914 = vmul.f32 %v1903, %v123
    %v1915 = vsel %vm392, %v1913, 0.0
    %1916 = vadd.xlane.f32.xlu0 %v1915
    %v1917 = vpop.xlane.xlu0 %1916
    %v1918 = vsel %vm392, %v1914, 0.0
    %1919 = vadd.xlane.f32.xlu0 %v1918
    %v1920 = vpop.xlane.xlu0 %1919
    %v1921 = vmul.f32 %v1902, %v125
    %v1922 = vmul.f32 %v1903, %v126
    %v1923 = vsel %vm392, %v1921, 0.0
    %1924 = vadd.xlane.f32.xlu0 %v1923
    %v1925 = vpop.xlane.xlu0 %1924
    %v1926 = vsel %vm392, %v1922, 0.0
    %1927 = vadd.xlane.f32.xlu0 %v1926
    %v1928 = vpop.xlane.xlu0 %1927
    %v1929 = vmul.f32 %v1902, %v128
    %v1930 = vmul.f32 %v1903, %v129
    %v1931 = vsel %vm392, %v1929, 0.0
    %1932 = vadd.xlane.f32.xlu0 %v1931
    %v1933 = vpop.xlane.xlu0 %1932
    %v1934 = vsel %vm392, %v1930, 0.0
    %1935 = vadd.xlane.f32.xlu0 %v1934
    %v1936 = vpop.xlane.xlu0 %1935
    %v1937 = vmul.f32 %v1902, %v131
    %v1938 = vmul.f32 %v1903, %v132
    %v1939 = vsel %vm392, %v1937, 0.0
    %1940 = vadd.xlane.f32.xlu0 %v1939
    %v1941 = vpop.xlane.xlu0 %1940
    %v1942 = vsel %vm392, %v1938, 0.0
    %1943 = vadd.xlane.f32.xlu0 %v1942
    %v1944 = vpop.xlane.xlu0 %1943
    %v1945 = vmul.f32 %v1902, %v134
    %v1946 = vmul.f32 %v1903, %v135
    %v1947 = vsel %vm392, %v1945, 0.0
    %1948 = vadd.xlane.f32.xlu0 %v1947
    %v1949 = vpop.xlane.xlu0 %1948
    %v1950 = vsel %vm392, %v1946, 0.0
    %1951 = vadd.xlane.f32.xlu0 %v1950
    %v1952 = vpop.xlane.xlu0 %1951
    %v1953 = vsel %vm471, %v1909, %v1917
    %v1954 = vsel %vm471, %v1912, %v1920
    %v1955 = vsel %vm474, %v1953, %v1925
    %v1956 = vsel %vm474, %v1954, %v1928
    %v1957 = vsel %vm477, %v1955, %v1933
    %v1958 = vsel %vm477, %v1956, %v1936
    %v1959 = vsel %vm480, %v1957, %v1941
    %v1960 = vsel %vm480, %v1958, %v1944
    %v1961 = vsel %vm483, %v1959, %v1949
    %v1962 = vsel %vm483, %v1960, %v1952
    %v1963 = vpack.c.bf16 %v1962, %v1961
    %v1965 = vsel %vm487, %v1963, 0
    %v1967 = vsel %vm491, %v1706, 0
    %1969 = vmatprep.subr.bf16.mxu0 0
    %1970 = vmatpush1.bf16.msra.mxu0 0
    %1971 = vmatprep.subr.bf16.mxu0 0
    %1972 = vmatpush1.bf16.msra.mxu0 0
    %1973 = vmatprep.subr.bf16.mxu0 0
    %1974 = vmatpush1.bf16.msra.mxu0 0
    %1975 = vmatprep.subr.bf16.mxu0 0
    %1976 = vmatpush1.bf16.msra.mxu0 0
    %1977 = vmatprep.subr.bf16.mxu0 0
    %1978 = vmatpush1.bf16.msra.mxu0 0
    %1979 = vmatprep.subr.bf16.mxu0 0
    %1980 = vmatpush1.bf16.msra.mxu0 0
    %1981 = vmatprep.subr.bf16.mxu0 0
    %1982 = vmatpush1.bf16.msra.mxu0 0
    %1983 = vmatprep.subr.bf16.mxu0 0
    %1984 = vmatpush1.bf16.msra.mxu0 %v1967
    %1985 = vmatprep.subr.bf16.mxu0 0
    %1986 = vmatpush2.bf16.msra.mxu0 0
    %1987 = vmatprep.subr.bf16.mxu0 0
    %1988 = vmatpush2.bf16.msra.mxu0 0
    %1989 = vmatprep.subr.bf16.mxu0 0
    %1990 = vmatpush2.bf16.msra.mxu0 0
    %1991 = vmatprep.subr.bf16.mxu0 0
    %1992 = vmatpush2.bf16.msra.mxu0 0
    %1993 = vmatprep.subr.bf16.mxu0 0
    %1994 = vmatpush2.bf16.msra.mxu0 0
    %1995 = vmatprep.subr.bf16.mxu0 0
    %1996 = vmatpush2.bf16.msra.mxu0 0
    %1997 = vmatprep.subr.bf16.mxu0 0
    %1998 = vmatpush2.bf16.msra.mxu0 0
    %1999 = vmatprep.subr.bf16.mxu0 0
    %2000 = vmatpush2.bf16.msra.mxu0 0
    %2001 = vmatprep.mubr.bf16.mxu0 0
    %2002 = vmatmul.mubr.bf16.gmra.mxu0 %v1965
    %v2003 = vpop.f32.mrf.mxu0
    %v2004 = vadd.f32 0.0, %v2003
    %v2005 = vpop.f32.mrf.mxu0
    %v2006 = vpop.f32.mrf.mxu0
    %v2007 = vadd.f32 0.0, %v2006
    %v2008 = vpop.f32.mrf.mxu0
    %2009 = vdwg.mxu0
    %2011 = vrot.lane.b32.xlu0 %v1509, 96
    %v2012 = vpop.permute.xlu0 %2011
    %v2015 = vsel %vm392, %v1904, 0
    %2017 = vmatprep.subr.bf16.mxu0 0
    %2018 = vmatpush1.bf16.msra.mxu0 0
    %2019 = vmatprep.subr.bf16.mxu0 0
    %2020 = vmatpush1.bf16.msra.mxu0 0
    %2021 = vmatprep.subr.bf16.mxu0 0
    %2022 = vmatpush1.bf16.msra.mxu0 0
    %2023 = vmatprep.subr.bf16.mxu0 0
    %2024 = vmatpush1.bf16.msra.mxu0 0
    %2025 = vmatprep.subr.bf16.mxu0 0
    %2026 = vmatpush1.bf16.msra.mxu0 0
    %2027 = vmatprep.subr.bf16.mxu0 0
    %2028 = vmatpush1.bf16.msra.mxu0 0
    %2029 = vmatprep.subr.bf16.mxu0 0
    %2030 = vmatpush1.bf16.msra.mxu0 0
    %2031 = vmatprep.subr.bf16.mxu0 0
    %2032 = vmatpush1.bf16.msra.mxu0 %v2012
    %2033 = vmatprep.subr.bf16.mxu0 0
    %2034 = vmatpush2.bf16.msra.mxu0 0
    %2035 = vmatprep.subr.bf16.mxu0 0
    %2036 = vmatpush2.bf16.msra.mxu0 0
    %2037 = vmatprep.subr.bf16.mxu0 0
    %2038 = vmatpush2.bf16.msra.mxu0 0
    %2039 = vmatprep.subr.bf16.mxu0 0
    %2040 = vmatpush2.bf16.msra.mxu0 0
    %2041 = vmatprep.subr.bf16.mxu0 0
    %2042 = vmatpush2.bf16.msra.mxu0 0
    %2043 = vmatprep.subr.bf16.mxu0 0
    %2044 = vmatpush2.bf16.msra.mxu0 0
    %2045 = vmatprep.subr.bf16.mxu0 0
    %2046 = vmatpush2.bf16.msra.mxu0 0
    %2047 = vmatprep.subr.bf16.mxu0 0
    %2048 = vmatpush2.bf16.msra.mxu0 0
    %2049 = vmatprep.mubr.bf16.mxu0 0
    %2050 = vmatmul.mubr.bf16.gmra.mxu0 %v2015
    %v2051 = vpop.f32.mrf.mxu0
    %v2052 = vadd.f32 %v2004, %v2051
    %v2053 = vpop.f32.mrf.mxu0
    %v2054 = vpop.f32.mrf.mxu0
    %v2055 = vadd.f32 %v2007, %v2054
    %v2056 = vpop.f32.mrf.mxu0
    %2057 = vdwg.mxu0
    %s2058 = scalar_lea.vmem %s8, 3
    %v2059 = vld [vmem:[%s2058] sm:$0x1]
    %v2061 = vlaneseq
    %v2062 = vshrl.u32 %v2061, 7
    %v2063 = vsub.s32 0, %v2062
    %v2064 = vrot.slane %v2059, %v2063
    %v2066 = vmul.f32 %v2052, %v2064
    %v2067 = vmul.f32 %v2055, %v2064
    %v2068 = vsel %vm175, %v2066, 0.0
    %2069 = vadd.xlane.f32.xlu0 %v2068
    %v2070 = vpop.xlane.xlu0 %2069
    %v2071 = vsel %vm175, %v2067, 0.0
    %2072 = vadd.xlane.f32.xlu0 %v2071
    %v2073 = vpop.xlane.xlu0 %2072
    %v2074 = vadd.f32 %v1703, %v2070
    %v2075 = vadd.f32 %v1704, %v2073
    %s2076 = scalar_lea.vmem %s9, 3
    %v2077 = vld [vmem:[%s2076] sm:$0x1]
    %v2079 = vlaneseq
    %v2080 = vshrl.u32 %v2079, 7
    %v2081 = vsub.s32 0, %v2080
    %v2082 = vrot.slane %v2077, %v2081
    %2083 = vrot.lane.b32.xlu0 %v2082, 96
    %v2084 = vpop.permute.xlu0 %2083
    %v2086 = vmul.f32 %v1303, %v2084
    %v2087 = vmul.f32 %v1307, %v2084
    %2090 = vrot.lane.b32.xlu0 %v2086, 32
    %v2091 = vpop.permute.xlu0 %2090
    %2092 = vrot.lane.b32.xlu0 %v2087, 32
    %v2093 = vpop.permute.xlu0 %2092
    %v2096 = vsel %vm175, %v2091, 0.0
    %2097 = vadd.xlane.f32.xlu0 %v2096
    %v2098 = vpop.xlane.xlu0 %2097
    %v2099 = vsel %vm175, %v2093, 0.0
    %2100 = vadd.xlane.f32.xlu0 %v2099
    %v2101 = vpop.xlane.xlu0 %2100
    %v2102 = vadd.f32 %v2074, %v2098
    %v2103 = vadd.f32 %v2075, %v2101
    %v2104 = vxor.u32 %v2102, 2147483648
    %v2105 = vxor.u32 %v2103, 2147483648
    %v2106 = vmul.f32 %v2104, 1.442695
    %v2107 = vpow.pop %v2106
    %v2108 = vmul.f32 %v2105, 1.442695
    %v2109 = vpow.pop %v2108
    %v2110 = vadd.f32 %v2107, 1.0
    %v2111 = vadd.f32 %v2109, 1.0
    %v2112 = vrcp.pop %v2110
    %v2113 = vmul.f32 1.0, %v2112
    %v2114 = vrcp.pop %v2111
    %v2115 = vmul.f32 1.0, %v2114
    %s2116 = scalar_lea.vmem %s11, 1
    %v2117 = vld [vmem:[%s2116] sm:$0x1]
    %v2118 = vmul.f32 %v2113, %v1303
    %v2119 = vmul.f32 %v2115, %v1307
    %v2120 = vsub.f32 1.0, %v2113
    %v2121 = vsub.f32 1.0, %v2115
    %v2122 = vmul.f32 %v2120, %v1653
    %v2123 = vmul.f32 %v2121, %v1656
    %2126 = vrot.lane.b32.xlu0 %v2122, 64
    %v2127 = vpop.permute.xlu0 %2126
    %2128 = vrot.lane.b32.xlu0 %v2123, 64
    %v2129 = vpop.permute.xlu0 %2128
    %v2132 = vadd.f32 %v2118, %v2127
    %v2133 = vadd.f32 %v2119, %v2129
    %v2134 = vpack.c.bf16 %v2133, %v2132
    %s2135 = scalar_lea.vmem [#allocation10], 32
    %v2136 = vld [vmem:[%s2135] sm:$0xf]
    %v2137 = vld [vmem:[%s2135 + $0x4] sm:$0xf]
    %v2138 = vld [vmem:[%s2135 + $0x8] sm:$0xf]
    %v2139 = vld [vmem:[%s2135 + $0xc] sm:$0xf]
    %2141 = vrot.lane.b32.xlu0 %v2134, 64
    %v2142 = vpop.permute.xlu0 %2141
    %v2147 = vunpack.c.l.b16 %v2136
    %v2148 = vunpack.c.l.b16 %v2137
    %v2149 = vunpack.c.l.b16 %v2138
    %v2150 = vunpack.c.l.b16 %v2139
    %v2151 = vpack.c.b16 %v2148, %v2147
    %v2152 = vpack.c.b16 %v2150, %v2149
    %v2156 = vsel %vm175, %v2142, 0
    %2158 = vmatprep.subr.bf16.mxu0 0
    %2159 = vmatpush1.bf16.msra.mxu0 0
    %2160 = vmatprep.subr.bf16.mxu0 0
    %2161 = vmatpush1.bf16.msra.mxu0 0
    %2162 = vmatprep.subr.bf16.mxu0 0
    %2163 = vmatpush1.bf16.msra.mxu0 0
    %2164 = vmatprep.subr.bf16.mxu0 0
    %2165 = vmatpush1.bf16.msra.mxu0 0
    %2166 = vmatprep.subr.bf16.mxu0 0
    %2167 = vmatpush1.bf16.msra.mxu0 0
    %2168 = vmatprep.subr.bf16.mxu0 0
    %2169 = vmatpush1.bf16.msra.mxu0 0
    %2170 = vmatprep.subr.bf16.mxu0 0
    %2171 = vmatpush1.bf16.msra.mxu0 %v2152
    %2172 = vmatprep.subr.bf16.mxu0 0
    %2173 = vmatpush1.bf16.msra.mxu0 %v2151
    %2174 = vmatprep.subr.bf16.mxu0 0
    %2175 = vmatpush2.bf16.msra.mxu0 0
    %2176 = vmatprep.subr.bf16.mxu0 0
    %2177 = vmatpush2.bf16.msra.mxu0 0
    %2178 = vmatprep.subr.bf16.mxu0 0
    %2179 = vmatpush2.bf16.msra.mxu0 0
    %2180 = vmatprep.subr.bf16.mxu0 0
    %2181 = vmatpush2.bf16.msra.mxu0 0
    %2182 = vmatprep.subr.bf16.mxu0 0
    %2183 = vmatpush2.bf16.msra.mxu0 0
    %2184 = vmatprep.subr.bf16.mxu0 0
    %2185 = vmatpush2.bf16.msra.mxu0 0
    %2186 = vmatprep.subr.bf16.mxu0 0
    %2187 = vmatpush2.bf16.msra.mxu0 0
    %2188 = vmatprep.subr.bf16.mxu0 0
    %2189 = vmatpush2.bf16.msra.mxu0 0
    %2190 = vmatprep.mubr.bf16.mxu0 0
    %2191 = vmatmul.mubr.bf16.gmra.mxu0 %v2156
    %v2192 = vpop.f32.mrf.mxu0
    %v2193 = vadd.f32 0.0, %v2192
    %v2194 = vpop.f32.mrf.mxu0
    %v2195 = vpop.f32.mrf.mxu0
    %v2196 = vadd.f32 0.0, %v2195
    %v2197 = vpop.f32.mrf.mxu0
    %2198 = vdwg.mxu0
    %v2200 = vlaneseq
    %v2201 = vshrl.u32 %v2200, 7
    %v2202 = vsub.s32 0, %v2201
    %v2203 = vrot.slane %v2117, %v2202
    %v2205 = vadd.f32 %v2203, %v2193
    %v2206 = vadd.f32 %v2203, %v2196
    %v2207 = vmul.f32 %v2120, %v2052
    %v2208 = vmul.f32 %v2121, %v2055
    %2211 = vrot.lane.b32.xlu0 %v2207, 96
    %v2212 = vpop.permute.xlu0 %2211
    %2213 = vrot.lane.b32.xlu0 %v2208, 96
    %v2214 = vpop.permute.xlu0 %2213
    %v2217 = vadd.f32 %v2118, %v2212
    %v2218 = vadd.f32 %v2119, %v2214
    %v2219 = vpack.c.bf16 %v2218, %v2217
    %s2220 = scalar_lea.vmem [#allocation10], 48
    %v2221 = vld [vmem:[%s2220] sm:$0xf]
    %v2222 = vld [vmem:[%s2220 + $0x4] sm:$0xf]
    %v2223 = vld [vmem:[%s2220 + $0x8] sm:$0xf]
    %v2224 = vld [vmem:[%s2220 + $0xc] sm:$0xf]
    %2226 = vrot.lane.b32.xlu0 %v2219, 32
    %v2227 = vpop.permute.xlu0 %2226
    %v2232 = vunpack.c.l.b16 %v2221
    %v2233 = vunpack.c.l.b16 %v2222
    %v2234 = vunpack.c.l.b16 %v2223
    %v2235 = vunpack.c.l.b16 %v2224
    %v2236 = vpack.c.b16 %v2233, %v2232
    %v2237 = vpack.c.b16 %v2235, %v2234
    %v2241 = vsel %vm175, %v2227, 0
    %2243 = vmatprep.subr.bf16.mxu0 0
    %2244 = vmatpush1.bf16.msra.mxu0 0
    %2245 = vmatprep.subr.bf16.mxu0 0
    %2246 = vmatpush1.bf16.msra.mxu0 0
    %2247 = vmatprep.subr.bf16.mxu0 0
    %2248 = vmatpush1.bf16.msra.mxu0 0
    %2249 = vmatprep.subr.bf16.mxu0 0
    %2250 = vmatpush1.bf16.msra.mxu0 0
    %2251 = vmatprep.subr.bf16.mxu0 0
    %2252 = vmatpush1.bf16.msra.mxu0 0
    %2253 = vmatprep.subr.bf16.mxu0 0
    %2254 = vmatpush1.bf16.msra.mxu0 0
    %2255 = vmatprep.subr.bf16.mxu0 0
    %2256 = vmatpush1.bf16.msra.mxu0 %v2237
    %2257 = vmatprep.subr.bf16.mxu0 0
    %2258 = vmatpush1.bf16.msra.mxu0 %v2236
    %2259 = vmatprep.subr.bf16.mxu0 0
    %2260 = vmatpush2.bf16.msra.mxu0 0
    %2261 = vmatprep.subr.bf16.mxu0 0
    %2262 = vmatpush2.bf16.msra.mxu0 0
    %2263 = vmatprep.subr.bf16.mxu0 0
    %2264 = vmatpush2.bf16.msra.mxu0 0
    %2265 = vmatprep.subr.bf16.mxu0 0
    %2266 = vmatpush2.bf16.msra.mxu0 0
    %2267 = vmatprep.subr.bf16.mxu0 0
    %2268 = vmatpush2.bf16.msra.mxu0 0
    %2269 = vmatprep.subr.bf16.mxu0 0
    %2270 = vmatpush2.bf16.msra.mxu0 0
    %2271 = vmatprep.subr.bf16.mxu0 0
    %2272 = vmatpush2.bf16.msra.mxu0 0
    %2273 = vmatprep.subr.bf16.mxu0 0
    %2274 = vmatpush2.bf16.msra.mxu0 0
    %2275 = vmatprep.mubr.bf16.mxu0 0
    %2276 = vmatmul.mubr.bf16.gmra.mxu0 %v2241
    %v2277 = vpop.f32.mrf.mxu0
    %v2278 = vadd.f32 0.0, %v2277
    %v2279 = vpop.f32.mrf.mxu0
    %v2280 = vpop.f32.mrf.mxu0
    %v2281 = vadd.f32 0.0, %v2280
    %v2282 = vpop.f32.mrf.mxu0
    %2283 = vdwg.mxu0
    %v2284 = vadd.f32 %v2205, %v2278
    %v2285 = vadd.f32 %v2206, %v2281
    %v2286 = vmul.f32 %v2284, 0.01
    %v2287 = vmul.f32 %v2285, 0.01
    %v2288 = vmax.f32 %v2284, %v2286
    %v2289 = vmax.f32 %v2285, %v2287
    %s2290 = scalar_lea.vmem %s12, 1
    %v2291 = vld [vmem:[%s2290] sm:$0x1]
    %v2293 = vlaneseq
    %v2294 = vshrl.u32 %v2293, 7
    %v2295 = vsub.s32 0, %v2294
    %v2296 = vrot.slane %v2291, %v2295
    %v2298 = vmul.f32 %v2288, %v2296
    %v2299 = vmul.f32 %v2289, %v2296
    %s2300 = scalar_lea.vmem %s13, 1
    %v2301 = vld [vmem:[%s2300] sm:$0x1]
    %v2303 = vlaneseq
    %v2304 = vshrl.u32 %v2303, 7
    %v2305 = vsub.s32 0, %v2304
    %v2306 = vrot.slane %v2301, %v2305
    %v2308 = vadd.f32 %v2298, %v2306
    %v2309 = vadd.f32 %v2299, %v2306
    %v2310 = vsel %vm175, %v2308, -inf
    %v2311 = vrot.slane %v2310, 4
    %v2312 = vmax.f32 %v2310, %v2311
    %v2313 = vrot.slane %v2312, 2
    %v2314 = vmax.f32 %v2312, %v2313
    %v2315 = vrot.slane %v2314, 1
    %v2316 = vmax.f32 %v2314, %v2315
    %v2317 = vsel %vm175, %v2309, -inf
    %v2318 = vrot.slane %v2317, 4
    %v2319 = vmax.f32 %v2317, %v2318
    %v2320 = vrot.slane %v2319, 2
    %v2321 = vmax.f32 %v2319, %v2320
    %v2322 = vrot.slane %v2321, 1
    %v2323 = vmax.f32 %v2321, %v2322
    %v2324 = vsel %vm175, %v2308, 0.0
    %v2325 = vrot.slane %v2324, 4
    %v2326 = vadd.f32 %v2324, %v2325
    %v2327 = vrot.slane %v2326, 2
    %v2328 = vadd.f32 %v2326, %v2327
    %v2329 = vrot.slane %v2328, 1
    %v2330 = vadd.f32 %v2328, %v2329
    %v2331 = vsel %vm175, %v2309, 0.0
    %v2332 = vrot.slane %v2331, 4
    %v2333 = vadd.f32 %v2331, %v2332
    %v2334 = vrot.slane %v2333, 2
    %v2335 = vadd.f32 %v2333, %v2334
    %v2336 = vrot.slane %v2335, 1
    %v2337 = vadd.f32 %v2335, %v2336
    %v2338 = vmul.f32 %v2330, 0.125
    %v2339 = vmul.f32 %v2337, 0.125
    %v2340 = vadd.f32 %v2316, 0.0
    %v2341 = vadd.f32 %v2323, 0.0
    %v2342 = vadd.f32 %v2338, 0.0
    %v2343 = vadd.f32 %v2339, 0.0
    %v2344 = vpack.c.bf16 %v2309, %v2308
    %s2345 = scalar_lea.vmem [#allocation8], 64
    %v2346 = vld [vmem:[%s2345] sm:$0xff]
    %v2347 = vld [vmem:[%s2345 + $0x8] sm:$0xff]
    %v2348 = vld [vmem:[%s2345 + $0x10] sm:$0xff]
    %v2349 = vld [vmem:[%s2345 + $0x18] sm:$0xff]
    %s2350 = scalar_lea.vmem %s6, 4
    %v2351 = vld [vmem:[%s2350] sm:$0x3]
    %v2353 = vlaneseq
    %v2354 = vshrl.u32 %v2353, 7
    %v2355 = vsub.s32 0, %v2354
    %v2356 = vrot.slane %v2351, %v2355
    %v2357 = vlaneseq
    %v2358 = vshrl.u32 %v2357, 7
    %v2359 = vsub.s32 1, %v2358
    %v2360 = vrot.slane %v2351, %v2359
    %v2367 = vunpack.c.l.b16 %v2346
    %v2368 = vunpack.c.h.b16 %v2346
    %v2369 = vunpack.c.l.b16 %v2347
    %v2370 = vunpack.c.h.b16 %v2347
    %v2371 = vunpack.c.l.b16 %v2348
    %v2372 = vunpack.c.h.b16 %v2348
    %v2373 = vunpack.c.l.b16 %v2349
    %v2374 = vunpack.c.h.b16 %v2349
    %v2375 = vpack.c.b16 %v2369, %v2367
    %v2376 = vpack.c.b16 %v2370, %v2368
    %v2377 = vpack.c.b16 %v2373, %v2371
    %v2378 = vpack.c.b16 %v2374, %v2372
    %v2384 = vsel %vm175, %v2344, 0
    %2386 = vmatprep.subr.bf16.mxu0 0
    %2387 = vmatpush1.bf16.msra.mxu0 0
    %2388 = vmatprep.subr.bf16.mxu0 0
    %2389 = vmatpush1.bf16.msra.mxu0 0
    %2390 = vmatprep.subr.bf16.mxu0 0
    %2391 = vmatpush1.bf16.msra.mxu0 0
    %2392 = vmatprep.subr.bf16.mxu0 0
    %2393 = vmatpush1.bf16.msra.mxu0 0
    %2394 = vmatprep.subr.bf16.mxu0 0
    %2395 = vmatpush1.bf16.msra.mxu0 0
    %2396 = vmatprep.subr.bf16.mxu0 0
    %2397 = vmatpush1.bf16.msra.mxu0 0
    %2398 = vmatprep.subr.bf16.mxu0 %v2378
    %2399 = vmatpush1.bf16.msra.mxu0 %v2377
    %2400 = vmatprep.subr.bf16.mxu0 %v2376
    %2401 = vmatpush1.bf16.msra.mxu0 %v2375
    %2402 = vmatprep.subr.bf16.mxu0 0
    %2403 = vmatpush2.bf16.msra.mxu0 0
    %2404 = vmatprep.subr.bf16.mxu0 0
    %2405 = vmatpush2.bf16.msra.mxu0 0
    %2406 = vmatprep.subr.bf16.mxu0 0
    %2407 = vmatpush2.bf16.msra.mxu0 0
    %2408 = vmatprep.subr.bf16.mxu0 0
    %2409 = vmatpush2.bf16.msra.mxu0 0
    %2410 = vmatprep.subr.bf16.mxu0 0
    %2411 = vmatpush2.bf16.msra.mxu0 0
    %2412 = vmatprep.subr.bf16.mxu0 0
    %2413 = vmatpush2.bf16.msra.mxu0 0
    %2414 = vmatprep.subr.bf16.mxu0 0
    %2415 = vmatpush2.bf16.msra.mxu0 0
    %2416 = vmatprep.subr.bf16.mxu0 0
    %2417 = vmatpush2.bf16.msra.mxu0 0
    %2418 = vmatprep.mubr.bf16.mxu0 0
    %2419 = vmatmul.mubr.bf16.gmra.mxu0 %v2384
    %v2420 = vpop.f32.mrf.mxu0
    %v2421 = vadd.f32 %v2356, %v2420
    %v2422 = vpop.f32.mrf.mxu0
    %v2423 = vadd.f32 %v2360, %v2422
    %v2424 = vpop.f32.mrf.mxu0
    %v2425 = vadd.f32 %v2356, %v2424
    %v2426 = vpop.f32.mrf.mxu0
    %v2427 = vadd.f32 %v2360, %v2426
    %2428 = vdwg.mxu0
    %s2429 = scalar_lea.vmem %s7, 16
    %v2430 = vld [vmem:[%s2429] sm:$0x7]
    %v2431 = vpack.c.bf16 %v2425, %v2421
    %v2433 = vsel %vm175, %v2431, 0
    %v2436 = vsel %vm175, %v2430, 0
    %2438 = vmatprep.subr.bf16.mxu0 0
    %2439 = vmatpush1.bf16.xpose.msra.mxu0 0
    %2440 = vmatprep.subr.bf16.mxu0 0
    %2441 = vmatpush1.bf16.xpose.msra.mxu0 0
    %2442 = vmatprep.subr.bf16.mxu0 0
    %2443 = vmatpush1.bf16.xpose.msra.mxu0 0
    %2444 = vmatprep.subr.bf16.mxu0 0
    %2445 = vmatpush1.bf16.xpose.msra.mxu0 0
    %2446 = vmatprep.subr.bf16.mxu0 0
    %2447 = vmatpush1.bf16.xpose.msra.mxu0 0
    %2448 = vmatprep.subr.bf16.mxu0 0
    %2449 = vmatpush1.bf16.xpose.msra.mxu0 0
    %2450 = vmatprep.subr.bf16.mxu0 0
    %2451 = vmatpush1.bf16.xpose.msra.mxu0 0
    %2452 = vmatprep.subr.bf16.mxu0 0
    %2453 = vmatpush1.bf16.xpose.msra.mxu0 %v2436
    %2454 = vmatprep.subr.bf16.mxu0 0
    %2455 = vmatpush2.bf16.xpose.msra.mxu0 0
    %2456 = vmatprep.subr.bf16.mxu0 0
    %2457 = vmatpush2.bf16.xpose.msra.mxu0 0
    %2458 = vmatprep.subr.bf16.mxu0 0
    %2459 = vmatpush2.bf16.xpose.msra.mxu0 0
    %2460 = vmatprep.subr.bf16.mxu0 0
    %2461 = vmatpush2.bf16.xpose.msra.mxu0 0
    %2462 = vmatprep.subr.bf16.mxu0 0
    %2463 = vmatpush2.bf16.xpose.msra.mxu0 0
    %2464 = vmatprep.subr.bf16.mxu0 0
    %2465 = vmatpush2.bf16.xpose.msra.mxu0 0
    %2466 = vmatprep.subr.bf16.mxu0 0
    %2467 = vmatpush2.bf16.xpose.msra.mxu0 0
    %2468 = vmatprep.subr.bf16.mxu0 0
    %2469 = vmatpush2.bf16.xpose.msra.mxu0 0
    %2470 = vmatprep.mubr.bf16.mxu0 0
    %2471 = vmatmul.mubr.bf16.gmra.mxu0 %v2433
    %v2472 = vpop.f32.mrf.mxu0
    %v2473 = vadd.f32 0.0, %v2472
    %v2474 = vpop.f32.mrf.mxu0
    %v2475 = vpop.f32.mrf.mxu0
    %v2476 = vadd.f32 0.0, %v2475
    %v2477 = vpop.f32.mrf.mxu0
    %2478 = vdwg.mxu0
    %2480 = vset.pattern.permute.xlu0 0
    %2481 = vperm.xlu0 %2480, %v2473
    %v2482 = vpop.permute.xlu0 %2481
    %2485 = vset.pattern.permute.xlu0 0
    %2486 = vperm.xlu0 %2485, %v2476
    %v2487 = vpop.permute.xlu0 %2486
    %v2489 = vmul.f32 %v119, %v2482
    %v2490 = vmul.f32 %v120, %v2487
    %2492 = vrot.lane.b32.xlu0 %v2431, 64
    %v2493 = vpop.permute.xlu0 %2492
    %v2495 = vsel %vm175, %v2493, 0
    %2497 = vmatprep.subr.bf16.mxu0 0
    %2498 = vmatpush1.bf16.xpose.msra.mxu0 0
    %2499 = vmatprep.subr.bf16.mxu0 0
    %2500 = vmatpush1.bf16.xpose.msra.mxu0 0
    %2501 = vmatprep.subr.bf16.mxu0 0
    %2502 = vmatpush1.bf16.xpose.msra.mxu0 0
    %2503 = vmatprep.subr.bf16.mxu0 0
    %2504 = vmatpush1.bf16.xpose.msra.mxu0 0
    %2505 = vmatprep.subr.bf16.mxu0 0
    %2506 = vmatpush1.bf16.xpose.msra.mxu0 0
    %2507 = vmatprep.subr.bf16.mxu0 0
    %2508 = vmatpush1.bf16.xpose.msra.mxu0 0
    %2509 = vmatprep.subr.bf16.mxu0 0
    %2510 = vmatpush1.bf16.xpose.msra.mxu0 0
    %2511 = vmatprep.subr.bf16.mxu0 0
    %2512 = vmatpush1.bf16.xpose.msra.mxu0 %v2495
    %2513 = vmatprep.subr.bf16.mxu0 0
    %2514 = vmatpush2.bf16.xpose.msra.mxu0 0
    %2515 = vmatprep.subr.bf16.mxu0 0
    %2516 = vmatpush2.bf16.xpose.msra.mxu0 0
    %2517 = vmatprep.subr.bf16.mxu0 0
    %2518 = vmatpush2.bf16.xpose.msra.mxu0 0
    %2519 = vmatprep.subr.bf16.mxu0 0
    %2520 = vmatpush2.bf16.xpose.msra.mxu0 0
    %2521 = vmatprep.subr.bf16.mxu0 0
    %2522 = vmatpush2.bf16.xpose.msra.mxu0 0
    %2523 = vmatprep.subr.bf16.mxu0 0
    %2524 = vmatpush2.bf16.xpose.msra.mxu0 0
    %2525 = vmatprep.subr.bf16.mxu0 0
    %2526 = vmatpush2.bf16.xpose.msra.mxu0 0
    %2527 = vmatprep.subr.bf16.mxu0 0
    %2528 = vmatpush2.bf16.xpose.msra.mxu0 0
    %2529 = vmatprep.mubr.bf16.mxu0 0
    %2530 = vmatmul.mubr.bf16.gmra.mxu0 %v2433
    %v2531 = vpop.f32.mrf.mxu0
    %v2532 = vadd.f32 %v2489, %v2531
    %v2533 = vpop.f32.mrf.mxu0
    %v2534 = vpop.f32.mrf.mxu0
    %v2535 = vadd.f32 %v2490, %v2534
    %v2536 = vpop.f32.mrf.mxu0
    %2537 = vdwg.mxu0
    %2538 = vset.pattern.permute.xlu0 1
    %2539 = vperm.xlu0 %2538, %v2473
    %v2540 = vpop.permute.xlu0 %2539
    %2542 = vset.pattern.permute.xlu0 1
    %2543 = vperm.xlu0 %2542, %v2476
    %v2544 = vpop.permute.xlu0 %2543
    %v2546 = vmul.f32 %v122, %v2540
    %v2547 = vmul.f32 %v123, %v2544
    %v2548 = vadd.f32 %v2532, %v2546
    %v2549 = vadd.f32 %v2535, %v2547
    %2550 = vset.pattern.permute.xlu0 2
    %2551 = vperm.xlu0 %2550, %v2473
    %v2552 = vpop.permute.xlu0 %2551
    %2554 = vset.pattern.permute.xlu0 2
    %2555 = vperm.xlu0 %2554, %v2476
    %v2556 = vpop.permute.xlu0 %2555
    %v2558 = vmul.f32 %v125, %v2552
    %v2559 = vmul.f32 %v126, %v2556
    %v2560 = vadd.f32 %v2548, %v2558
    %v2561 = vadd.f32 %v2549, %v2559
    %2562 = vset.pattern.permute.xlu0 3
    %2563 = vperm.xlu0 %2562, %v2473
    %v2564 = vpop.permute.xlu0 %2563
    %2566 = vset.pattern.permute.xlu0 3
    %2567 = vperm.xlu0 %2566, %v2476
    %v2568 = vpop.permute.xlu0 %2567
    %v2570 = vmul.f32 %v128, %v2564
    %v2571 = vmul.f32 %v129, %v2568
    %v2572 = vadd.f32 %v2560, %v2570
    %v2573 = vadd.f32 %v2561, %v2571
    %2574 = vset.pattern.permute.xlu0 4
    %2575 = vperm.xlu0 %2574, %v2473
    %v2576 = vpop.permute.xlu0 %2575
    %2578 = vset.pattern.permute.xlu0 4
    %2579 = vperm.xlu0 %2578, %v2476
    %v2580 = vpop.permute.xlu0 %2579
    %v2582 = vmul.f32 %v131, %v2576
    %v2583 = vmul.f32 %v132, %v2580
    %v2584 = vadd.f32 %v2572, %v2582
    %v2585 = vadd.f32 %v2573, %v2583
    %2586 = vset.pattern.permute.xlu0 5
    %2587 = vperm.xlu0 %2586, %v2473
    %v2588 = vpop.permute.xlu0 %2587
    %2590 = vset.pattern.permute.xlu0 5
    %2591 = vperm.xlu0 %2590, %v2476
    %v2592 = vpop.permute.xlu0 %2591
    %v2594 = vmul.f32 %v134, %v2588
    %v2595 = vmul.f32 %v135, %v2592
    %v2596 = vadd.f32 %v2584, %v2594
    %v2597 = vadd.f32 %v2585, %v2595
    %v2598 = vadd.f32 %v2596, %v117
    %v2599 = vadd.f32 %v2597, %v118
    %v2600 = vsel %vm392, %v2598, -inf
    %2601 = vmax.xlane.f32.xlu0 %v2600
    %v2602 = vpop.xlane.xlu0 %2601
    %v2603 = vsel %vm392, %v2599, -inf
    %2604 = vmax.xlane.f32.xlu0 %v2603
    %v2605 = vpop.xlane.xlu0 %2604
    %v2606 = vsub.f32 %v2598, %v2602
    %v2607 = vsub.f32 %v2599, %v2605
    %v2608 = vmul.f32 %v2606, 1.442695
    %v2609 = vpow.pop %v2608
    %v2610 = vmul.f32 %v2607, 1.442695
    %v2611 = vpow.pop %v2610
    %v2612 = vmul.f32 %v2609, %v115
    %v2613 = vmul.f32 %v2611, %v116
    %v2614 = vsel %vm392, %v2612, 0.0
    %2615 = vadd.xlane.f32.xlu0 %v2614
    %v2616 = vpop.xlane.xlu0 %2615
    %v2617 = vsel %vm392, %v2613, 0.0
    %2618 = vadd.xlane.f32.xlu0 %v2617
    %v2619 = vpop.xlane.xlu0 %2618
    %vm2620 = vcmp.gt.f32.partialorder %v2616, 0.0
    %vm2621 = vcmp.gt.f32.partialorder %v2619, 0.0
    %v2622 = vsel %vm2620, %v2616, 1.0
    %v2623 = vsel %vm2621, %v2619, 1.0
    %v2624 = vrcp.pop %v2622
    %v2625 = vrcp.pop %v2623
    %v2626 = vmul.f32 %v2612, %v2624
    %v2627 = vmul.f32 %v2613, %v2625
    %v2628 = vpack.c.bf16 %v2627, %v2626
    %v2629 = vpack.c.bf16 %v2427, %v2423
    %v2630 = vmul.f32 %v2626, %v119
    %v2631 = vmul.f32 %v2627, %v120
    %v2632 = vsel %vm392, %v2630, 0.0
    %2633 = vadd.xlane.f32.xlu0 %v2632
    %v2634 = vpop.xlane.xlu0 %2633
    %v2635 = vsel %vm392, %v2631, 0.0
    %2636 = vadd.xlane.f32.xlu0 %v2635
    %v2637 = vpop.xlane.xlu0 %2636
    %v2638 = vmul.f32 %v2626, %v122
    %v2639 = vmul.f32 %v2627, %v123
    %v2640 = vsel %vm392, %v2638, 0.0
    %2641 = vadd.xlane.f32.xlu0 %v2640
    %v2642 = vpop.xlane.xlu0 %2641
    %v2643 = vsel %vm392, %v2639, 0.0
    %2644 = vadd.xlane.f32.xlu0 %v2643
    %v2645 = vpop.xlane.xlu0 %2644
    %v2646 = vmul.f32 %v2626, %v125
    %v2647 = vmul.f32 %v2627, %v126
    %v2648 = vsel %vm392, %v2646, 0.0
    %2649 = vadd.xlane.f32.xlu0 %v2648
    %v2650 = vpop.xlane.xlu0 %2649
    %v2651 = vsel %vm392, %v2647, 0.0
    %2652 = vadd.xlane.f32.xlu0 %v2651
    %v2653 = vpop.xlane.xlu0 %2652
    %v2654 = vmul.f32 %v2626, %v128
    %v2655 = vmul.f32 %v2627, %v129
    %v2656 = vsel %vm392, %v2654, 0.0
    %2657 = vadd.xlane.f32.xlu0 %v2656
    %v2658 = vpop.xlane.xlu0 %2657
    %v2659 = vsel %vm392, %v2655, 0.0
    %2660 = vadd.xlane.f32.xlu0 %v2659
    %v2661 = vpop.xlane.xlu0 %2660
    %v2662 = vmul.f32 %v2626, %v131
    %v2663 = vmul.f32 %v2627, %v132
    %v2664 = vsel %vm392, %v2662, 0.0
    %2665 = vadd.xlane.f32.xlu0 %v2664
    %v2666 = vpop.xlane.xlu0 %2665
    %v2667 = vsel %vm392, %v2663, 0.0
    %2668 = vadd.xlane.f32.xlu0 %v2667
    %v2669 = vpop.xlane.xlu0 %2668
    %v2670 = vmul.f32 %v2626, %v134
    %v2671 = vmul.f32 %v2627, %v135
    %v2672 = vsel %vm392, %v2670, 0.0
    %2673 = vadd.xlane.f32.xlu0 %v2672
    %v2674 = vpop.xlane.xlu0 %2673
    %v2675 = vsel %vm392, %v2671, 0.0
    %2676 = vadd.xlane.f32.xlu0 %v2675
    %v2677 = vpop.xlane.xlu0 %2676
    %v2678 = vsel %vm471, %v2634, %v2642
    %v2679 = vsel %vm471, %v2637, %v2645
    %v2680 = vsel %vm474, %v2678, %v2650
    %v2681 = vsel %vm474, %v2679, %v2653
    %v2682 = vsel %vm477, %v2680, %v2658
    %v2683 = vsel %vm477, %v2681, %v2661
    %v2684 = vsel %vm480, %v2682, %v2666
    %v2685 = vsel %vm480, %v2683, %v2669
    %v2686 = vsel %vm483, %v2684, %v2674
    %v2687 = vsel %vm483, %v2685, %v2677
    %v2688 = vpack.c.bf16 %v2687, %v2686
    %v2690 = vsel %vm487, %v2688, 0
    %v2692 = vsel %vm491, %v2430, 0
    %2694 = vmatprep.subr.bf16.mxu0 0
    %2695 = vmatpush1.bf16.msra.mxu0 0
    %2696 = vmatprep.subr.bf16.mxu0 0
    %2697 = vmatpush1.bf16.msra.mxu0 0
    %2698 = vmatprep.subr.bf16.mxu0 0
    %2699 = vmatpush1.bf16.msra.mxu0 0
    %2700 = vmatprep.subr.bf16.mxu0 0
    %2701 = vmatpush1.bf16.msra.mxu0 0
    %2702 = vmatprep.subr.bf16.mxu0 0
    %2703 = vmatpush1.bf16.msra.mxu0 0
    %2704 = vmatprep.subr.bf16.mxu0 0
    %2705 = vmatpush1.bf16.msra.mxu0 0
    %2706 = vmatprep.subr.bf16.mxu0 0
    %2707 = vmatpush1.bf16.msra.mxu0 0
    %2708 = vmatprep.subr.bf16.mxu0 0
    %2709 = vmatpush1.bf16.msra.mxu0 %v2692
    %2710 = vmatprep.subr.bf16.mxu0 0
    %2711 = vmatpush2.bf16.msra.mxu0 0
    %2712 = vmatprep.subr.bf16.mxu0 0
    %2713 = vmatpush2.bf16.msra.mxu0 0
    %2714 = vmatprep.subr.bf16.mxu0 0
    %2715 = vmatpush2.bf16.msra.mxu0 0
    %2716 = vmatprep.subr.bf16.mxu0 0
    %2717 = vmatpush2.bf16.msra.mxu0 0
    %2718 = vmatprep.subr.bf16.mxu0 0
    %2719 = vmatpush2.bf16.msra.mxu0 0
    %2720 = vmatprep.subr.bf16.mxu0 0
    %2721 = vmatpush2.bf16.msra.mxu0 0
    %2722 = vmatprep.subr.bf16.mxu0 0
    %2723 = vmatpush2.bf16.msra.mxu0 0
    %2724 = vmatprep.subr.bf16.mxu0 0
    %2725 = vmatpush2.bf16.msra.mxu0 0
    %2726 = vmatprep.mubr.bf16.mxu0 0
    %2727 = vmatmul.mubr.bf16.gmra.mxu0 %v2690
    %v2728 = vpop.f32.mrf.mxu0
    %v2729 = vadd.f32 0.0, %v2728
    %v2730 = vpop.f32.mrf.mxu0
    %v2731 = vpop.f32.mrf.mxu0
    %v2732 = vadd.f32 0.0, %v2731
    %v2733 = vpop.f32.mrf.mxu0
    %2734 = vdwg.mxu0
    %v2736 = vsel %vm392, %v2628, 0
    %2738 = vmatprep.subr.bf16.mxu0 0
    %2739 = vmatpush1.bf16.msra.mxu0 0
    %2740 = vmatprep.subr.bf16.mxu0 0
    %2741 = vmatpush1.bf16.msra.mxu0 0
    %2742 = vmatprep.subr.bf16.mxu0 0
    %2743 = vmatpush1.bf16.msra.mxu0 0
    %2744 = vmatprep.subr.bf16.mxu0 0
    %2745 = vmatpush1.bf16.msra.mxu0 0
    %2746 = vmatprep.subr.bf16.mxu0 0
    %2747 = vmatpush1.bf16.msra.mxu0 0
    %2748 = vmatprep.subr.bf16.mxu0 0
    %2749 = vmatpush1.bf16.msra.mxu0 0
    %2750 = vmatprep.subr.bf16.mxu0 0
    %2751 = vmatpush1.bf16.msra.mxu0 0
    %2752 = vmatprep.subr.bf16.mxu0 0
    %2753 = vmatpush1.bf16.msra.mxu0 %v2629
    %2754 = vmatprep.subr.bf16.mxu0 0
    %2755 = vmatpush2.bf16.msra.mxu0 0
    %2756 = vmatprep.subr.bf16.mxu0 0
    %2757 = vmatpush2.bf16.msra.mxu0 0
    %2758 = vmatprep.subr.bf16.mxu0 0
    %2759 = vmatpush2.bf16.msra.mxu0 0
    %2760 = vmatprep.subr.bf16.mxu0 0
    %2761 = vmatpush2.bf16.msra.mxu0 0
    %2762 = vmatprep.subr.bf16.mxu0 0
    %2763 = vmatpush2.bf16.msra.mxu0 0
    %2764 = vmatprep.subr.bf16.mxu0 0
    %2765 = vmatpush2.bf16.msra.mxu0 0
    %2766 = vmatprep.subr.bf16.mxu0 0
    %2767 = vmatpush2.bf16.msra.mxu0 0
    %2768 = vmatprep.subr.bf16.mxu0 0
    %2769 = vmatpush2.bf16.msra.mxu0 0
    %2770 = vmatprep.mubr.bf16.mxu0 0
    %2771 = vmatmul.mubr.bf16.gmra.mxu0 %v2736
    %v2772 = vpop.f32.mrf.mxu0
    %v2773 = vadd.f32 %v2729, %v2772
    %v2774 = vpop.f32.mrf.mxu0
    %v2775 = vpop.f32.mrf.mxu0
    %v2776 = vadd.f32 %v2732, %v2775
    %v2777 = vpop.f32.mrf.mxu0
    %2778 = vdwg.mxu0
    %s2779 = scalar_lea.vmem %s8, 4
    %v2780 = vld [vmem:[%s2779] sm:$0x1]
    %v2782 = vlaneseq
    %v2783 = vshrl.u32 %v2782, 7
    %v2784 = vsub.s32 0, %v2783
    %v2785 = vrot.slane %v2780, %v2784
    %v2787 = vmul.f32 %v2773, %v2785
    %v2788 = vmul.f32 %v2776, %v2785
    %v2789 = vsel %vm175, %v2787, 0.0
    %2790 = vadd.xlane.f32.xlu0 %v2789
    %v2791 = vpop.xlane.xlu0 %2790
    %v2792 = vsel %vm175, %v2788, 0.0
    %2793 = vadd.xlane.f32.xlu0 %v2792
    %v2794 = vpop.xlane.xlu0 %2793
    %v2795 = vadd.f32 %v2791, 0.0
    %v2796 = vadd.f32 %v2794, 0.0
    %s2797 = scalar_lea.vmem %s9, 4
    %v2798 = vld [vmem:[%s2797] sm:$0x1]
    %v2800 = vlaneseq
    %v2801 = vshrl.u32 %v2800, 7
    %v2802 = vsub.s32 0, %v2801
    %v2803 = vrot.slane %v2798, %v2802
    %2804 = vrot.lane.b32.xlu0 %v2803, 64
    %v2805 = vpop.permute.xlu0 %2804
    %v2807 = vmul.f32 %v2423, %v2805
    %v2808 = vmul.f32 %v2427, %v2805
    %2811 = vrot.lane.b32.xlu0 %v2807, 64
    %v2812 = vpop.permute.xlu0 %2811
    %2813 = vrot.lane.b32.xlu0 %v2808, 64
    %v2814 = vpop.permute.xlu0 %2813
    %v2817 = vsel %vm175, %v2812, 0.0
    %2818 = vadd.xlane.f32.xlu0 %v2817
    %v2819 = vpop.xlane.xlu0 %2818
    %v2820 = vsel %vm175, %v2814, 0.0
    %2821 = vadd.xlane.f32.xlu0 %v2820
    %v2822 = vpop.xlane.xlu0 %2821
    %v2823 = vadd.f32 %v2795, %v2819
    %v2824 = vadd.f32 %v2796, %v2822
    %s2825 = scalar_lea.vmem %s7, 20
    %v2826 = vld [vmem:[%s2825] sm:$0x7]
    %2827 = vrot.lane.b32.xlu0 %v2431, 96
    %v2828 = vpop.permute.xlu0 %2827
    %v2830 = vsel %vm175, %v2828, 0
    %v2833 = vsel %vm175, %v2826, 0
    %2835 = vmatprep.subr.bf16.mxu0 0
    %2836 = vmatpush1.bf16.xpose.msra.mxu0 0
    %2837 = vmatprep.subr.bf16.mxu0 0
    %2838 = vmatpush1.bf16.xpose.msra.mxu0 0
    %2839 = vmatprep.subr.bf16.mxu0 0
    %2840 = vmatpush1.bf16.xpose.msra.mxu0 0
    %2841 = vmatprep.subr.bf16.mxu0 0
    %2842 = vmatpush1.bf16.xpose.msra.mxu0 0
    %2843 = vmatprep.subr.bf16.mxu0 0
    %2844 = vmatpush1.bf16.xpose.msra.mxu0 0
    %2845 = vmatprep.subr.bf16.mxu0 0
    %2846 = vmatpush1.bf16.xpose.msra.mxu0 0
    %2847 = vmatprep.subr.bf16.mxu0 0
    %2848 = vmatpush1.bf16.xpose.msra.mxu0 0
    %2849 = vmatprep.subr.bf16.mxu0 0
    %2850 = vmatpush1.bf16.xpose.msra.mxu0 %v2833
    %2851 = vmatprep.subr.bf16.mxu0 0
    %2852 = vmatpush2.bf16.xpose.msra.mxu0 0
    %2853 = vmatprep.subr.bf16.mxu0 0
    %2854 = vmatpush2.bf16.xpose.msra.mxu0 0
    %2855 = vmatprep.subr.bf16.mxu0 0
    %2856 = vmatpush2.bf16.xpose.msra.mxu0 0
    %2857 = vmatprep.subr.bf16.mxu0 0
    %2858 = vmatpush2.bf16.xpose.msra.mxu0 0
    %2859 = vmatprep.subr.bf16.mxu0 0
    %2860 = vmatpush2.bf16.xpose.msra.mxu0 0
    %2861 = vmatprep.subr.bf16.mxu0 0
    %2862 = vmatpush2.bf16.xpose.msra.mxu0 0
    %2863 = vmatprep.subr.bf16.mxu0 0
    %2864 = vmatpush2.bf16.xpose.msra.mxu0 0
    %2865 = vmatprep.subr.bf16.mxu0 0
    %2866 = vmatpush2.bf16.xpose.msra.mxu0 0
    %2867 = vmatprep.mubr.bf16.mxu0 0
    %2868 = vmatmul.mubr.bf16.gmra.mxu0 %v2830
    %v2869 = vpop.f32.mrf.mxu0
    %v2870 = vadd.f32 0.0, %v2869
    %v2871 = vpop.f32.mrf.mxu0
    %v2872 = vpop.f32.mrf.mxu0
    %v2873 = vadd.f32 0.0, %v2872
    %v2874 = vpop.f32.mrf.mxu0
    %2875 = vdwg.mxu0
    %2877 = vset.pattern.permute.xlu0 0
    %2878 = vperm.xlu0 %2877, %v2870
    %v2879 = vpop.permute.xlu0 %2878
    %2882 = vset.pattern.permute.xlu0 0
    %2883 = vperm.xlu0 %2882, %v2873
    %v2884 = vpop.permute.xlu0 %2883
    %v2886 = vmul.f32 %v119, %v2879
    %v2887 = vmul.f32 %v120, %v2884
    %2888 = vrot.lane.b32.xlu0 %v2431, 32
    %v2889 = vpop.permute.xlu0 %2888
    %v2891 = vsel %vm175, %v2889, 0
    %2893 = vmatprep.subr.bf16.mxu0 0
    %2894 = vmatpush1.bf16.xpose.msra.mxu0 0
    %2895 = vmatprep.subr.bf16.mxu0 0
    %2896 = vmatpush1.bf16.xpose.msra.mxu0 0
    %2897 = vmatprep.subr.bf16.mxu0 0
    %2898 = vmatpush1.bf16.xpose.msra.mxu0 0
    %2899 = vmatprep.subr.bf16.mxu0 0
    %2900 = vmatpush1.bf16.xpose.msra.mxu0 0
    %2901 = vmatprep.subr.bf16.mxu0 0
    %2902 = vmatpush1.bf16.xpose.msra.mxu0 0
    %2903 = vmatprep.subr.bf16.mxu0 0
    %2904 = vmatpush1.bf16.xpose.msra.mxu0 0
    %2905 = vmatprep.subr.bf16.mxu0 0
    %2906 = vmatpush1.bf16.xpose.msra.mxu0 0
    %2907 = vmatprep.subr.bf16.mxu0 0
    %2908 = vmatpush1.bf16.xpose.msra.mxu0 %v2891
    %2909 = vmatprep.subr.bf16.mxu0 0
    %2910 = vmatpush2.bf16.xpose.msra.mxu0 0
    %2911 = vmatprep.subr.bf16.mxu0 0
    %2912 = vmatpush2.bf16.xpose.msra.mxu0 0
    %2913 = vmatprep.subr.bf16.mxu0 0
    %2914 = vmatpush2.bf16.xpose.msra.mxu0 0
    %2915 = vmatprep.subr.bf16.mxu0 0
    %2916 = vmatpush2.bf16.xpose.msra.mxu0 0
    %2917 = vmatprep.subr.bf16.mxu0 0
    %2918 = vmatpush2.bf16.xpose.msra.mxu0 0
    %2919 = vmatprep.subr.bf16.mxu0 0
    %2920 = vmatpush2.bf16.xpose.msra.mxu0 0
    %2921 = vmatprep.subr.bf16.mxu0 0
    %2922 = vmatpush2.bf16.xpose.msra.mxu0 0
    %2923 = vmatprep.subr.bf16.mxu0 0
    %2924 = vmatpush2.bf16.xpose.msra.mxu0 0
    %2925 = vmatprep.mubr.bf16.mxu0 0
    %2926 = vmatmul.mubr.bf16.gmra.mxu0 %v2830
    %v2927 = vpop.f32.mrf.mxu0
    %v2928 = vadd.f32 %v2886, %v2927
    %v2929 = vpop.f32.mrf.mxu0
    %v2930 = vpop.f32.mrf.mxu0
    %v2931 = vadd.f32 %v2887, %v2930
    %v2932 = vpop.f32.mrf.mxu0
    %2933 = vdwg.mxu0
    %2934 = vset.pattern.permute.xlu0 1
    %2935 = vperm.xlu0 %2934, %v2870
    %v2936 = vpop.permute.xlu0 %2935
    %2938 = vset.pattern.permute.xlu0 1
    %2939 = vperm.xlu0 %2938, %v2873
    %v2940 = vpop.permute.xlu0 %2939
    %v2942 = vmul.f32 %v122, %v2936
    %v2943 = vmul.f32 %v123, %v2940
    %v2944 = vadd.f32 %v2928, %v2942
    %v2945 = vadd.f32 %v2931, %v2943
    %2946 = vset.pattern.permute.xlu0 2
    %2947 = vperm.xlu0 %2946, %v2870
    %v2948 = vpop.permute.xlu0 %2947
    %2950 = vset.pattern.permute.xlu0 2
    %2951 = vperm.xlu0 %2950, %v2873
    %v2952 = vpop.permute.xlu0 %2951
    %v2954 = vmul.f32 %v125, %v2948
    %v2955 = vmul.f32 %v126, %v2952
    %v2956 = vadd.f32 %v2944, %v2954
    %v2957 = vadd.f32 %v2945, %v2955
    %2958 = vset.pattern.permute.xlu0 3
    %2959 = vperm.xlu0 %2958, %v2870
    %v2960 = vpop.permute.xlu0 %2959
    %2962 = vset.pattern.permute.xlu0 3
    %2963 = vperm.xlu0 %2962, %v2873
    %v2964 = vpop.permute.xlu0 %2963
    %v2966 = vmul.f32 %v128, %v2960
    %v2967 = vmul.f32 %v129, %v2964
    %v2968 = vadd.f32 %v2956, %v2966
    %v2969 = vadd.f32 %v2957, %v2967
    %2970 = vset.pattern.permute.xlu0 4
    %2971 = vperm.xlu0 %2970, %v2870
    %v2972 = vpop.permute.xlu0 %2971
    %2974 = vset.pattern.permute.xlu0 4
    %2975 = vperm.xlu0 %2974, %v2873
    %v2976 = vpop.permute.xlu0 %2975
    %v2978 = vmul.f32 %v131, %v2972
    %v2979 = vmul.f32 %v132, %v2976
    %v2980 = vadd.f32 %v2968, %v2978
    %v2981 = vadd.f32 %v2969, %v2979
    %2982 = vset.pattern.permute.xlu0 5
    %2983 = vperm.xlu0 %2982, %v2870
    %v2984 = vpop.permute.xlu0 %2983
    %2986 = vset.pattern.permute.xlu0 5
    %2987 = vperm.xlu0 %2986, %v2873
    %v2988 = vpop.permute.xlu0 %2987
    %v2990 = vmul.f32 %v134, %v2984
    %v2991 = vmul.f32 %v135, %v2988
    %v2992 = vadd.f32 %v2980, %v2990
    %v2993 = vadd.f32 %v2981, %v2991
    %v2994 = vadd.f32 %v2992, %v117
    %v2995 = vadd.f32 %v2993, %v118
    %v2996 = vsel %vm392, %v2994, -inf
    %2997 = vmax.xlane.f32.xlu0 %v2996
    %v2998 = vpop.xlane.xlu0 %2997
    %v2999 = vsel %vm392, %v2995, -inf
    %3000 = vmax.xlane.f32.xlu0 %v2999
    %v3001 = vpop.xlane.xlu0 %3000
    %v3002 = vsub.f32 %v2994, %v2998
    %v3003 = vsub.f32 %v2995, %v3001
    %v3004 = vmul.f32 %v3002, 1.442695
    %v3005 = vpow.pop %v3004
    %v3006 = vmul.f32 %v3003, 1.442695
    %v3007 = vpow.pop %v3006
    %v3008 = vmul.f32 %v3005, %v115
    %v3009 = vmul.f32 %v3007, %v116
    %v3010 = vsel %vm392, %v3008, 0.0
    %3011 = vadd.xlane.f32.xlu0 %v3010
    %v3012 = vpop.xlane.xlu0 %3011
    %v3013 = vsel %vm392, %v3009, 0.0
    %3014 = vadd.xlane.f32.xlu0 %v3013
    %v3015 = vpop.xlane.xlu0 %3014
    %vm3016 = vcmp.gt.f32.partialorder %v3012, 0.0
    %vm3017 = vcmp.gt.f32.partialorder %v3015, 0.0
    %v3018 = vsel %vm3016, %v3012, 1.0
    %v3019 = vsel %vm3017, %v3015, 1.0
    %v3020 = vrcp.pop %v3018
    %v3021 = vrcp.pop %v3019
    %v3022 = vmul.f32 %v3008, %v3020
    %v3023 = vmul.f32 %v3009, %v3021
    %v3024 = vpack.c.bf16 %v3023, %v3022
    %v3025 = vmul.f32 %v3022, %v119
    %v3026 = vmul.f32 %v3023, %v120
    %v3027 = vsel %vm392, %v3025, 0.0
    %3028 = vadd.xlane.f32.xlu0 %v3027
    %v3029 = vpop.xlane.xlu0 %3028
    %v3030 = vsel %vm392, %v3026, 0.0
    %3031 = vadd.xlane.f32.xlu0 %v3030
    %v3032 = vpop.xlane.xlu0 %3031
    %v3033 = vmul.f32 %v3022, %v122
    %v3034 = vmul.f32 %v3023, %v123
    %v3035 = vsel %vm392, %v3033, 0.0
    %3036 = vadd.xlane.f32.xlu0 %v3035
    %v3037 = vpop.xlane.xlu0 %3036
    %v3038 = vsel %vm392, %v3034, 0.0
    %3039 = vadd.xlane.f32.xlu0 %v3038
    %v3040 = vpop.xlane.xlu0 %3039
    %v3041 = vmul.f32 %v3022, %v125
    %v3042 = vmul.f32 %v3023, %v126
    %v3043 = vsel %vm392, %v3041, 0.0
    %3044 = vadd.xlane.f32.xlu0 %v3043
    %v3045 = vpop.xlane.xlu0 %3044
    %v3046 = vsel %vm392, %v3042, 0.0
    %3047 = vadd.xlane.f32.xlu0 %v3046
    %v3048 = vpop.xlane.xlu0 %3047
    %v3049 = vmul.f32 %v3022, %v128
    %v3050 = vmul.f32 %v3023, %v129
    %v3051 = vsel %vm392, %v3049, 0.0
    %3052 = vadd.xlane.f32.xlu0 %v3051
    %v3053 = vpop.xlane.xlu0 %3052
    %v3054 = vsel %vm392, %v3050, 0.0
    %3055 = vadd.xlane.f32.xlu0 %v3054
    %v3056 = vpop.xlane.xlu0 %3055
    %v3057 = vmul.f32 %v3022, %v131
    %v3058 = vmul.f32 %v3023, %v132
    %v3059 = vsel %vm392, %v3057, 0.0
    %3060 = vadd.xlane.f32.xlu0 %v3059
    %v3061 = vpop.xlane.xlu0 %3060
    %v3062 = vsel %vm392, %v3058, 0.0
    %3063 = vadd.xlane.f32.xlu0 %v3062
    %v3064 = vpop.xlane.xlu0 %3063
    %v3065 = vmul.f32 %v3022, %v134
    %v3066 = vmul.f32 %v3023, %v135
    %v3067 = vsel %vm392, %v3065, 0.0
    %3068 = vadd.xlane.f32.xlu0 %v3067
    %v3069 = vpop.xlane.xlu0 %3068
    %v3070 = vsel %vm392, %v3066, 0.0
    %3071 = vadd.xlane.f32.xlu0 %v3070
    %v3072 = vpop.xlane.xlu0 %3071
    %v3073 = vsel %vm471, %v3029, %v3037
    %v3074 = vsel %vm471, %v3032, %v3040
    %v3075 = vsel %vm474, %v3073, %v3045
    %v3076 = vsel %vm474, %v3074, %v3048
    %v3077 = vsel %vm477, %v3075, %v3053
    %v3078 = vsel %vm477, %v3076, %v3056
    %v3079 = vsel %vm480, %v3077, %v3061
    %v3080 = vsel %vm480, %v3078, %v3064
    %v3081 = vsel %vm483, %v3079, %v3069
    %v3082 = vsel %vm483, %v3080, %v3072
    %v3083 = vpack.c.bf16 %v3082, %v3081
    %v3085 = vsel %vm487, %v3083, 0
    %v3087 = vsel %vm491, %v2826, 0
    %3089 = vmatprep.subr.bf16.mxu0 0
    %3090 = vmatpush1.bf16.msra.mxu0 0
    %3091 = vmatprep.subr.bf16.mxu0 0
    %3092 = vmatpush1.bf16.msra.mxu0 0
    %3093 = vmatprep.subr.bf16.mxu0 0
    %3094 = vmatpush1.bf16.msra.mxu0 0
    %3095 = vmatprep.subr.bf16.mxu0 0
    %3096 = vmatpush1.bf16.msra.mxu0 0
    %3097 = vmatprep.subr.bf16.mxu0 0
    %3098 = vmatpush1.bf16.msra.mxu0 0
    %3099 = vmatprep.subr.bf16.mxu0 0
    %3100 = vmatpush1.bf16.msra.mxu0 0
    %3101 = vmatprep.subr.bf16.mxu0 0
    %3102 = vmatpush1.bf16.msra.mxu0 0
    %3103 = vmatprep.subr.bf16.mxu0 0
    %3104 = vmatpush1.bf16.msra.mxu0 %v3087
    %3105 = vmatprep.subr.bf16.mxu0 0
    %3106 = vmatpush2.bf16.msra.mxu0 0
    %3107 = vmatprep.subr.bf16.mxu0 0
    %3108 = vmatpush2.bf16.msra.mxu0 0
    %3109 = vmatprep.subr.bf16.mxu0 0
    %3110 = vmatpush2.bf16.msra.mxu0 0
    %3111 = vmatprep.subr.bf16.mxu0 0
    %3112 = vmatpush2.bf16.msra.mxu0 0
    %3113 = vmatprep.subr.bf16.mxu0 0
    %3114 = vmatpush2.bf16.msra.mxu0 0
    %3115 = vmatprep.subr.bf16.mxu0 0
    %3116 = vmatpush2.bf16.msra.mxu0 0
    %3117 = vmatprep.subr.bf16.mxu0 0
    %3118 = vmatpush2.bf16.msra.mxu0 0
    %3119 = vmatprep.subr.bf16.mxu0 0
    %3120 = vmatpush2.bf16.msra.mxu0 0
    %3121 = vmatprep.mubr.bf16.mxu0 0
    %3122 = vmatmul.mubr.bf16.gmra.mxu0 %v3085
    %v3123 = vpop.f32.mrf.mxu0
    %v3124 = vadd.f32 0.0, %v3123
    %v3125 = vpop.f32.mrf.mxu0
    %v3126 = vpop.f32.mrf.mxu0
    %v3127 = vadd.f32 0.0, %v3126
    %v3128 = vpop.f32.mrf.mxu0
    %3129 = vdwg.mxu0
    %3131 = vrot.lane.b32.xlu0 %v2629, 96
    %v3132 = vpop.permute.xlu0 %3131
    %v3135 = vsel %vm392, %v3024, 0
    %3137 = vmatprep.subr.bf16.mxu0 0
    %3138 = vmatpush1.bf16.msra.mxu0 0
    %3139 = vmatprep.subr.bf16.mxu0 0
    %3140 = vmatpush1.bf16.msra.mxu0 0
    %3141 = vmatprep.subr.bf16.mxu0 0
    %3142 = vmatpush1.bf16.msra.mxu0 0
    %3143 = vmatprep.subr.bf16.mxu0 0
    %3144 = vmatpush1.bf16.msra.mxu0 0
    %3145 = vmatprep.subr.bf16.mxu0 0
    %3146 = vmatpush1.bf16.msra.mxu0 0
    %3147 = vmatprep.subr.bf16.mxu0 0
    %3148 = vmatpush1.bf16.msra.mxu0 0
    %3149 = vmatprep.subr.bf16.mxu0 0
    %3150 = vmatpush1.bf16.msra.mxu0 0
    %3151 = vmatprep.subr.bf16.mxu0 0
    %3152 = vmatpush1.bf16.msra.mxu0 %v3132
    %3153 = vmatprep.subr.bf16.mxu0 0
    %3154 = vmatpush2.bf16.msra.mxu0 0
    %3155 = vmatprep.subr.bf16.mxu0 0
    %3156 = vmatpush2.bf16.msra.mxu0 0
    %3157 = vmatprep.subr.bf16.mxu0 0
    %3158 = vmatpush2.bf16.msra.mxu0 0
    %3159 = vmatprep.subr.bf16.mxu0 0
    %3160 = vmatpush2.bf16.msra.mxu0 0
    %3161 = vmatprep.subr.bf16.mxu0 0
    %3162 = vmatpush2.bf16.msra.mxu0 0
    %3163 = vmatprep.subr.bf16.mxu0 0
    %3164 = vmatpush2.bf16.msra.mxu0 0
    %3165 = vmatprep.subr.bf16.mxu0 0
    %3166 = vmatpush2.bf16.msra.mxu0 0
    %3167 = vmatprep.subr.bf16.mxu0 0
    %3168 = vmatpush2.bf16.msra.mxu0 0
    %3169 = vmatprep.mubr.bf16.mxu0 0
    %3170 = vmatmul.mubr.bf16.gmra.mxu0 %v3135
    %v3171 = vpop.f32.mrf.mxu0
    %v3172 = vadd.f32 %v3124, %v3171
    %v3173 = vpop.f32.mrf.mxu0
    %v3174 = vpop.f32.mrf.mxu0
    %v3175 = vadd.f32 %v3127, %v3174
    %v3176 = vpop.f32.mrf.mxu0
    %3177 = vdwg.mxu0
    %s3178 = scalar_lea.vmem %s8, 5
    %v3179 = vld [vmem:[%s3178] sm:$0x1]
    %v3181 = vlaneseq
    %v3182 = vshrl.u32 %v3181, 7
    %v3183 = vsub.s32 0, %v3182
    %v3184 = vrot.slane %v3179, %v3183
    %v3186 = vmul.f32 %v3172, %v3184
    %v3187 = vmul.f32 %v3175, %v3184
    %v3188 = vsel %vm175, %v3186, 0.0
    %3189 = vadd.xlane.f32.xlu0 %v3188
    %v3190 = vpop.xlane.xlu0 %3189
    %v3191 = vsel %vm175, %v3187, 0.0
    %3192 = vadd.xlane.f32.xlu0 %v3191
    %v3193 = vpop.xlane.xlu0 %3192
    %v3194 = vadd.f32 %v2823, %v3190
    %v3195 = vadd.f32 %v2824, %v3193
    %s3196 = scalar_lea.vmem %s9, 5
    %v3197 = vld [vmem:[%s3196] sm:$0x1]
    %v3199 = vlaneseq
    %v3200 = vshrl.u32 %v3199, 7
    %v3201 = vsub.s32 0, %v3200
    %v3202 = vrot.slane %v3197, %v3201
    %3203 = vrot.lane.b32.xlu0 %v3202, 96
    %v3204 = vpop.permute.xlu0 %3203
    %v3206 = vmul.f32 %v2423, %v3204
    %v3207 = vmul.f32 %v2427, %v3204
    %3210 = vrot.lane.b32.xlu0 %v3206, 32
    %v3211 = vpop.permute.xlu0 %3210
    %3212 = vrot.lane.b32.xlu0 %v3207, 32
    %v3213 = vpop.permute.xlu0 %3212
    %v3216 = vsel %vm175, %v3211, 0.0
    %3217 = vadd.xlane.f32.xlu0 %v3216
    %v3218 = vpop.xlane.xlu0 %3217
    %v3219 = vsel %vm175, %v3213, 0.0
    %3220 = vadd.xlane.f32.xlu0 %v3219
    %v3221 = vpop.xlane.xlu0 %3220
    %v3222 = vadd.f32 %v3194, %v3218
    %v3223 = vadd.f32 %v3195, %v3221
    %v3224 = vxor.u32 %v3222, 2147483648
    %v3225 = vxor.u32 %v3223, 2147483648
    %v3226 = vmul.f32 %v3224, 1.442695
    %v3227 = vpow.pop %v3226
    %v3228 = vmul.f32 %v3225, 1.442695
    %v3229 = vpow.pop %v3228
    %v3230 = vadd.f32 %v3227, 1.0
    %v3231 = vadd.f32 %v3229, 1.0
    %v3232 = vrcp.pop %v3230
    %v3233 = vmul.f32 1.0, %v3232
    %v3234 = vrcp.pop %v3231
    %v3235 = vmul.f32 1.0, %v3234
    %s3236 = scalar_lea.vmem %s11, 2
    %v3237 = vld [vmem:[%s3236] sm:$0x1]
    %v3238 = vmul.f32 %v3233, %v2423
    %v3239 = vmul.f32 %v3235, %v2427
    %v3240 = vsub.f32 1.0, %v3233
    %v3241 = vsub.f32 1.0, %v3235
    %v3242 = vmul.f32 %v3240, %v2773
    %v3243 = vmul.f32 %v3241, %v2776
    %3246 = vrot.lane.b32.xlu0 %v3242, 64
    %v3247 = vpop.permute.xlu0 %3246
    %3248 = vrot.lane.b32.xlu0 %v3243, 64
    %v3249 = vpop.permute.xlu0 %3248
    %v3252 = vadd.f32 %v3238, %v3247
    %v3253 = vadd.f32 %v3239, %v3249
    %v3254 = vpack.c.bf16 %v3253, %v3252
    %s3255 = scalar_lea.vmem [#allocation10], 64
    %v3256 = vld [vmem:[%s3255] sm:$0xf]
    %v3257 = vld [vmem:[%s3255 + $0x4] sm:$0xf]
    %v3258 = vld [vmem:[%s3255 + $0x8] sm:$0xf]
    %v3259 = vld [vmem:[%s3255 + $0xc] sm:$0xf]
    %3261 = vrot.lane.b32.xlu0 %v3254, 64
    %v3262 = vpop.permute.xlu0 %3261
    %v3267 = vunpack.c.l.b16 %v3256
    %v3268 = vunpack.c.l.b16 %v3257
    %v3269 = vunpack.c.l.b16 %v3258
    %v3270 = vunpack.c.l.b16 %v3259
    %v3271 = vpack.c.b16 %v3268, %v3267
    %v3272 = vpack.c.b16 %v3270, %v3269
    %v3276 = vsel %vm175, %v3262, 0
    %3278 = vmatprep.subr.bf16.mxu0 0
    %3279 = vmatpush1.bf16.msra.mxu0 0
    %3280 = vmatprep.subr.bf16.mxu0 0
    %3281 = vmatpush1.bf16.msra.mxu0 0
    %3282 = vmatprep.subr.bf16.mxu0 0
    %3283 = vmatpush1.bf16.msra.mxu0 0
    %3284 = vmatprep.subr.bf16.mxu0 0
    %3285 = vmatpush1.bf16.msra.mxu0 0
    %3286 = vmatprep.subr.bf16.mxu0 0
    %3287 = vmatpush1.bf16.msra.mxu0 0
    %3288 = vmatprep.subr.bf16.mxu0 0
    %3289 = vmatpush1.bf16.msra.mxu0 0
    %3290 = vmatprep.subr.bf16.mxu0 0
    %3291 = vmatpush1.bf16.msra.mxu0 %v3272
    %3292 = vmatprep.subr.bf16.mxu0 0
    %3293 = vmatpush1.bf16.msra.mxu0 %v3271
    %3294 = vmatprep.subr.bf16.mxu0 0
    %3295 = vmatpush2.bf16.msra.mxu0 0
    %3296 = vmatprep.subr.bf16.mxu0 0
    %3297 = vmatpush2.bf16.msra.mxu0 0
    %3298 = vmatprep.subr.bf16.mxu0 0
    %3299 = vmatpush2.bf16.msra.mxu0 0
    %3300 = vmatprep.subr.bf16.mxu0 0
    %3301 = vmatpush2.bf16.msra.mxu0 0
    %3302 = vmatprep.subr.bf16.mxu0 0
    %3303 = vmatpush2.bf16.msra.mxu0 0
    %3304 = vmatprep.subr.bf16.mxu0 0
    %3305 = vmatpush2.bf16.msra.mxu0 0
    %3306 = vmatprep.subr.bf16.mxu0 0
    %3307 = vmatpush2.bf16.msra.mxu0 0
    %3308 = vmatprep.subr.bf16.mxu0 0
    %3309 = vmatpush2.bf16.msra.mxu0 0
    %3310 = vmatprep.mubr.bf16.mxu0 0
    %3311 = vmatmul.mubr.bf16.gmra.mxu0 %v3276
    %v3312 = vpop.f32.mrf.mxu0
    %v3313 = vadd.f32 0.0, %v3312
    %v3314 = vpop.f32.mrf.mxu0
    %v3315 = vpop.f32.mrf.mxu0
    %v3316 = vadd.f32 0.0, %v3315
    %v3317 = vpop.f32.mrf.mxu0
    %3318 = vdwg.mxu0
    %v3320 = vlaneseq
    %v3321 = vshrl.u32 %v3320, 7
    %v3322 = vsub.s32 0, %v3321
    %v3323 = vrot.slane %v3237, %v3322
    %v3325 = vadd.f32 %v3323, %v3313
    %v3326 = vadd.f32 %v3323, %v3316
    %v3327 = vmul.f32 %v3240, %v3172
    %v3328 = vmul.f32 %v3241, %v3175
    %3331 = vrot.lane.b32.xlu0 %v3327, 96
    %v3332 = vpop.permute.xlu0 %3331
    %3333 = vrot.lane.b32.xlu0 %v3328, 96
    %v3334 = vpop.permute.xlu0 %3333
    %v3337 = vadd.f32 %v3238, %v3332
    %v3338 = vadd.f32 %v3239, %v3334
    %v3339 = vpack.c.bf16 %v3338, %v3337
    %s3340 = scalar_lea.vmem [#allocation10], 80
    %v3341 = vld [vmem:[%s3340] sm:$0xf]
    %v3342 = vld [vmem:[%s3340 + $0x4] sm:$0xf]
    %v3343 = vld [vmem:[%s3340 + $0x8] sm:$0xf]
    %v3344 = vld [vmem:[%s3340 + $0xc] sm:$0xf]
    %3346 = vrot.lane.b32.xlu0 %v3339, 32
    %v3347 = vpop.permute.xlu0 %3346
    %v3352 = vunpack.c.l.b16 %v3341
    %v3353 = vunpack.c.l.b16 %v3342
    %v3354 = vunpack.c.l.b16 %v3343
    %v3355 = vunpack.c.l.b16 %v3344
    %v3356 = vpack.c.b16 %v3353, %v3352
    %v3357 = vpack.c.b16 %v3355, %v3354
    %v3361 = vsel %vm175, %v3347, 0
    %3363 = vmatprep.subr.bf16.mxu0 0
    %3364 = vmatpush1.bf16.msra.mxu0 0
    %3365 = vmatprep.subr.bf16.mxu0 0
    %3366 = vmatpush1.bf16.msra.mxu0 0
    %3367 = vmatprep.subr.bf16.mxu0 0
    %3368 = vmatpush1.bf16.msra.mxu0 0
    %3369 = vmatprep.subr.bf16.mxu0 0
    %3370 = vmatpush1.bf16.msra.mxu0 0
    %3371 = vmatprep.subr.bf16.mxu0 0
    %3372 = vmatpush1.bf16.msra.mxu0 0
    %3373 = vmatprep.subr.bf16.mxu0 0
    %3374 = vmatpush1.bf16.msra.mxu0 0
    %3375 = vmatprep.subr.bf16.mxu0 0
    %3376 = vmatpush1.bf16.msra.mxu0 %v3357
    %3377 = vmatprep.subr.bf16.mxu0 0
    %3378 = vmatpush1.bf16.msra.mxu0 %v3356
    %3379 = vmatprep.subr.bf16.mxu0 0
    %3380 = vmatpush2.bf16.msra.mxu0 0
    %3381 = vmatprep.subr.bf16.mxu0 0
    %3382 = vmatpush2.bf16.msra.mxu0 0
    %3383 = vmatprep.subr.bf16.mxu0 0
    %3384 = vmatpush2.bf16.msra.mxu0 0
    %3385 = vmatprep.subr.bf16.mxu0 0
    %3386 = vmatpush2.bf16.msra.mxu0 0
    %3387 = vmatprep.subr.bf16.mxu0 0
    %3388 = vmatpush2.bf16.msra.mxu0 0
    %3389 = vmatprep.subr.bf16.mxu0 0
    %3390 = vmatpush2.bf16.msra.mxu0 0
    %3391 = vmatprep.subr.bf16.mxu0 0
    %3392 = vmatpush2.bf16.msra.mxu0 0
    %3393 = vmatprep.subr.bf16.mxu0 0
    %3394 = vmatpush2.bf16.msra.mxu0 0
    %3395 = vmatprep.mubr.bf16.mxu0 0
    %3396 = vmatmul.mubr.bf16.gmra.mxu0 %v3361
    %v3397 = vpop.f32.mrf.mxu0
    %v3398 = vadd.f32 0.0, %v3397
    %v3399 = vpop.f32.mrf.mxu0
    %v3400 = vpop.f32.mrf.mxu0
    %v3401 = vadd.f32 0.0, %v3400
    %v3402 = vpop.f32.mrf.mxu0
    %3403 = vdwg.mxu0
    %v3404 = vadd.f32 %v3325, %v3398
    %v3405 = vadd.f32 %v3326, %v3401
    %v3406 = vmul.f32 %v3404, 0.01
    %v3407 = vmul.f32 %v3405, 0.01
    %v3408 = vmax.f32 %v3404, %v3406
    %v3409 = vmax.f32 %v3405, %v3407
    %s3410 = scalar_lea.vmem %s12, 2
    %v3411 = vld [vmem:[%s3410] sm:$0x1]
    %v3413 = vlaneseq
    %v3414 = vshrl.u32 %v3413, 7
    %v3415 = vsub.s32 0, %v3414
    %v3416 = vrot.slane %v3411, %v3415
    %v3418 = vmul.f32 %v3408, %v3416
    %v3419 = vmul.f32 %v3409, %v3416
    %s3420 = scalar_lea.vmem %s13, 2
    %v3421 = vld [vmem:[%s3420] sm:$0x1]
    %v3423 = vlaneseq
    %v3424 = vshrl.u32 %v3423, 7
    %v3425 = vsub.s32 0, %v3424
    %v3426 = vrot.slane %v3421, %v3425
    %v3428 = vadd.f32 %v3418, %v3426
    %v3429 = vadd.f32 %v3419, %v3426
    %v3430 = vsel %vm175, %v3428, -inf
    %v3431 = vrot.slane %v3430, 4
    %v3432 = vmax.f32 %v3430, %v3431
    %v3433 = vrot.slane %v3432, 2
    %v3434 = vmax.f32 %v3432, %v3433
    %v3435 = vrot.slane %v3434, 1
    %v3436 = vmax.f32 %v3434, %v3435
    %v3437 = vsel %vm175, %v3429, -inf
    %v3438 = vrot.slane %v3437, 4
    %v3439 = vmax.f32 %v3437, %v3438
    %v3440 = vrot.slane %v3439, 2
    %v3441 = vmax.f32 %v3439, %v3440
    %v3442 = vrot.slane %v3441, 1
    %v3443 = vmax.f32 %v3441, %v3442
    %v3444 = vsel %vm175, %v3428, 0.0
    %v3445 = vrot.slane %v3444, 4
    %v3446 = vadd.f32 %v3444, %v3445
    %v3447 = vrot.slane %v3446, 2
    %v3448 = vadd.f32 %v3446, %v3447
    %v3449 = vrot.slane %v3448, 1
    %v3450 = vadd.f32 %v3448, %v3449
    %v3451 = vsel %vm175, %v3429, 0.0
    %v3452 = vrot.slane %v3451, 4
    %v3453 = vadd.f32 %v3451, %v3452
    %v3454 = vrot.slane %v3453, 2
    %v3455 = vadd.f32 %v3453, %v3454
    %v3456 = vrot.slane %v3455, 1
    %v3457 = vadd.f32 %v3455, %v3456
    %v3458 = vmul.f32 %v3450, 0.125
    %v3459 = vmul.f32 %v3457, 0.125
    %v3460 = vadd.f32 %v2340, %v3436
    %v3461 = vadd.f32 %v2341, %v3443
    %v3462 = vadd.f32 %v2342, %v3458
    %v3463 = vadd.f32 %v2343, %v3459
    %vm3466 = vcmask 1041409
    %v3467 = vsel %vm3466, %v3461, %v3460
    %v3471 = vsel %vm3466, %v3463, %v3462
    %3472 = vrot.lane.b32.xlu0 %v3471, 32
    %v3473 = vpop.permute.xlu0 %3472
    %v3475 = vsel %vm175, %v3467, %v3473
    %vm3476 = vcmask 523264
    %v3477 = vsel %vm3476, %v3475, 0.0
    %vm3478 = vcmask 1041408
    %v3479 = vsel %vm3478, %v3477, 0.0
    %3480 = vst [vmem:[#allocation11] sm:$0xff] %v3479
    // Predicated region
    $region78: #{tpu_custom_call.1} parent=1 // pred_check
      _
    $region79: #{tpu_custom_call.1} parent=1 // pred_check_branch
      %3482 = sbr.rel (0) target = $region81
    $region80: #{tpu_custom_call.1} parent=1 // pred_region
      %s3484 = ssub.s32 128, 128
      %3485 = vsyncadd [#allocation4], %s3484
      %s3487 = sshll.u32 [#allocation11], 4
      %s3488 = int_to_ptr.vmem [resolvable:$true] %s3487
      %3490 = dma.vmem_to_hbm [thread:$0]  %s3488, 128, %s14, [#allocation4]
    $region81: #{tpu_custom_call.1} parent=1 // pred_fallthru
      _
    // Predicated region
    $region82: #{tpu_custom_call.1} parent=1 // pred_check
      _
    $region83: #{tpu_custom_call.1} parent=1 // pred_check_branch
      %3492 = sbr.rel (0) target = $region85
    $region84: #{tpu_custom_call.1} parent=1 // pred_region
      %3493 = dma.done [#allocation4], 128
    $region85: #{tpu_custom_call.1} parent=1 // pred_fallthru
      _
    %3494 = vsyncpa [#allocation3], 1
    %3495 = vsyncpa [#allocation6], 1
    %3496 = vsyncpa [#allocation9], 1
    %3497 = vsyncpa [#allocation4], 1

</llo_original>
